<compile_context>
chip_gen: v7x
topology: tpu7x:2x2x1
jax: 0.10.0
libtpu: 0.0.40
codegen_flags: <defaults>
</compile_context>

<pallas_src>
import math
from functools import partial

import jax
import jax.numpy as jnp
from jax.experimental import pallas as pl
from jax.experimental.pallas import tpu as pltpu  # noqa: F401  (TPU backend)

# ----- tiny synthetic "pretrained" BERT config -----
VOCAB = 64
HIDDEN = 32
LAYERS = 2
HEADS = 4
HEAD_DIM = HIDDEN // HEADS
FFN = 64
MAX_POS = 16
LN_EPS = 1e-12


def gelu(x):
    # BERT-style tanh approximation of GELU (tanh -> EUP slot, free vs. VALU)
    return 0.5 * x * (1.0 + jnp.tanh(0.7978845608028654 * (x + 0.044715 * x * x * x)))


# ----------------- fused encoder kernel -----------------

def _encoder_kernel(B, S,
                    x_ref, bias_ref, emb_g_ref, emb_b_ref,
                    wqkv_ref, bqkv_ref, wo_ref, bo_ref,
                    ln1g_ref, ln1b_ref, w1_ref, b1_ref, w2_ref, b2_ref,
                    ln2g_ref, ln2b_ref, pw_ref, pb_ref,
                    last_ref, pooled_ref):
    f32 = jnp.float32
    BS = B * S

    def ln(x, g, b):
        mu = jnp.mean(x, axis=-1, keepdims=True)
        var = jnp.mean(jnp.square(x - mu), axis=-1, keepdims=True)
        return (x - mu) * jax.lax.rsqrt(var + LN_EPS) * g + b

    # embedding LayerNorm (no zero residual)
    x = ln(x_ref[...], emb_g_ref[...], emb_b_ref[...])          # (B*S, H)
    bias = bias_ref[...]                                         # (B, 1, S) additive mask
    scale = 1.0 / math.sqrt(HEAD_DIM)

    for l in range(LAYERS):                                      # static unroll, LAYERS=2
        # ---- fused QKV projection: one (H, 3H) matmul ----
        qkv = jnp.dot(x, wqkv_ref[l], preferred_element_type=f32) + bqkv_ref[l]   # (B*S, 3H)
        q = qkv[:, 0 * HIDDEN:1 * HIDDEN].reshape(B, S, HIDDEN)
        k = qkv[:, 1 * HIDDEN:2 * HIDDEN].reshape(B, S, HIDDEN)
        v = qkv[:, 2 * HIDDEN:3 * HIDDEN].reshape(B, S, HIDDEN)

        # ---- attention: batched over B per head; accumulate through Wo per head ----
        wo_l = wo_ref[l]                                         # (H, H)
        attn_out = jnp.zeros((BS, HIDDEN), f32) + bo_ref[l]      # (B*S, H)
        for h in range(HEADS):                                   # static unroll, HEADS=4
            sl = slice(h * HEAD_DIM, (h + 1) * HEAD_DIM)
            qh, kh, vh = q[:, :, sl], k[:, :, sl], v[:, :, sl]   # (B, S, Dh)
            # q·kᵀ via last-axis contraction (no explicit transpose)
            s = jnp.einsum("bqd,bkd->bqk", qh, kh,
                           preferred_element_type=f32) * scale   # (B, S, S)
            s = s + bias
            m = jnp.max(s, axis=-1, keepdims=True)
            p = jnp.exp(s - m)
            p = p / jnp.sum(p, axis=-1, keepdims=True)
            ctx = jnp.einsum("bqk,bkd->bqd", p, vh,
                             preferred_element_type=f32)         # (B, S, Dh)
            attn_out = attn_out + jnp.dot(ctx.reshape(BS, HEAD_DIM), wo_l[sl, :],
                                          preferred_element_type=f32)

        x = ln(attn_out + x, ln1g_ref[l], ln1b_ref[l])

        # ---- FFN chain, intermediate never leaves VMEM ----
        hmid = gelu(jnp.dot(x, w1_ref[l], preferred_element_type=f32) + b1_ref[l])
        ffn = jnp.dot(hmid, w2_ref[l], preferred_element_type=f32) + b2_ref[l]
        x = ln(ffn + x, ln2g_ref[l], ln2b_ref[l])

    # only HBM writes of the whole forward
    last_ref[...] = x.astype(last_ref.dtype)

    # pooler: tanh(W · CLS + b) on the VMEM-resident activation
    cls = x.reshape(B, S, HIDDEN)[:, 0, :]                        # (B, H)
    pooled = jnp.tanh(jnp.dot(cls, pw_ref[...], preferred_element_type=f32) + pb_ref[...])
    pooled_ref[...] = pooled.astype(pooled_ref.dtype)


def encoder_pallas(x_emb, bias, packed):
    """x_emb: (B*S, H) summed embeddings; bias: (B, 1, S) additive attention mask."""
    BS, H = x_emb.shape
    B = bias.shape[0]
    S = BS // B
    return pl.pallas_call(
        partial(_encoder_kernel, B, S),
        out_shape=(jax.ShapeDtypeStruct((BS, H), jnp.float32),
                   jax.ShapeDtypeStruct((B, H), jnp.float32)),
    )(x_emb, bias,
      packed["emb_ln_g"], packed["emb_ln_b"],
      packed["wqkv"], packed["bqkv"], packed["wo"], packed["bo"],
      packed["ln1_g"], packed["ln1_b"], packed["w1"], packed["b1"],
      packed["w2"], packed["b2"], packed["ln2_g"], packed["ln2_b"],
      packed["pool_w"], packed["pool_b"])


# ----------------- parameters -----------------

def init_params(key):
    keys = iter(jax.random.split(key, 64))

    def norm(shape):
        return 0.02 * jax.random.normal(next(keys), shape, jnp.float32)

    params = {
        "word_emb": norm((VOCAB, HIDDEN)),
        "pos_emb": norm((MAX_POS, HIDDEN)),
        "type_emb": norm((2, HIDDEN)),
        "emb_ln_g": jnp.ones((HIDDEN,), jnp.float32),
        "emb_ln_b": jnp.zeros((HIDDEN,), jnp.float32),
        "pool_w": norm((HIDDEN, HIDDEN)),
        "pool_b": jnp.zeros((HIDDEN,), jnp.float32),
        "layers": [],
    }
    for _ in range(LAYERS):
        params["layers"].append({
            "wq": norm((HIDDEN, HIDDEN)), "bq": jnp.zeros((HIDDEN,), jnp.float32),
            "wk": norm((HIDDEN, HIDDEN)), "bk": jnp.zeros((HIDDEN,), jnp.float32),
            "wv": norm((HIDDEN, HIDDEN)), "bv": jnp.zeros((HIDDEN,), jnp.float32),
            "wo": norm((HIDDEN, HIDDEN)), "bo": jnp.zeros((HIDDEN,), jnp.float32),
            "ln1_g": jnp.ones((HIDDEN,), jnp.float32), "ln1_b": jnp.zeros((HIDDEN,), jnp.float32),
            "w1": norm((HIDDEN, FFN)), "b1": jnp.zeros((FFN,), jnp.float32),
            "w2": norm((FFN, HIDDEN)), "b2": jnp.zeros((HIDDEN,), jnp.float32),
            "ln2_g": jnp.ones((HIDDEN,), jnp.float32), "ln2_b": jnp.zeros((HIDDEN,), jnp.float32),
        })
    return params


def pack_params(params):
    """Stack per-layer weights and pre-concatenate Wq/Wk/Wv for the fused kernel."""
    L = params["layers"]

    def stack(fn):
        return jnp.stack([fn(lp) for lp in L], axis=0)

    return {
        "word_emb": params["word_emb"],
        "pos_emb": params["pos_emb"],
        "type_emb": params["type_emb"],
        "emb_ln_g": params["emb_ln_g"].reshape(1, HIDDEN),
        "emb_ln_b": params["emb_ln_b"].reshape(1, HIDDEN),
        "wqkv": stack(lambda lp: jnp.concatenate([lp["wq"], lp["wk"], lp["wv"]], axis=1)),
        "bqkv": stack(lambda lp: jnp.concatenate([lp["bq"], lp["bk"], lp["bv"]]).reshape(1, 3 * HIDDEN)),
        "wo": stack(lambda lp: lp["wo"]),
        "bo": stack(lambda lp: lp["bo"].reshape(1, HIDDEN)),
        "ln1_g": stack(lambda lp: lp["ln1_g"].reshape(1, HIDDEN)),
        "ln1_b": stack(lambda lp: lp["ln1_b"].reshape(1, HIDDEN)),
        "w1": stack(lambda lp: lp["w1"]),
        "b1": stack(lambda lp: lp["b1"].reshape(1, FFN)),
        "w2": stack(lambda lp: lp["w2"]),
        "b2": stack(lambda lp: lp["b2"].reshape(1, HIDDEN)),
        "ln2_g": stack(lambda lp: lp["ln2_g"].reshape(1, HIDDEN)),
        "ln2_b": stack(lambda lp: lp["ln2_b"].reshape(1, HIDDEN)),
        "pool_w": params["pool_w"],
        "pool_b": params["pool_b"].reshape(1, HIDDEN),
    }


# ----------------- forward (matches PretrainedEncoder.forward) -----------------

def encoder_forward(packed, seq_inputs):
    B, S = seq_inputs.shape
    token_type_inputs = jnp.zeros_like(seq_inputs)            # torch.zeros_like(seq_inputs)
    mask = (seq_inputs != 0).astype(jnp.float32)              # (seq_inputs != 0).long()
    bias = ((1.0 - mask) * -10000.0)[:, None, :]              # extended attention mask (B,1,S)

    # embedding lookups are gather glue (plain JAX); everything else is one fused kernel
    x = (jnp.take(packed["word_emb"], seq_inputs, axis=0)
         + packed["pos_emb"][:S][None, :, :]
         + jnp.take(packed["type_emb"], token_type_inputs, axis=0))
    x = x.reshape(B * S, HIDDEN).astype(jnp.float32)

    last, pooled = encoder_pallas(x, bias, packed)
    last_hidden_state = last.reshape(B, S, HIDDEN)

    # output_size == 0 and dropout == 0.0 (module defaults) -> mlp, dropout are identity.
    return last_hidden_state, pooled


if __name__ == "__main__":
    key = jax.random.PRNGKey(0)
    pkey, dkey = jax.random.split(key)
    packed = pack_params(init_params(pkey))

    B, S = 2, 8
    seq_inputs = jax.random.randint(dkey, (B, S), 1, VOCAB, dtype=jnp.int32)
    seq_inputs = seq_inputs.at[:, -2:].set(0)   # padding tokens -> exercises the attention mask

    last_hidden, pooled = jax.jit(encoder_forward)(packed, seq_inputs)
    jax.block_until_ready((last_hidden, pooled))

    assert last_hidden.shape == (B, S, HIDDEN)
    assert pooled.shape == (B, HIDDEN)
    assert bool(jnp.all(jnp.isfinite(last_hidden))) and bool(jnp.all(jnp.isfinite(pooled)))
    print("KERNEL_OK")
</pallas_src>

<mosaic_0001>
module attributes {stable_mosaic.version = 11 : i64} {
  func.func @_encoder_kernel(%arg0: memref<16x32xf32, #tpu.memory_space<vmem>>, %arg1: memref<2x1x8xf32, #tpu.memory_space<vmem>>, %arg2: memref<1x32xf32, #tpu.memory_space<vmem>>, %arg3: memref<1x32xf32, #tpu.memory_space<vmem>>, %arg4: memref<2x32x96xf32, #tpu.memory_space<vmem>>, %arg5: memref<2x1x96xf32, #tpu.memory_space<vmem>>, %arg6: memref<2x32x32xf32, #tpu.memory_space<vmem>>, %arg7: memref<2x1x32xf32, #tpu.memory_space<vmem>>, %arg8: memref<2x1x32xf32, #tpu.memory_space<vmem>>, %arg9: memref<2x1x32xf32, #tpu.memory_space<vmem>>, %arg10: memref<2x32x64xf32, #tpu.memory_space<vmem>>, %arg11: memref<2x1x64xf32, #tpu.memory_space<vmem>>, %arg12: memref<2x64x32xf32, #tpu.memory_space<vmem>>, %arg13: memref<2x1x32xf32, #tpu.memory_space<vmem>>, %arg14: memref<2x1x32xf32, #tpu.memory_space<vmem>>, %arg15: memref<2x1x32xf32, #tpu.memory_space<vmem>>, %arg16: memref<32x32xf32, #tpu.memory_space<vmem>>, %arg17: memref<1x32xf32, #tpu.memory_space<vmem>>, %arg18: memref<16x32xf32, #tpu.memory_space<vmem>>, %arg19: memref<2x32xf32, #tpu.memory_space<vmem>>) attributes {dimension_semantics = [], scalar_prefetch = 0 : i64, scratch_operands = 0 : i64, tpu.core_type = #tpu.core_type<tc>} {
    %c0 = arith.constant 0 : index
    %c0_0 = arith.constant 0 : index
    %0 = vector.load %arg0[%c0, %c0_0] : memref<16x32xf32, #tpu.memory_space<vmem>>, vector<16x32xf32>
    %c0_1 = arith.constant 0 : index
    %c0_2 = arith.constant 0 : index
    %1 = vector.load %arg2[%c0_1, %c0_2] : memref<1x32xf32, #tpu.memory_space<vmem>>, vector<1x32xf32>
    %c0_3 = arith.constant 0 : index
    %c0_4 = arith.constant 0 : index
    %2 = vector.load %arg3[%c0_3, %c0_4] : memref<1x32xf32, #tpu.memory_space<vmem>>, vector<1x32xf32>
    %cst = arith.constant dense<0.000000e+00> : vector<16xf32>
    %3 = vector.multi_reduction <add>, %0, %cst [1] : vector<16x32xf32> to vector<16xf32>
    %4 = vector.shape_cast %3 : vector<16xf32> to vector<16x1xf32>
    %cst_5 = arith.constant 3.200000e+01 : f32
    %5 = vector.broadcast %cst_5 : f32 to vector<16x1xf32>
    %6 = arith.divf %4, %5 : vector<16x1xf32>
    %7 = vector.broadcast %6 : vector<16x1xf32> to vector<16x32xf32>
    %8 = arith.subf %0, %7 : vector<16x32xf32>
    %9 = arith.mulf %8, %8 : vector<16x32xf32>
    %cst_6 = arith.constant dense<0.000000e+00> : vector<16xf32>
    %10 = vector.multi_reduction <add>, %9, %cst_6 [1] : vector<16x32xf32> to vector<16xf32>
    %11 = vector.shape_cast %10 : vector<16xf32> to vector<16x1xf32>
    %cst_7 = arith.constant 3.200000e+01 : f32
    %12 = vector.broadcast %cst_7 : f32 to vector<16x1xf32>
    %13 = arith.divf %11, %12 : vector<16x1xf32>
    %14 = vector.broadcast %6 : vector<16x1xf32> to vector<16x32xf32>
    %15 = arith.subf %0, %14 : vector<16x32xf32>
    %cst_8 = arith.constant 9.99999996E-13 : f32
    %16 = vector.broadcast %cst_8 : f32 to vector<16x1xf32>
    %17 = arith.addf %13, %16 : vector<16x1xf32>
    %18 = math.rsqrt %17 : vector<16x1xf32>
    %19 = vector.broadcast %18 : vector<16x1xf32> to vector<16x32xf32>
    %20 = arith.mulf %15, %19 : vector<16x32xf32>
    %21 = vector.broadcast %1 : vector<1x32xf32> to vector<16x32xf32>
    %22 = arith.mulf %20, %21 : vector<16x32xf32>
    %23 = vector.broadcast %2 : vector<1x32xf32> to vector<16x32xf32>
    %24 = arith.addf %22, %23 : vector<16x32xf32>
    %c0_9 = arith.constant 0 : index
    %c0_10 = arith.constant 0 : index
    %c0_11 = arith.constant 0 : index
    %25 = vector.load %arg1[%c0_9, %c0_10, %c0_11] : memref<2x1x8xf32, #tpu.memory_space<vmem>>, vector<2x1x8xf32>
    %c0_12 = arith.constant 0 : index
    %c0_13 = arith.constant 0 : index
    %c0_14 = arith.constant 0 : index
    %26 = vector.load %arg4[%c0_12, %c0_13, %c0_14] : memref<2x32x96xf32, #tpu.memory_space<vmem>>, vector<1x32x96xf32>
    %27 = vector.shape_cast %26 : vector<1x32x96xf32> to vector<32x96xf32>
    %cst_15 = arith.constant dense<0.000000e+00> : vector<16x96xf32>
    %28 = tpu.matmul %24, %27, %cst_15 {dimension_numbers = #tpu.dot_dimension_numbers<[1], [0], [0], [1], [0, 0, 1, 1], [], []>} : vector<16x32xf32>, vector<32x96xf32>, vector<16x96xf32> -> vector<16x96xf32>
    %c0_16 = arith.constant 0 : index
    %c0_17 = arith.constant 0 : index
    %c0_18 = arith.constant 0 : index
    %29 = vector.load %arg5[%c0_16, %c0_17, %c0_18] : memref<2x1x96xf32, #tpu.memory_space<vmem>>, vector<1x1x96xf32>
    %30 = vector.shape_cast %29 : vector<1x1x96xf32> to vector<1x96xf32>
    %31 = vector.broadcast %30 : vector<1x96xf32> to vector<16x96xf32>
    %32 = arith.addf %28, %31 : vector<16x96xf32>
    %33 = vector.extract_strided_slice %32 {offsets = [0, 0], sizes = [16, 32], strides = [1, 1]} : vector<16x96xf32> to vector<16x32xf32>
    %34 = vector.shape_cast %33 : vector<16x32xf32> to vector<2x8x32xf32>
    %35 = vector.extract_strided_slice %32 {offsets = [0, 32], sizes = [16, 32], strides = [1, 1]} : vector<16x96xf32> to vector<16x32xf32>
    %36 = vector.shape_cast %35 : vector<16x32xf32> to vector<2x8x32xf32>
    %37 = vector.extract_strided_slice %32 {offsets = [0, 64], sizes = [16, 32], strides = [1, 1]} : vector<16x96xf32> to vector<16x32xf32>
    %38 = vector.shape_cast %37 : vector<16x32xf32> to vector<2x8x32xf32>
    %c0_19 = arith.constant 0 : index
    %c0_20 = arith.constant 0 : index
    %c0_21 = arith.constant 0 : index
    %39 = vector.load %arg6[%c0_19, %c0_20, %c0_21] : memref<2x32x32xf32, #tpu.memory_space<vmem>>, vector<1x32x32xf32>
    %40 = vector.shape_cast %39 : vector<1x32x32xf32> to vector<32x32xf32>
    %cst_22 = arith.constant 0.000000e+00 : f32
    %41 = vector.broadcast %cst_22 : f32 to vector<16x32xf32>
    %c0_23 = arith.constant 0 : index
    %c0_24 = arith.constant 0 : index
    %c0_25 = arith.constant 0 : index
    %42 = vector.load %arg7[%c0_23, %c0_24, %c0_25] : memref<2x1x32xf32, #tpu.memory_space<vmem>>, vector<1x1x32xf32>
    %43 = vector.shape_cast %42 : vector<1x1x32xf32> to vector<1x32xf32>
    %44 = vector.broadcast %43 : vector<1x32xf32> to vector<16x32xf32>
    %45 = arith.addf %41, %44 : vector<16x32xf32>
    %46 = vector.extract_strided_slice %34 {offsets = [0, 0, 0], sizes = [2, 8, 8], strides = [1, 1, 1]} : vector<2x8x32xf32> to vector<2x8x8xf32>
    %47 = vector.extract_strided_slice %36 {offsets = [0, 0, 0], sizes = [2, 8, 8], strides = [1, 1, 1]} : vector<2x8x32xf32> to vector<2x8x8xf32>
    %48 = vector.extract_strided_slice %38 {offsets = [0, 0, 0], sizes = [2, 8, 8], strides = [1, 1, 1]} : vector<2x8x32xf32> to vector<2x8x8xf32>
    "tpu.trace_start"() <{level = 10 : i32, message = "bqd,bkd->bqk"}> : () -> ()
    %cst_26 = arith.constant dense<0.000000e+00> : vector<2x8x8xf32>
    %49 = tpu.matmul %46, %47, %cst_26 {dimension_numbers = #tpu.dot_dimension_numbers<[2], [2], [1], [1], [0, 0, 0, 1, 1, 1], [0], [0]>} : vector<2x8x8xf32>, vector<2x8x8xf32>, vector<2x8x8xf32> -> vector<2x8x8xf32>
    "tpu.trace_stop"() : () -> ()
    %cst_27 = arith.constant 0.353553385 : f32
    %50 = vector.broadcast %cst_27 : f32 to vector<2x8x8xf32>
    %51 = arith.mulf %49, %50 : vector<2x8x8xf32>
    %52 = vector.broadcast %25 : vector<2x1x8xf32> to vector<2x8x8xf32>
    %53 = arith.addf %51, %52 : vector<2x8x8xf32>
    %cst_28 = arith.constant dense<0xFF800000> : vector<2x8xf32>
    %54 = vector.multi_reduction <maximumf>, %53, %cst_28 [2] : vector<2x8x8xf32> to vector<2x8xf32>
    %55 = vector.shape_cast %54 : vector<2x8xf32> to vector<2x8x1xf32>
    %56 = vector.broadcast %55 : vector<2x8x1xf32> to vector<2x8x8xf32>
    %57 = arith.subf %53, %56 : vector<2x8x8xf32>
    %58 = math.exp %57 : vector<2x8x8xf32>
    %cst_29 = arith.constant dense<0.000000e+00> : vector<2x8xf32>
    %59 = vector.multi_reduction <add>, %58, %cst_29 [2] : vector<2x8x8xf32> to vector<2x8xf32>
    %60 = vector.shape_cast %59 : vector<2x8xf32> to vector<2x8x1xf32>
    %61 = vector.broadcast %60 : vector<2x8x1xf32> to vector<2x8x8xf32>
    %62 = arith.divf %58, %61 : vector<2x8x8xf32>
    "tpu.trace_start"() <{level = 10 : i32, message = "bqk,bkd->bqd"}> : () -> ()
    %cst_30 = arith.constant dense<0.000000e+00> : vector<2x8x8xf32>
    %63 = tpu.matmul %62, %48, %cst_30 {dimension_numbers = #tpu.dot_dimension_numbers<[2], [1], [1], [2], [0, 0, 0, 1, 1, 2], [0], [0]>} : vector<2x8x8xf32>, vector<2x8x8xf32>, vector<2x8x8xf32> -> vector<2x8x8xf32>
    "tpu.trace_stop"() : () -> ()
    %64 = vector.shape_cast %63 : vector<2x8x8xf32> to vector<16x8xf32>
    %65 = vector.extract_strided_slice %40 {offsets = [0, 0], sizes = [8, 32], strides = [1, 1]} : vector<32x32xf32> to vector<8x32xf32>
    %cst_31 = arith.constant dense<0.000000e+00> : vector<16x32xf32>
    %66 = tpu.matmul %64, %65, %cst_31 {dimension_numbers = #tpu.dot_dimension_numbers<[1], [0], [0], [1], [0, 0, 1, 1], [], []>} : vector<16x8xf32>, vector<8x32xf32>, vector<16x32xf32> -> vector<16x32xf32>
    %67 = arith.addf %45, %66 : vector<16x32xf32>
    %68 = vector.extract_strided_slice %34 {offsets = [0, 0, 8], sizes = [2, 8, 8], strides = [1, 1, 1]} : vector<2x8x32xf32> to vector<2x8x8xf32>
    %69 = vector.extract_strided_slice %36 {offsets = [0, 0, 8], sizes = [2, 8, 8], strides = [1, 1, 1]} : vector<2x8x32xf32> to vector<2x8x8xf32>
    %70 = vector.extract_strided_slice %38 {offsets = [0, 0, 8], sizes = [2, 8, 8], strides = [1, 1, 1]} : vector<2x8x32xf32> to vector<2x8x8xf32>
    "tpu.trace_start"() <{level = 10 : i32, message = "bqd,bkd->bqk"}> : () -> ()
    %cst_32 = arith.constant dense<0.000000e+00> : vector<2x8x8xf32>
    %71 = tpu.matmul %68, %69, %cst_32 {dimension_numbers = #tpu.dot_dimension_numbers<[2], [2], [1], [1], [0, 0, 0, 1, 1, 1], [0], [0]>} : vector<2x8x8xf32>, vector<2x8x8xf32>, vector<2x8x8xf32> -> vector<2x8x8xf32>
    "tpu.trace_stop"() : () -> ()
    %cst_33 = arith.constant 0.353553385 : f32
    %72 = vector.broadcast %cst_33 : f32 to vector<2x8x8xf32>
    %73 = arith.mulf %71, %72 : vector<2x8x8xf32>
    %74 = vector.broadcast %25 : vector<2x1x8xf32> to vector<2x8x8xf32>
    %75 = arith.addf %73, %74 : vector<2x8x8xf32>
    %cst_34 = arith.constant dense<0xFF800000> : vector<2x8xf32>
    %76 = vector.multi_reduction <maximumf>, %75, %cst_34 [2] : vector<2x8x8xf32> to vector<2x8xf32>
    %77 = vector.shape_cast %76 : vector<2x8xf32> to vector<2x8x1xf32>
    %78 = vector.broadcast %77 : vector<2x8x1xf32> to vector<2x8x8xf32>
    %79 = arith.subf %75, %78 : vector<2x8x8xf32>
    %80 = math.exp %79 : vector<2x8x8xf32>
    %cst_35 = arith.constant dense<0.000000e+00> : vector<2x8xf32>
    %81 = vector.multi_reduction <add>, %80, %cst_35 [2] : vector<2x8x8xf32> to vector<2x8xf32>
    %82 = vector.shape_cast %81 : vector<2x8xf32> to vector<2x8x1xf32>
    %83 = vector.broadcast %82 : vector<2x8x1xf32> to vector<2x8x8xf32>
    %84 = arith.divf %80, %83 : vector<2x8x8xf32>
    "tpu.trace_start"() <{level = 10 : i32, message = "bqk,bkd->bqd"}> : () -> ()
    %cst_36 = arith.constant dense<0.000000e+00> : vector<2x8x8xf32>
    %85 = tpu.matmul %84, %70, %cst_36 {dimension_numbers = #tpu.dot_dimension_numbers<[2], [1], [1], [2], [0, 0, 0, 1, 1, 2], [0], [0]>} : vector<2x8x8xf32>, vector<2x8x8xf32>, vector<2x8x8xf32> -> vector<2x8x8xf32>
    "tpu.trace_stop"() : () -> ()
    %86 = vector.shape_cast %85 : vector<2x8x8xf32> to vector<16x8xf32>
    %87 = vector.extract_strided_slice %40 {offsets = [8, 0], sizes = [8, 32], strides = [1, 1]} : vector<32x32xf32> to vector<8x32xf32>
    %cst_37 = arith.constant dense<0.000000e+00> : vector<16x32xf32>
    %88 = tpu.matmul %86, %87, %cst_37 {dimension_numbers = #tpu.dot_dimension_numbers<[1], [0], [0], [1], [0, 0, 1, 1], [], []>} : vector<16x8xf32>, vector<8x32xf32>, vector<16x32xf32> -> vector<16x32xf32>
    %89 = arith.addf %67, %88 : vector<16x32xf32>
    %90 = vector.extract_strided_slice %34 {offsets = [0, 0, 16], sizes = [2, 8, 8], strides = [1, 1, 1]} : vector<2x8x32xf32> to vector<2x8x8xf32>
    %91 = vector.extract_strided_slice %36 {offsets = [0, 0, 16], sizes = [2, 8, 8], strides = [1, 1, 1]} : vector<2x8x32xf32> to vector<2x8x8xf32>
    %92 = vector.extract_strided_slice %38 {offsets = [0, 0, 16], sizes = [2, 8, 8], strides = [1, 1, 1]} : vector<2x8x32xf32> to vector<2x8x8xf32>
    "tpu.trace_start"() <{level = 10 : i32, message = "bqd,bkd->bqk"}> : () -> ()
    %cst_38 = arith.constant dense<0.000000e+00> : vector<2x8x8xf32>
    %93 = tpu.matmul %90, %91, %cst_38 {dimension_numbers = #tpu.dot_dimension_numbers<[2], [2], [1], [1], [0, 0, 0, 1, 1, 1], [0], [0]>} : vector<2x8x8xf32>, vector<2x8x8xf32>, vector<2x8x8xf32> -> vector<2x8x8xf32>
    "tpu.trace_stop"() : () -> ()
    %cst_39 = arith.constant 0.353553385 : f32
    %94 = vector.broadcast %cst_39 : f32 to vector<2x8x8xf32>
    %95 = arith.mulf %93, %94 : vector<2x8x8xf32>
    %96 = vector.broadcast %25 : vector<2x1x8xf32> to vector<2x8x8xf32>
    %97 = arith.addf %95, %96 : vector<2x8x8xf32>
    %cst_40 = arith.constant dense<0xFF800000> : vector<2x8xf32>
    %98 = vector.multi_reduction <maximumf>, %97, %cst_40 [2] : vector<2x8x8xf32> to vector<2x8xf32>
    %99 = vector.shape_cast %98 : vector<2x8xf32> to vector<2x8x1xf32>
    %100 = vector.broadcast %99 : vector<2x8x1xf32> to vector<2x8x8xf32>
    %101 = arith.subf %97, %100 : vector<2x8x8xf32>
    %102 = math.exp %101 : vector<2x8x8xf32>
    %cst_41 = arith.constant dense<0.000000e+00> : vector<2x8xf32>
    %103 = vector.multi_reduction <add>, %102, %cst_41 [2] : vector<2x8x8xf32> to vector<2x8xf32>
    %104 = vector.shape_cast %103 : vector<2x8xf32> to vector<2x8x1xf32>
    %105 = vector.broadcast %104 : vector<2x8x1xf32> to vector<2x8x8xf32>
    %106 = arith.divf %102, %105 : vector<2x8x8xf32>
    "tpu.trace_start"() <{level = 10 : i32, message = "bqk,bkd->bqd"}> : () -> ()
    %cst_42 = arith.constant dense<0.000000e+00> : vector<2x8x8xf32>
    %107 = tpu.matmul %106, %92, %cst_42 {dimension_numbers = #tpu.dot_dimension_numbers<[2], [1], [1], [2], [0, 0, 0, 1, 1, 2], [0], [0]>} : vector<2x8x8xf32>, vector<2x8x8xf32>, vector<2x8x8xf32> -> vector<2x8x8xf32>
    "tpu.trace_stop"() : () -> ()
    %108 = vector.shape_cast %107 : vector<2x8x8xf32> to vector<16x8xf32>
    %109 = vector.extract_strided_slice %40 {offsets = [16, 0], sizes = [8, 32], strides = [1, 1]} : vector<32x32xf32> to vector<8x32xf32>
    %cst_43 = arith.constant dense<0.000000e+00> : vector<16x32xf32>
    %110 = tpu.matmul %108, %109, %cst_43 {dimension_numbers = #tpu.dot_dimension_numbers<[1], [0], [0], [1], [0, 0, 1, 1], [], []>} : vector<16x8xf32>, vector<8x32xf32>, vector<16x32xf32> -> vector<16x32xf32>
    %111 = arith.addf %89, %110 : vector<16x32xf32>
    %112 = vector.extract_strided_slice %34 {offsets = [0, 0, 24], sizes = [2, 8, 8], strides = [1, 1, 1]} : vector<2x8x32xf32> to vector<2x8x8xf32>
    %113 = vector.extract_strided_slice %36 {offsets = [0, 0, 24], sizes = [2, 8, 8], strides = [1, 1, 1]} : vector<2x8x32xf32> to vector<2x8x8xf32>
    %114 = vector.extract_strided_slice %38 {offsets = [0, 0, 24], sizes = [2, 8, 8], strides = [1, 1, 1]} : vector<2x8x32xf32> to vector<2x8x8xf32>
    "tpu.trace_start"() <{level = 10 : i32, message = "bqd,bkd->bqk"}> : () -> ()
    %cst_44 = arith.constant dense<0.000000e+00> : vector<2x8x8xf32>
    %115 = tpu.matmul %112, %113, %cst_44 {dimension_numbers = #tpu.dot_dimension_numbers<[2], [2], [1], [1], [0, 0, 0, 1, 1, 1], [0], [0]>} : vector<2x8x8xf32>, vector<2x8x8xf32>, vector<2x8x8xf32> -> vector<2x8x8xf32>
    "tpu.trace_stop"() : () -> ()
    %cst_45 = arith.constant 0.353553385 : f32
    %116 = vector.broadcast %cst_45 : f32 to vector<2x8x8xf32>
    %117 = arith.mulf %115, %116 : vector<2x8x8xf32>
    %118 = vector.broadcast %25 : vector<2x1x8xf32> to vector<2x8x8xf32>
    %119 = arith.addf %117, %118 : vector<2x8x8xf32>
    %cst_46 = arith.constant dense<0xFF800000> : vector<2x8xf32>
    %120 = vector.multi_reduction <maximumf>, %119, %cst_46 [2] : vector<2x8x8xf32> to vector<2x8xf32>
    %121 = vector.shape_cast %120 : vector<2x8xf32> to vector<2x8x1xf32>
    %122 = vector.broadcast %121 : vector<2x8x1xf32> to vector<2x8x8xf32>
    %123 = arith.subf %119, %122 : vector<2x8x8xf32>
    %124 = math.exp %123 : vector<2x8x8xf32>
    %cst_47 = arith.constant dense<0.000000e+00> : vector<2x8xf32>
    %125 = vector.multi_reduction <add>, %124, %cst_47 [2] : vector<2x8x8xf32> to vector<2x8xf32>
    %126 = vector.shape_cast %125 : vector<2x8xf32> to vector<2x8x1xf32>
    %127 = vector.broadcast %126 : vector<2x8x1xf32> to vector<2x8x8xf32>
    %128 = arith.divf %124, %127 : vector<2x8x8xf32>
    "tpu.trace_start"() <{level = 10 : i32, message = "bqk,bkd->bqd"}> : () -> ()
    %cst_48 = arith.constant dense<0.000000e+00> : vector<2x8x8xf32>
    %129 = tpu.matmul %128, %114, %cst_48 {dimension_numbers = #tpu.dot_dimension_numbers<[2], [1], [1], [2], [0, 0, 0, 1, 1, 2], [0], [0]>} : vector<2x8x8xf32>, vector<2x8x8xf32>, vector<2x8x8xf32> -> vector<2x8x8xf32>
    "tpu.trace_stop"() : () -> ()
    %130 = vector.shape_cast %129 : vector<2x8x8xf32> to vector<16x8xf32>
    %131 = vector.extract_strided_slice %40 {offsets = [24, 0], sizes = [8, 32], strides = [1, 1]} : vector<32x32xf32> to vector<8x32xf32>
    %cst_49 = arith.constant dense<0.000000e+00> : vector<16x32xf32>
    %132 = tpu.matmul %130, %131, %cst_49 {dimension_numbers = #tpu.dot_dimension_numbers<[1], [0], [0], [1], [0, 0, 1, 1], [], []>} : vector<16x8xf32>, vector<8x32xf32>, vector<16x32xf32> -> vector<16x32xf32>
    %133 = arith.addf %111, %132 : vector<16x32xf32>
    %134 = arith.addf %133, %24 : vector<16x32xf32>
    %c0_50 = arith.constant 0 : index
    %c0_51 = arith.constant 0 : index
    %c0_52 = arith.constant 0 : index
    %135 = vector.load %arg8[%c0_50, %c0_51, %c0_52] : memref<2x1x32xf32, #tpu.memory_space<vmem>>, vector<1x1x32xf32>
    %136 = vector.shape_cast %135 : vector<1x1x32xf32> to vector<1x32xf32>
    %c0_53 = arith.constant 0 : index
    %c0_54 = arith.constant 0 : index
    %c0_55 = arith.constant 0 : index
    %137 = vector.load %arg9[%c0_53, %c0_54, %c0_55] : memref<2x1x32xf32, #tpu.memory_space<vmem>>, vector<1x1x32xf32>
    %138 = vector.shape_cast %137 : vector<1x1x32xf32> to vector<1x32xf32>
    %cst_56 = arith.constant dense<0.000000e+00> : vector<16xf32>
    %139 = vector.multi_reduction <add>, %134, %cst_56 [1] : vector<16x32xf32> to vector<16xf32>
    %140 = vector.shape_cast %139 : vector<16xf32> to vector<16x1xf32>
    %cst_57 = arith.constant 3.200000e+01 : f32
    %141 = vector.broadcast %cst_57 : f32 to vector<16x1xf32>
    %142 = arith.divf %140, %141 : vector<16x1xf32>
    %143 = vector.broadcast %142 : vector<16x1xf32> to vector<16x32xf32>
    %144 = arith.subf %134, %143 : vector<16x32xf32>
    %145 = arith.mulf %144, %144 : vector<16x32xf32>
    %cst_58 = arith.constant dense<0.000000e+00> : vector<16xf32>
    %146 = vector.multi_reduction <add>, %145, %cst_58 [1] : vector<16x32xf32> to vector<16xf32>
    %147 = vector.shape_cast %146 : vector<16xf32> to vector<16x1xf32>
    %cst_59 = arith.constant 3.200000e+01 : f32
    %148 = vector.broadcast %cst_59 : f32 to vector<16x1xf32>
    %149 = arith.divf %147, %148 : vector<16x1xf32>
    %150 = vector.broadcast %142 : vector<16x1xf32> to vector<16x32xf32>
    %151 = arith.subf %134, %150 : vector<16x32xf32>
    %cst_60 = arith.constant 9.99999996E-13 : f32
    %152 = vector.broadcast %cst_60 : f32 to vector<16x1xf32>
    %153 = arith.addf %149, %152 : vector<16x1xf32>
    %154 = math.rsqrt %153 : vector<16x1xf32>
    %155 = vector.broadcast %154 : vector<16x1xf32> to vector<16x32xf32>
    %156 = arith.mulf %151, %155 : vector<16x32xf32>
    %157 = vector.broadcast %136 : vector<1x32xf32> to vector<16x32xf32>
    %158 = arith.mulf %156, %157 : vector<16x32xf32>
    %159 = vector.broadcast %138 : vector<1x32xf32> to vector<16x32xf32>
    %160 = arith.addf %158, %159 : vector<16x32xf32>
    %c0_61 = arith.constant 0 : index
    %c0_62 = arith.constant 0 : index
    %c0_63 = arith.constant 0 : index
    %161 = vector.load %arg10[%c0_61, %c0_62, %c0_63] : memref<2x32x64xf32, #tpu.memory_space<vmem>>, vector<1x32x64xf32>
    %162 = vector.shape_cast %161 : vector<1x32x64xf32> to vector<32x64xf32>
    %cst_64 = arith.constant dense<0.000000e+00> : vector<16x64xf32>
    %163 = tpu.matmul %160, %162, %cst_64 {dimension_numbers = #tpu.dot_dimension_numbers<[1], [0], [0], [1], [0, 0, 1, 1], [], []>} : vector<16x32xf32>, vector<32x64xf32>, vector<16x64xf32> -> vector<16x64xf32>
    %c0_65 = arith.constant 0 : index
    %c0_66 = arith.constant 0 : index
    %c0_67 = arith.constant 0 : index
    %164 = vector.load %arg11[%c0_65, %c0_66, %c0_67] : memref<2x1x64xf32, #tpu.memory_space<vmem>>, vector<1x1x64xf32>
    %165 = vector.shape_cast %164 : vector<1x1x64xf32> to vector<1x64xf32>
    %166 = vector.broadcast %165 : vector<1x64xf32> to vector<16x64xf32>
    %167 = arith.addf %163, %166 : vector<16x64xf32>
    %cst_68 = arith.constant 5.000000e-01 : f32
    %168 = vector.broadcast %cst_68 : f32 to vector<16x64xf32>
    %169 = arith.mulf %168, %167 : vector<16x64xf32>
    %cst_69 = arith.constant 4.471500e-02 : f32
    %170 = vector.broadcast %cst_69 : f32 to vector<16x64xf32>
    %171 = arith.mulf %170, %167 : vector<16x64xf32>
    %172 = arith.mulf %171, %167 : vector<16x64xf32>
    %173 = arith.mulf %172, %167 : vector<16x64xf32>
    %174 = arith.addf %167, %173 : vector<16x64xf32>
    %cst_70 = arith.constant 0.797884583 : f32
    %175 = vector.broadcast %cst_70 : f32 to vector<16x64xf32>
    %176 = arith.mulf %175, %174 : vector<16x64xf32>
    %177 = math.tanh %176 : vector<16x64xf32>
    %cst_71 = arith.constant 1.000000e+00 : f32
    %178 = vector.broadcast %cst_71 : f32 to vector<16x64xf32>
    %179 = arith.addf %178, %177 : vector<16x64xf32>
    %180 = arith.mulf %169, %179 : vector<16x64xf32>
    %c0_72 = arith.constant 0 : index
    %c0_73 = arith.constant 0 : index
    %c0_74 = arith.constant 0 : index
    %181 = vector.load %arg12[%c0_72, %c0_73, %c0_74] : memref<2x64x32xf32, #tpu.memory_space<vmem>>, vector<1x64x32xf32>
    %182 = vector.shape_cast %181 : vector<1x64x32xf32> to vector<64x32xf32>
    %cst_75 = arith.constant dense<0.000000e+00> : vector<16x32xf32>
    %183 = tpu.matmul %180, %182, %cst_75 {dimension_numbers = #tpu.dot_dimension_numbers<[1], [0], [0], [1], [0, 0, 1, 1], [], []>} : vector<16x64xf32>, vector<64x32xf32>, vector<16x32xf32> -> vector<16x32xf32>
    %c0_76 = arith.constant 0 : index
    %c0_77 = arith.constant 0 : index
    %c0_78 = arith.constant 0 : index
    %184 = vector.load %arg13[%c0_76, %c0_77, %c0_78] : memref<2x1x32xf32, #tpu.memory_space<vmem>>, vector<1x1x32xf32>
    %185 = vector.shape_cast %184 : vector<1x1x32xf32> to vector<1x32xf32>
    %186 = vector.broadcast %185 : vector<1x32xf32> to vector<16x32xf32>
    %187 = arith.addf %183, %186 : vector<16x32xf32>
    %188 = arith.addf %187, %160 : vector<16x32xf32>
    %c0_79 = arith.constant 0 : index
    %c0_80 = arith.constant 0 : index
    %c0_81 = arith.constant 0 : index
    %189 = vector.load %arg14[%c0_79, %c0_80, %c0_81] : memref<2x1x32xf32, #tpu.memory_space<vmem>>, vector<1x1x32xf32>
    %190 = vector.shape_cast %189 : vector<1x1x32xf32> to vector<1x32xf32>
    %c0_82 = arith.constant 0 : index
    %c0_83 = arith.constant 0 : index
    %c0_84 = arith.constant 0 : index
    %191 = vector.load %arg15[%c0_82, %c0_83, %c0_84] : memref<2x1x32xf32, #tpu.memory_space<vmem>>, vector<1x1x32xf32>
    %192 = vector.shape_cast %191 : vector<1x1x32xf32> to vector<1x32xf32>
    %cst_85 = arith.constant dense<0.000000e+00> : vector<16xf32>
    %193 = vector.multi_reduction <add>, %188, %cst_85 [1] : vector<16x32xf32> to vector<16xf32>
    %194 = vector.shape_cast %193 : vector<16xf32> to vector<16x1xf32>
    %cst_86 = arith.constant 3.200000e+01 : f32
    %195 = vector.broadcast %cst_86 : f32 to vector<16x1xf32>
    %196 = arith.divf %194, %195 : vector<16x1xf32>
    %197 = vector.broadcast %196 : vector<16x1xf32> to vector<16x32xf32>
    %198 = arith.subf %188, %197 : vector<16x32xf32>
    %199 = arith.mulf %198, %198 : vector<16x32xf32>
    %cst_87 = arith.constant dense<0.000000e+00> : vector<16xf32>
    %200 = vector.multi_reduction <add>, %199, %cst_87 [1] : vector<16x32xf32> to vector<16xf32>
    %201 = vector.shape_cast %200 : vector<16xf32> to vector<16x1xf32>
    %cst_88 = arith.constant 3.200000e+01 : f32
    %202 = vector.broadcast %cst_88 : f32 to vector<16x1xf32>
    %203 = arith.divf %201, %202 : vector<16x1xf32>
    %204 = vector.broadcast %196 : vector<16x1xf32> to vector<16x32xf32>
    %205 = arith.subf %188, %204 : vector<16x32xf32>
    %cst_89 = arith.constant 9.99999996E-13 : f32
    %206 = vector.broadcast %cst_89 : f32 to vector<16x1xf32>
    %207 = arith.addf %203, %206 : vector<16x1xf32>
    %208 = math.rsqrt %207 : vector<16x1xf32>
    %209 = vector.broadcast %208 : vector<16x1xf32> to vector<16x32xf32>
    %210 = arith.mulf %205, %209 : vector<16x32xf32>
    %211 = vector.broadcast %190 : vector<1x32xf32> to vector<16x32xf32>
    %212 = arith.mulf %210, %211 : vector<16x32xf32>
    %213 = vector.broadcast %192 : vector<1x32xf32> to vector<16x32xf32>
    %214 = arith.addf %212, %213 : vector<16x32xf32>
    %c1 = arith.constant 1 : index
    %c0_90 = arith.constant 0 : index
    %c0_91 = arith.constant 0 : index
    %215 = vector.load %arg4[%c1, %c0_90, %c0_91] : memref<2x32x96xf32, #tpu.memory_space<vmem>>, vector<1x32x96xf32>
    %216 = vector.shape_cast %215 : vector<1x32x96xf32> to vector<32x96xf32>
    %cst_92 = arith.constant dense<0.000000e+00> : vector<16x96xf32>
    %217 = tpu.matmul %214, %216, %cst_92 {dimension_numbers = #tpu.dot_dimension_numbers<[1], [0], [0], [1], [0, 0, 1, 1], [], []>} : vector<16x32xf32>, vector<32x96xf32>, vector<16x96xf32> -> vector<16x96xf32>
    %c1_93 = arith.constant 1 : index
    %c0_94 = arith.constant 0 : index
    %c0_95 = arith.constant 0 : index
    %218 = vector.load %arg5[%c1_93, %c0_94, %c0_95] : memref<2x1x96xf32, #tpu.memory_space<vmem>>, vector<1x1x96xf32>
    %219 = vector.shape_cast %218 : vector<1x1x96xf32> to vector<1x96xf32>
    %220 = vector.broadcast %219 : vector<1x96xf32> to vector<16x96xf32>
    %221 = arith.addf %217, %220 : vector<16x96xf32>
    %222 = vector.extract_strided_slice %221 {offsets = [0, 0], sizes = [16, 32], strides = [1, 1]} : vector<16x96xf32> to vector<16x32xf32>
    %223 = vector.shape_cast %222 : vector<16x32xf32> to vector<2x8x32xf32>
    %224 = vector.extract_strided_slice %221 {offsets = [0, 32], sizes = [16, 32], strides = [1, 1]} : vector<16x96xf32> to vector<16x32xf32>
    %225 = vector.shape_cast %224 : vector<16x32xf32> to vector<2x8x32xf32>
    %226 = vector.extract_strided_slice %221 {offsets = [0, 64], sizes = [16, 32], strides = [1, 1]} : vector<16x96xf32> to vector<16x32xf32>
    %227 = vector.shape_cast %226 : vector<16x32xf32> to vector<2x8x32xf32>
    %c1_96 = arith.constant 1 : index
    %c0_97 = arith.constant 0 : index
    %c0_98 = arith.constant 0 : index
    %228 = vector.load %arg6[%c1_96, %c0_97, %c0_98] : memref<2x32x32xf32, #tpu.memory_space<vmem>>, vector<1x32x32xf32>
    %229 = vector.shape_cast %228 : vector<1x32x32xf32> to vector<32x32xf32>
    %cst_99 = arith.constant 0.000000e+00 : f32
    %230 = vector.broadcast %cst_99 : f32 to vector<16x32xf32>
    %c1_100 = arith.constant 1 : index
    %c0_101 = arith.constant 0 : index
    %c0_102 = arith.constant 0 : index
    %231 = vector.load %arg7[%c1_100, %c0_101, %c0_102] : memref<2x1x32xf32, #tpu.memory_space<vmem>>, vector<1x1x32xf32>
    %232 = vector.shape_cast %231 : vector<1x1x32xf32> to vector<1x32xf32>
    %233 = vector.broadcast %232 : vector<1x32xf32> to vector<16x32xf32>
    %234 = arith.addf %230, %233 : vector<16x32xf32>
    %235 = vector.extract_strided_slice %223 {offsets = [0, 0, 0], sizes = [2, 8, 8], strides = [1, 1, 1]} : vector<2x8x32xf32> to vector<2x8x8xf32>
    %236 = vector.extract_strided_slice %225 {offsets = [0, 0, 0], sizes = [2, 8, 8], strides = [1, 1, 1]} : vector<2x8x32xf32> to vector<2x8x8xf32>
    %237 = vector.extract_strided_slice %227 {offsets = [0, 0, 0], sizes = [2, 8, 8], strides = [1, 1, 1]} : vector<2x8x32xf32> to vector<2x8x8xf32>
    "tpu.trace_start"() <{level = 10 : i32, message = "bqd,bkd->bqk"}> : () -> ()
    %cst_103 = arith.constant dense<0.000000e+00> : vector<2x8x8xf32>
    %238 = tpu.matmul %235, %236, %cst_103 {dimension_numbers = #tpu.dot_dimension_numbers<[2], [2], [1], [1], [0, 0, 0, 1, 1, 1], [0], [0]>} : vector<2x8x8xf32>, vector<2x8x8xf32>, vector<2x8x8xf32> -> vector<2x8x8xf32>
    "tpu.trace_stop"() : () -> ()
    %cst_104 = arith.constant 0.353553385 : f32
    %239 = vector.broadcast %cst_104 : f32 to vector<2x8x8xf32>
    %240 = arith.mulf %238, %239 : vector<2x8x8xf32>
    %241 = vector.broadcast %25 : vector<2x1x8xf32> to vector<2x8x8xf32>
    %242 = arith.addf %240, %241 : vector<2x8x8xf32>
    %cst_105 = arith.constant dense<0xFF800000> : vector<2x8xf32>
    %243 = vector.multi_reduction <maximumf>, %242, %cst_105 [2] : vector<2x8x8xf32> to vector<2x8xf32>
    %244 = vector.shape_cast %243 : vector<2x8xf32> to vector<2x8x1xf32>
    %245 = vector.broadcast %244 : vector<2x8x1xf32> to vector<2x8x8xf32>
    %246 = arith.subf %242, %245 : vector<2x8x8xf32>
    %247 = math.exp %246 : vector<2x8x8xf32>
    %cst_106 = arith.constant dense<0.000000e+00> : vector<2x8xf32>
    %248 = vector.multi_reduction <add>, %247, %cst_106 [2] : vector<2x8x8xf32> to vector<2x8xf32>
    %249 = vector.shape_cast %248 : vector<2x8xf32> to vector<2x8x1xf32>
    %250 = vector.broadcast %249 : vector<2x8x1xf32> to vector<2x8x8xf32>
    %251 = arith.divf %247, %250 : vector<2x8x8xf32>
    "tpu.trace_start"() <{level = 10 : i32, message = "bqk,bkd->bqd"}> : () -> ()
    %cst_107 = arith.constant dense<0.000000e+00> : vector<2x8x8xf32>
    %252 = tpu.matmul %251, %237, %cst_107 {dimension_numbers = #tpu.dot_dimension_numbers<[2], [1], [1], [2], [0, 0, 0, 1, 1, 2], [0], [0]>} : vector<2x8x8xf32>, vector<2x8x8xf32>, vector<2x8x8xf32> -> vector<2x8x8xf32>
    "tpu.trace_stop"() : () -> ()
    %253 = vector.shape_cast %252 : vector<2x8x8xf32> to vector<16x8xf32>
    %254 = vector.extract_strided_slice %229 {offsets = [0, 0], sizes = [8, 32], strides = [1, 1]} : vector<32x32xf32> to vector<8x32xf32>
    %cst_108 = arith.constant dense<0.000000e+00> : vector<16x32xf32>
    %255 = tpu.matmul %253, %254, %cst_108 {dimension_numbers = #tpu.dot_dimension_numbers<[1], [0], [0], [1], [0, 0, 1, 1], [], []>} : vector<16x8xf32>, vector<8x32xf32>, vector<16x32xf32> -> vector<16x32xf32>
    %256 = arith.addf %234, %255 : vector<16x32xf32>
    %257 = vector.extract_strided_slice %223 {offsets = [0, 0, 8], sizes = [2, 8, 8], strides = [1, 1, 1]} : vector<2x8x32xf32> to vector<2x8x8xf32>
    %258 = vector.extract_strided_slice %225 {offsets = [0, 0, 8], sizes = [2, 8, 8], strides = [1, 1, 1]} : vector<2x8x32xf32> to vector<2x8x8xf32>
    %259 = vector.extract_strided_slice %227 {offsets = [0, 0, 8], sizes = [2, 8, 8], strides = [1, 1, 1]} : vector<2x8x32xf32> to vector<2x8x8xf32>
    "tpu.trace_start"() <{level = 10 : i32, message = "bqd,bkd->bqk"}> : () -> ()
    %cst_109 = arith.constant dense<0.000000e+00> : vector<2x8x8xf32>
    %260 = tpu.matmul %257, %258, %cst_109 {dimension_numbers = #tpu.dot_dimension_numbers<[2], [2], [1], [1], [0, 0, 0, 1, 1, 1], [0], [0]>} : vector<2x8x8xf32>, vector<2x8x8xf32>, vector<2x8x8xf32> -> vector<2x8x8xf32>
    "tpu.trace_stop"() : () -> ()
    %cst_110 = arith.constant 0.353553385 : f32
    %261 = vector.broadcast %cst_110 : f32 to vector<2x8x8xf32>
    %262 = arith.mulf %260, %261 : vector<2x8x8xf32>
    %263 = vector.broadcast %25 : vector<2x1x8xf32> to vector<2x8x8xf32>
    %264 = arith.addf %262, %263 : vector<2x8x8xf32>
    %cst_111 = arith.constant dense<0xFF800000> : vector<2x8xf32>
    %265 = vector.multi_reduction <maximumf>, %264, %cst_111 [2] : vector<2x8x8xf32> to vector<2x8xf32>
    %266 = vector.shape_cast %265 : vector<2x8xf32> to vector<2x8x1xf32>
    %267 = vector.broadcast %266 : vector<2x8x1xf32> to vector<2x8x8xf32>
    %268 = arith.subf %264, %267 : vector<2x8x8xf32>
    %269 = math.exp %268 : vector<2x8x8xf32>
    %cst_112 = arith.constant dense<0.000000e+00> : vector<2x8xf32>
    %270 = vector.multi_reduction <add>, %269, %cst_112 [2] : vector<2x8x8xf32> to vector<2x8xf32>
    %271 = vector.shape_cast %270 : vector<2x8xf32> to vector<2x8x1xf32>
    %272 = vector.broadcast %271 : vector<2x8x1xf32> to vector<2x8x8xf32>
    %273 = arith.divf %269, %272 : vector<2x8x8xf32>
    "tpu.trace_start"() <{level = 10 : i32, message = "bqk,bkd->bqd"}> : () -> ()
    %cst_113 = arith.constant dense<0.000000e+00> : vector<2x8x8xf32>
    %274 = tpu.matmul %273, %259, %cst_113 {dimension_numbers = #tpu.dot_dimension_numbers<[2], [1], [1], [2], [0, 0, 0, 1, 1, 2], [0], [0]>} : vector<2x8x8xf32>, vector<2x8x8xf32>, vector<2x8x8xf32> -> vector<2x8x8xf32>
    "tpu.trace_stop"() : () -> ()
    %275 = vector.shape_cast %274 : vector<2x8x8xf32> to vector<16x8xf32>
    %276 = vector.extract_strided_slice %229 {offsets = [8, 0], sizes = [8, 32], strides = [1, 1]} : vector<32x32xf32> to vector<8x32xf32>
    %cst_114 = arith.constant dense<0.000000e+00> : vector<16x32xf32>
    %277 = tpu.matmul %275, %276, %cst_114 {dimension_numbers = #tpu.dot_dimension_numbers<[1], [0], [0], [1], [0, 0, 1, 1], [], []>} : vector<16x8xf32>, vector<8x32xf32>, vector<16x32xf32> -> vector<16x32xf32>
    %278 = arith.addf %256, %277 : vector<16x32xf32>
    %279 = vector.extract_strided_slice %223 {offsets = [0, 0, 16], sizes = [2, 8, 8], strides = [1, 1, 1]} : vector<2x8x32xf32> to vector<2x8x8xf32>
    %280 = vector.extract_strided_slice %225 {offsets = [0, 0, 16], sizes = [2, 8, 8], strides = [1, 1, 1]} : vector<2x8x32xf32> to vector<2x8x8xf32>
    %281 = vector.extract_strided_slice %227 {offsets = [0, 0, 16], sizes = [2, 8, 8], strides = [1, 1, 1]} : vector<2x8x32xf32> to vector<2x8x8xf32>
    "tpu.trace_start"() <{level = 10 : i32, message = "bqd,bkd->bqk"}> : () -> ()
    %cst_115 = arith.constant dense<0.000000e+00> : vector<2x8x8xf32>
    %282 = tpu.matmul %279, %280, %cst_115 {dimension_numbers = #tpu.dot_dimension_numbers<[2], [2], [1], [1], [0, 0, 0, 1, 1, 1], [0], [0]>} : vector<2x8x8xf32>, vector<2x8x8xf32>, vector<2x8x8xf32> -> vector<2x8x8xf32>
    "tpu.trace_stop"() : () -> ()
    %cst_116 = arith.constant 0.353553385 : f32
    %283 = vector.broadcast %cst_116 : f32 to vector<2x8x8xf32>
    %284 = arith.mulf %282, %283 : vector<2x8x8xf32>
    %285 = vector.broadcast %25 : vector<2x1x8xf32> to vector<2x8x8xf32>
    %286 = arith.addf %284, %285 : vector<2x8x8xf32>
    %cst_117 = arith.constant dense<0xFF800000> : vector<2x8xf32>
    %287 = vector.multi_reduction <maximumf>, %286, %cst_117 [2] : vector<2x8x8xf32> to vector<2x8xf32>
    %288 = vector.shape_cast %287 : vector<2x8xf32> to vector<2x8x1xf32>
    %289 = vector.broadcast %288 : vector<2x8x1xf32> to vector<2x8x8xf32>
    %290 = arith.subf %286, %289 : vector<2x8x8xf32>
    %291 = math.exp %290 : vector<2x8x8xf32>
    %cst_118 = arith.constant dense<0.000000e+00> : vector<2x8xf32>
    %292 = vector.multi_reduction <add>, %291, %cst_118 [2] : vector<2x8x8xf32> to vector<2x8xf32>
    %293 = vector.shape_cast %292 : vector<2x8xf32> to vector<2x8x1xf32>
    %294 = vector.broadcast %293 : vector<2x8x1xf32> to vector<2x8x8xf32>
    %295 = arith.divf %291, %294 : vector<2x8x8xf32>
    "tpu.trace_start"() <{level = 10 : i32, message = "bqk,bkd->bqd"}> : () -> ()
    %cst_119 = arith.constant dense<0.000000e+00> : vector<2x8x8xf32>
    %296 = tpu.matmul %295, %281, %cst_119 {dimension_numbers = #tpu.dot_dimension_numbers<[2], [1], [1], [2], [0, 0, 0, 1, 1, 2], [0], [0]>} : vector<2x8x8xf32>, vector<2x8x8xf32>, vector<2x8x8xf32> -> vector<2x8x8xf32>
    "tpu.trace_stop"() : () -> ()
    %297 = vector.shape_cast %296 : vector<2x8x8xf32> to vector<16x8xf32>
    %298 = vector.extract_strided_slice %229 {offsets = [16, 0], sizes = [8, 32], strides = [1, 1]} : vector<32x32xf32> to vector<8x32xf32>
    %cst_120 = arith.constant dense<0.000000e+00> : vector<16x32xf32>
    %299 = tpu.matmul %297, %298, %cst_120 {dimension_numbers = #tpu.dot_dimension_numbers<[1], [0], [0], [1], [0, 0, 1, 1], [], []>} : vector<16x8xf32>, vector<8x32xf32>, vector<16x32xf32> -> vector<16x32xf32>
    %300 = arith.addf %278, %299 : vector<16x32xf32>
    %301 = vector.extract_strided_slice %223 {offsets = [0, 0, 24], sizes = [2, 8, 8], strides = [1, 1, 1]} : vector<2x8x32xf32> to vector<2x8x8xf32>
    %302 = vector.extract_strided_slice %225 {offsets = [0, 0, 24], sizes = [2, 8, 8], strides = [1, 1, 1]} : vector<2x8x32xf32> to vector<2x8x8xf32>
    %303 = vector.extract_strided_slice %227 {offsets = [0, 0, 24], sizes = [2, 8, 8], strides = [1, 1, 1]} : vector<2x8x32xf32> to vector<2x8x8xf32>
    "tpu.trace_start"() <{level = 10 : i32, message = "bqd,bkd->bqk"}> : () -> ()
    %cst_121 = arith.constant dense<0.000000e+00> : vector<2x8x8xf32>
    %304 = tpu.matmul %301, %302, %cst_121 {dimension_numbers = #tpu.dot_dimension_numbers<[2], [2], [1], [1], [0, 0, 0, 1, 1, 1], [0], [0]>} : vector<2x8x8xf32>, vector<2x8x8xf32>, vector<2x8x8xf32> -> vector<2x8x8xf32>
    "tpu.trace_stop"() : () -> ()
    %cst_122 = arith.constant 0.353553385 : f32
    %305 = vector.broadcast %cst_122 : f32 to vector<2x8x8xf32>
    %306 = arith.mulf %304, %305 : vector<2x8x8xf32>
    %307 = vector.broadcast %25 : vector<2x1x8xf32> to vector<2x8x8xf32>
    %308 = arith.addf %306, %307 : vector<2x8x8xf32>
    %cst_123 = arith.constant dense<0xFF800000> : vector<2x8xf32>
    %309 = vector.multi_reduction <maximumf>, %308, %cst_123 [2] : vector<2x8x8xf32> to vector<2x8xf32>
    %310 = vector.shape_cast %309 : vector<2x8xf32> to vector<2x8x1xf32>
    %311 = vector.broadcast %310 : vector<2x8x1xf32> to vector<2x8x8xf32>
    %312 = arith.subf %308, %311 : vector<2x8x8xf32>
    %313 = math.exp %312 : vector<2x8x8xf32>
    %cst_124 = arith.constant dense<0.000000e+00> : vector<2x8xf32>
    %314 = vector.multi_reduction <add>, %313, %cst_124 [2] : vector<2x8x8xf32> to vector<2x8xf32>
    %315 = vector.shape_cast %314 : vector<2x8xf32> to vector<2x8x1xf32>
    %316 = vector.broadcast %315 : vector<2x8x1xf32> to vector<2x8x8xf32>
    %317 = arith.divf %313, %316 : vector<2x8x8xf32>
    "tpu.trace_start"() <{level = 10 : i32, message = "bqk,bkd->bqd"}> : () -> ()
    %cst_125 = arith.constant dense<0.000000e+00> : vector<2x8x8xf32>
    %318 = tpu.matmul %317, %303, %cst_125 {dimension_numbers = #tpu.dot_dimension_numbers<[2], [1], [1], [2], [0, 0, 0, 1, 1, 2], [0], [0]>} : vector<2x8x8xf32>, vector<2x8x8xf32>, vector<2x8x8xf32> -> vector<2x8x8xf32>
    "tpu.trace_stop"() : () -> ()
    %319 = vector.shape_cast %318 : vector<2x8x8xf32> to vector<16x8xf32>
    %320 = vector.extract_strided_slice %229 {offsets = [24, 0], sizes = [8, 32], strides = [1, 1]} : vector<32x32xf32> to vector<8x32xf32>
    %cst_126 = arith.constant dense<0.000000e+00> : vector<16x32xf32>
    %321 = tpu.matmul %319, %320, %cst_126 {dimension_numbers = #tpu.dot_dimension_numbers<[1], [0], [0], [1], [0, 0, 1, 1], [], []>} : vector<16x8xf32>, vector<8x32xf32>, vector<16x32xf32> -> vector<16x32xf32>
    %322 = arith.addf %300, %321 : vector<16x32xf32>
    %323 = arith.addf %322, %214 : vector<16x32xf32>
    %c1_127 = arith.constant 1 : index
    %c0_128 = arith.constant 0 : index
    %c0_129 = arith.constant 0 : index
    %324 = vector.load %arg8[%c1_127, %c0_128, %c0_129] : memref<2x1x32xf32, #tpu.memory_space<vmem>>, vector<1x1x32xf32>
    %325 = vector.shape_cast %324 : vector<1x1x32xf32> to vector<1x32xf32>
    %c1_130 = arith.constant 1 : index
    %c0_131 = arith.constant 0 : index
    %c0_132 = arith.constant 0 : index
    %326 = vector.load %arg9[%c1_130, %c0_131, %c0_132] : memref<2x1x32xf32, #tpu.memory_space<vmem>>, vector<1x1x32xf32>
    %327 = vector.shape_cast %326 : vector<1x1x32xf32> to vector<1x32xf32>
    %cst_133 = arith.constant dense<0.000000e+00> : vector<16xf32>
    %328 = vector.multi_reduction <add>, %323, %cst_133 [1] : vector<16x32xf32> to vector<16xf32>
    %329 = vector.shape_cast %328 : vector<16xf32> to vector<16x1xf32>
    %cst_134 = arith.constant 3.200000e+01 : f32
    %330 = vector.broadcast %cst_134 : f32 to vector<16x1xf32>
    %331 = arith.divf %329, %330 : vector<16x1xf32>
    %332 = vector.broadcast %331 : vector<16x1xf32> to vector<16x32xf32>
    %333 = arith.subf %323, %332 : vector<16x32xf32>
    %334 = arith.mulf %333, %333 : vector<16x32xf32>
    %cst_135 = arith.constant dense<0.000000e+00> : vector<16xf32>
    %335 = vector.multi_reduction <add>, %334, %cst_135 [1] : vector<16x32xf32> to vector<16xf32>
    %336 = vector.shape_cast %335 : vector<16xf32> to vector<16x1xf32>
    %cst_136 = arith.constant 3.200000e+01 : f32
    %337 = vector.broadcast %cst_136 : f32 to vector<16x1xf32>
    %338 = arith.divf %336, %337 : vector<16x1xf32>
    %339 = vector.broadcast %331 : vector<16x1xf32> to vector<16x32xf32>
    %340 = arith.subf %323, %339 : vector<16x32xf32>
    %cst_137 = arith.constant 9.99999996E-13 : f32
    %341 = vector.broadcast %cst_137 : f32 to vector<16x1xf32>
    %342 = arith.addf %338, %341 : vector<16x1xf32>
    %343 = math.rsqrt %342 : vector<16x1xf32>
    %344 = vector.broadcast %343 : vector<16x1xf32> to vector<16x32xf32>
    %345 = arith.mulf %340, %344 : vector<16x32xf32>
    %346 = vector.broadcast %325 : vector<1x32xf32> to vector<16x32xf32>
    %347 = arith.mulf %345, %346 : vector<16x32xf32>
    %348 = vector.broadcast %327 : vector<1x32xf32> to vector<16x32xf32>
    %349 = arith.addf %347, %348 : vector<16x32xf32>
    %c1_138 = arith.constant 1 : index
    %c0_139 = arith.constant 0 : index
    %c0_140 = arith.constant 0 : index
    %350 = vector.load %arg10[%c1_138, %c0_139, %c0_140] : memref<2x32x64xf32, #tpu.memory_space<vmem>>, vector<1x32x64xf32>
    %351 = vector.shape_cast %350 : vector<1x32x64xf32> to vector<32x64xf32>
    %cst_141 = arith.constant dense<0.000000e+00> : vector<16x64xf32>
    %352 = tpu.matmul %349, %351, %cst_141 {dimension_numbers = #tpu.dot_dimension_numbers<[1], [0], [0], [1], [0, 0, 1, 1], [], []>} : vector<16x32xf32>, vector<32x64xf32>, vector<16x64xf32> -> vector<16x64xf32>
    %c1_142 = arith.constant 1 : index
    %c0_143 = arith.constant 0 : index
    %c0_144 = arith.constant 0 : index
    %353 = vector.load %arg11[%c1_142, %c0_143, %c0_144] : memref<2x1x64xf32, #tpu.memory_space<vmem>>, vector<1x1x64xf32>
    %354 = vector.shape_cast %353 : vector<1x1x64xf32> to vector<1x64xf32>
    %355 = vector.broadcast %354 : vector<1x64xf32> to vector<16x64xf32>
    %356 = arith.addf %352, %355 : vector<16x64xf32>
    %cst_145 = arith.constant 5.000000e-01 : f32
    %357 = vector.broadcast %cst_145 : f32 to vector<16x64xf32>
    %358 = arith.mulf %357, %356 : vector<16x64xf32>
    %cst_146 = arith.constant 4.471500e-02 : f32
    %359 = vector.broadcast %cst_146 : f32 to vector<16x64xf32>
    %360 = arith.mulf %359, %356 : vector<16x64xf32>
    %361 = arith.mulf %360, %356 : vector<16x64xf32>
    %362 = arith.mulf %361, %356 : vector<16x64xf32>
    %363 = arith.addf %356, %362 : vector<16x64xf32>
    %cst_147 = arith.constant 0.797884583 : f32
    %364 = vector.broadcast %cst_147 : f32 to vector<16x64xf32>
    %365 = arith.mulf %364, %363 : vector<16x64xf32>
    %366 = math.tanh %365 : vector<16x64xf32>
    %cst_148 = arith.constant 1.000000e+00 : f32
    %367 = vector.broadcast %cst_148 : f32 to vector<16x64xf32>
    %368 = arith.addf %367, %366 : vector<16x64xf32>
    %369 = arith.mulf %358, %368 : vector<16x64xf32>
    %c1_149 = arith.constant 1 : index
    %c0_150 = arith.constant 0 : index
    %c0_151 = arith.constant 0 : index
    %370 = vector.load %arg12[%c1_149, %c0_150, %c0_151] : memref<2x64x32xf32, #tpu.memory_space<vmem>>, vector<1x64x32xf32>
    %371 = vector.shape_cast %370 : vector<1x64x32xf32> to vector<64x32xf32>
    %cst_152 = arith.constant dense<0.000000e+00> : vector<16x32xf32>
    %372 = tpu.matmul %369, %371, %cst_152 {dimension_numbers = #tpu.dot_dimension_numbers<[1], [0], [0], [1], [0, 0, 1, 1], [], []>} : vector<16x64xf32>, vector<64x32xf32>, vector<16x32xf32> -> vector<16x32xf32>
    %c1_153 = arith.constant 1 : index
    %c0_154 = arith.constant 0 : index
    %c0_155 = arith.constant 0 : index
    %373 = vector.load %arg13[%c1_153, %c0_154, %c0_155] : memref<2x1x32xf32, #tpu.memory_space<vmem>>, vector<1x1x32xf32>
    %374 = vector.shape_cast %373 : vector<1x1x32xf32> to vector<1x32xf32>
    %375 = vector.broadcast %374 : vector<1x32xf32> to vector<16x32xf32>
    %376 = arith.addf %372, %375 : vector<16x32xf32>
    %377 = arith.addf %376, %349 : vector<16x32xf32>
    %c1_156 = arith.constant 1 : index
    %c0_157 = arith.constant 0 : index
    %c0_158 = arith.constant 0 : index
    %378 = vector.load %arg14[%c1_156, %c0_157, %c0_158] : memref<2x1x32xf32, #tpu.memory_space<vmem>>, vector<1x1x32xf32>
    %379 = vector.shape_cast %378 : vector<1x1x32xf32> to vector<1x32xf32>
    %c1_159 = arith.constant 1 : index
    %c0_160 = arith.constant 0 : index
    %c0_161 = arith.constant 0 : index
    %380 = vector.load %arg15[%c1_159, %c0_160, %c0_161] : memref<2x1x32xf32, #tpu.memory_space<vmem>>, vector<1x1x32xf32>
    %381 = vector.shape_cast %380 : vector<1x1x32xf32> to vector<1x32xf32>
    %cst_162 = arith.constant dense<0.000000e+00> : vector<16xf32>
    %382 = vector.multi_reduction <add>, %377, %cst_162 [1] : vector<16x32xf32> to vector<16xf32>
    %383 = vector.shape_cast %382 : vector<16xf32> to vector<16x1xf32>
    %cst_163 = arith.constant 3.200000e+01 : f32
    %384 = vector.broadcast %cst_163 : f32 to vector<16x1xf32>
    %385 = arith.divf %383, %384 : vector<16x1xf32>
    %386 = vector.broadcast %385 : vector<16x1xf32> to vector<16x32xf32>
    %387 = arith.subf %377, %386 : vector<16x32xf32>
    %388 = arith.mulf %387, %387 : vector<16x32xf32>
    %cst_164 = arith.constant dense<0.000000e+00> : vector<16xf32>
    %389 = vector.multi_reduction <add>, %388, %cst_164 [1] : vector<16x32xf32> to vector<16xf32>
    %390 = vector.shape_cast %389 : vector<16xf32> to vector<16x1xf32>
    %cst_165 = arith.constant 3.200000e+01 : f32
    %391 = vector.broadcast %cst_165 : f32 to vector<16x1xf32>
    %392 = arith.divf %390, %391 : vector<16x1xf32>
    %393 = vector.broadcast %385 : vector<16x1xf32> to vector<16x32xf32>
    %394 = arith.subf %377, %393 : vector<16x32xf32>
    %cst_166 = arith.constant 9.99999996E-13 : f32
    %395 = vector.broadcast %cst_166 : f32 to vector<16x1xf32>
    %396 = arith.addf %392, %395 : vector<16x1xf32>
    %397 = math.rsqrt %396 : vector<16x1xf32>
    %398 = vector.broadcast %397 : vector<16x1xf32> to vector<16x32xf32>
    %399 = arith.mulf %394, %398 : vector<16x32xf32>
    %400 = vector.broadcast %379 : vector<1x32xf32> to vector<16x32xf32>
    %401 = arith.mulf %399, %400 : vector<16x32xf32>
    %402 = vector.broadcast %381 : vector<1x32xf32> to vector<16x32xf32>
    %403 = arith.addf %401, %402 : vector<16x32xf32>
    %c0_167 = arith.constant 0 : index
    %c0_168 = arith.constant 0 : index
    %404 = vector.load %arg18[%c0_167, %c0_168] : memref<16x32xf32, #tpu.memory_space<vmem>>, vector<16x32xf32>
    tpu.vector_store %arg18[%c0_167, %c0_168], %403 {strides = array<i32>} : memref<16x32xf32, #tpu.memory_space<vmem>>, vector<16x32xf32>,
    %405 = vector.shape_cast %403 : vector<16x32xf32> to vector<2x8x32xf32>
    %406 = vector.extract_strided_slice %405 {offsets = [0, 0, 0], sizes = [2, 1, 32], strides = [1, 1, 1]} : vector<2x8x32xf32> to vector<2x1x32xf32>
    %407 = vector.shape_cast %406 : vector<2x1x32xf32> to vector<2x32xf32>
    %c0_169 = arith.constant 0 : index
    %c0_170 = arith.constant 0 : index
    %408 = vector.load %arg16[%c0_169, %c0_170] : memref<32x32xf32, #tpu.memory_space<vmem>>, vector<32x32xf32>
    %cst_171 = arith.constant dense<0.000000e+00> : vector<2x32xf32>
    %409 = tpu.matmul %407, %408, %cst_171 {dimension_numbers = #tpu.dot_dimension_numbers<[1], [0], [0], [1], [0, 0, 1, 1], [], []>} : vector<2x32xf32>, vector<32x32xf32>, vector<2x32xf32> -> vector<2x32xf32>
    %c0_172 = arith.constant 0 : index
    %c0_173 = arith.constant 0 : index
    %410 = vector.load %arg17[%c0_172, %c0_173] : memref<1x32xf32, #tpu.memory_space<vmem>>, vector<1x32xf32>
    %411 = vector.broadcast %410 : vector<1x32xf32> to vector<2x32xf32>
    %412 = arith.addf %409, %411 : vector<2x32xf32>
    %413 = math.tanh %412 : vector<2x32xf32>
    %c0_174 = arith.constant 0 : index
    %c0_175 = arith.constant 0 : index
    %414 = vector.load %arg19[%c0_174, %c0_175] : memref<2x32xf32, #tpu.memory_space<vmem>>, vector<2x32xf32>
    tpu.vector_store %arg19[%c0_174, %c0_175], %413 {strides = array<i32>} : memref<2x32xf32, #tpu.memory_space<vmem>>, vector<2x32xf32>,
    return
  }
}

</mosaic_0001>

<llo_original>
// kernel: encoder_forward.1
$region0: #{encoder_forward.1}
  #allocation0 [shape = 'u32[]', space=smem, size = 0x4, offset = 0x4, fixed_abs, tag = 'smem constant byte address 0x4 - core index']
  #allocation1 [shape = 'u32[144,128]{1,0:T(1,128)}', space=vmem, size = 0x12000, scoped, tag = 'internal scratch']
  %s0 = inlined_call_operand.vmem [shape: f32[16,32], index: 0, kind: input, shape index: {}]
  %s1 = inlined_call_operand.vmem [shape: f32[2,1,8], index: 1, kind: input, shape index: {}]
  %s2 = inlined_call_operand.vmem [shape: f32[1,32], index: 2, kind: input, shape index: {}]
  %s3 = inlined_call_operand.vmem [shape: f32[1,32], index: 3, kind: input, shape index: {}]
  %s4 = inlined_call_operand.vmem [shape: f32[2,32,96], index: 4, kind: input, shape index: {}]
  %s5 = inlined_call_operand.vmem [shape: f32[2,1,96], index: 5, kind: input, shape index: {}]
  %s6 = inlined_call_operand.vmem [shape: f32[2,32,32], index: 6, kind: input, shape index: {}]
  %s7 = inlined_call_operand.vmem [shape: f32[2,1,32], index: 7, kind: input, shape index: {}]
  %s8 = inlined_call_operand.vmem [shape: f32[2,1,32], index: 8, kind: input, shape index: {}]
  %s9 = inlined_call_operand.vmem [shape: f32[2,1,32], index: 9, kind: input, shape index: {}]
  %s10 = inlined_call_operand.vmem [shape: f32[2,32,64], index: 10, kind: input, shape index: {}]
  %s11 = inlined_call_operand.vmem [shape: f32[2,1,64], index: 11, kind: input, shape index: {}]
  %s12 = inlined_call_operand.vmem [shape: f32[2,64,32], index: 12, kind: input, shape index: {}]
  %s13 = inlined_call_operand.vmem [shape: f32[2,1,32], index: 13, kind: input, shape index: {}]
  %s14 = inlined_call_operand.vmem [shape: f32[2,1,32], index: 14, kind: input, shape index: {}]
  %s15 = inlined_call_operand.vmem [shape: f32[2,1,32], index: 15, kind: input, shape index: {}]
  %s16 = inlined_call_operand.vmem [shape: f32[32,32], index: 16, kind: input, shape index: {}]
  %s17 = inlined_call_operand.vmem [shape: f32[1,32], index: 17, kind: input, shape index: {}]
  %s18 = inlined_call_operand.hbm [shape: f32[16,32], index: 18, kind: output, shape index: {0}]
  %s19 = inlined_call_operand.hbm [shape: f32[2,32], index: 19, kind: output, shape index: {1}]
  %20 = xla_tuple %s18, %s19
  %s21 = sld [smem:[#allocation0]]
  $region90: #{encoder_forward.1} parent=0
    _
  %s23 = ssub.s32 1, %s21
  %s24 = scalar_select 0, %s23, %s21
  $region1: #{encoder_forward.1} parent=0
    #allocation2 [shape = 'u8[8192]{0}', space=vmem, size = 0x2000, scoped, tag = 'output window, operand 0, single buffered']
    #allocation3 [shape = 's32[1]{0}', space=sflag, size = 0x4, scoped, tag = 'scoped memory for encoder_forward.1']
    #allocation4 [shape = 'u8[1024]{0}', space=vmem, size = 0x400, scoped, tag = 'output window, operand 1, single buffered']
    #allocation5 [shape = 's32[1]{0}', space=sflag, size = 0x4, scoped, tag = 'scoped memory for encoder_forward.1']
    %25 = vsyncpa [#allocation3], 0
    %26 = vsyncpa [#allocation5], 0
    // Predicated region
    $region2: #{encoder_forward.1} parent=1 // pred_check
      _
    $region3: #{encoder_forward.1} parent=1 // pred_check_branch
      %28 = sbr.rel (0) target = $region5
    $region4: #{encoder_forward.1} parent=1 // pred_region
      _
    $region5: #{encoder_forward.1} parent=1 // pred_fallthru
      _
    // Predicated region
    $region6: #{encoder_forward.1} parent=1 // pred_check
      _
    $region7: #{encoder_forward.1} parent=1 // pred_check_branch
      %30 = sbr.rel (0) target = $region9
    $region8: #{encoder_forward.1} parent=1 // pred_region
      _
    $region9: #{encoder_forward.1} parent=1 // pred_fallthru
      _
    // Predicated region
    $region10: #{encoder_forward.1} parent=1 // pred_check
      _
    $region11: #{encoder_forward.1} parent=1 // pred_check_branch
      %32 = sbr.rel (0) target = $region13
    $region12: #{encoder_forward.1} parent=1 // pred_region
      _
    $region13: #{encoder_forward.1} parent=1 // pred_fallthru
      _
    // Predicated region
    $region14: #{encoder_forward.1} parent=1 // pred_check
      _
    $region15: #{encoder_forward.1} parent=1 // pred_check_branch
      %34 = sbr.rel (0) target = $region17
    $region16: #{encoder_forward.1} parent=1 // pred_region
      _
    $region17: #{encoder_forward.1} parent=1 // pred_fallthru
      _
    // Predicated region
    $region18: #{encoder_forward.1} parent=1 // pred_check
      _
    $region19: #{encoder_forward.1} parent=1 // pred_check_branch
      %36 = sbr.rel (0) target = $region21
    $region20: #{encoder_forward.1} parent=1 // pred_region
      _
    $region21: #{encoder_forward.1} parent=1 // pred_fallthru
      _
    // Predicated region
    $region22: #{encoder_forward.1} parent=1 // pred_check
      _
    $region23: #{encoder_forward.1} parent=1 // pred_check_branch
      %38 = sbr.rel (0) target = $region25
    $region24: #{encoder_forward.1} parent=1 // pred_region
      _
    $region25: #{encoder_forward.1} parent=1 // pred_fallthru
      _
    // Predicated region
    $region26: #{encoder_forward.1} parent=1 // pred_check
      _
    $region27: #{encoder_forward.1} parent=1 // pred_check_branch
      %40 = sbr.rel (0) target = $region29
    $region28: #{encoder_forward.1} parent=1 // pred_region
      _
    $region29: #{encoder_forward.1} parent=1 // pred_fallthru
      _
    // Predicated region
    $region30: #{encoder_forward.1} parent=1 // pred_check
      _
    $region31: #{encoder_forward.1} parent=1 // pred_check_branch
      %42 = sbr.rel (0) target = $region33
    $region32: #{encoder_forward.1} parent=1 // pred_region
      _
    $region33: #{encoder_forward.1} parent=1 // pred_fallthru
      _
    // Predicated region
    $region34: #{encoder_forward.1} parent=1 // pred_check
      _
    $region35: #{encoder_forward.1} parent=1 // pred_check_branch
      %44 = sbr.rel (0) target = $region37
    $region36: #{encoder_forward.1} parent=1 // pred_region
      _
    $region37: #{encoder_forward.1} parent=1 // pred_fallthru
      _
    // Predicated region
    $region38: #{encoder_forward.1} parent=1 // pred_check
      _
    $region39: #{encoder_forward.1} parent=1 // pred_check_branch
      %46 = sbr.rel (0) target = $region41
    $region40: #{encoder_forward.1} parent=1 // pred_region
      _
    $region41: #{encoder_forward.1} parent=1 // pred_fallthru
      _
    // Predicated region
    $region42: #{encoder_forward.1} parent=1 // pred_check
      _
    $region43: #{encoder_forward.1} parent=1 // pred_check_branch
      %48 = sbr.rel (0) target = $region45
    $region44: #{encoder_forward.1} parent=1 // pred_region
      _
    $region45: #{encoder_forward.1} parent=1 // pred_fallthru
      _
    // Predicated region
    $region46: #{encoder_forward.1} parent=1 // pred_check
      _
    $region47: #{encoder_forward.1} parent=1 // pred_check_branch
      %50 = sbr.rel (0) target = $region49
    $region48: #{encoder_forward.1} parent=1 // pred_region
      _
    $region49: #{encoder_forward.1} parent=1 // pred_fallthru
      _
    // Predicated region
    $region50: #{encoder_forward.1} parent=1 // pred_check
      _
    $region51: #{encoder_forward.1} parent=1 // pred_check_branch
      %52 = sbr.rel (0) target = $region53
    $region52: #{encoder_forward.1} parent=1 // pred_region
      _
    $region53: #{encoder_forward.1} parent=1 // pred_fallthru
      _
    // Predicated region
    $region54: #{encoder_forward.1} parent=1 // pred_check
      _
    $region55: #{encoder_forward.1} parent=1 // pred_check_branch
      %54 = sbr.rel (0) target = $region57
    $region56: #{encoder_forward.1} parent=1 // pred_region
      _
    $region57: #{encoder_forward.1} parent=1 // pred_fallthru
      _
    // Predicated region
    $region58: #{encoder_forward.1} parent=1 // pred_check
      _
    $region59: #{encoder_forward.1} parent=1 // pred_check_branch
      %56 = sbr.rel (0) target = $region61
    $region60: #{encoder_forward.1} parent=1 // pred_region
      _
    $region61: #{encoder_forward.1} parent=1 // pred_fallthru
      _
    // Predicated region
    $region62: #{encoder_forward.1} parent=1 // pred_check
      _
    $region63: #{encoder_forward.1} parent=1 // pred_check_branch
      %58 = sbr.rel (0) target = $region65
    $region64: #{encoder_forward.1} parent=1 // pred_region
      _
    $region65: #{encoder_forward.1} parent=1 // pred_fallthru
      _
    // Predicated region
    $region66: #{encoder_forward.1} parent=1 // pred_check
      _
    $region67: #{encoder_forward.1} parent=1 // pred_check_branch
      %60 = sbr.rel (0) target = $region69
    $region68: #{encoder_forward.1} parent=1 // pred_region
      _
    $region69: #{encoder_forward.1} parent=1 // pred_fallthru
      _
    // Predicated region
    $region70: #{encoder_forward.1} parent=1 // pred_check
      _
    $region71: #{encoder_forward.1} parent=1 // pred_check_branch
      %62 = sbr.rel (0) target = $region73
    $region72: #{encoder_forward.1} parent=1 // pred_region
      _
    $region73: #{encoder_forward.1} parent=1 // pred_fallthru
      _
    %v63 = vld [vmem:[%s0] sm:$0xff]
    %v64 = vld [vmem:[%s0 + $0x8] sm:$0xff]
    %v65 = vld [vmem:[%s2] sm:$0x1]
    %v66 = vld [vmem:[%s3] sm:$0x1]
    %vm67 = vcmask 261120
    %v68 = vsel %vm67, %v63, 0.0
    %69 = vadd.xlane.f32.xlu0 %v68
    %v70 = vpop.xlane.xlu0 %69
    %v71 = vsel %vm67, %v64, 0.0
    %72 = vadd.xlane.f32.xlu0 %v71
    %v73 = vpop.xlane.xlu0 %72
    %v74 = vrcp.pop 32.0
    %v75 = vmul.f32 %v70, %v74
    %v76 = vmul.f32 %v73, %v74
    %v77 = vsub.f32 %v63, %v75
    %v78 = vsub.f32 %v64, %v76
    %v79 = vmul.f32 %v77, %v77
    %v80 = vmul.f32 %v78, %v78
    %v81 = vsel %vm67, %v79, 0.0
    %82 = vadd.xlane.f32.xlu0 %v81
    %v83 = vpop.xlane.xlu0 %82
    %v84 = vsel %vm67, %v80, 0.0
    %85 = vadd.xlane.f32.xlu0 %v84
    %v86 = vpop.xlane.xlu0 %85
    %v87 = vmul.f32 %v83, %v74
    %v88 = vmul.f32 %v86, %v74
    %v89 = vadd.f32 %v87, 1e-12
    %v90 = vadd.f32 %v88, 1e-12
    %v91 = vrsqrt.pop %v89
    %v92 = vrsqrt.pop %v90
    %v93 = vmul.f32 %v77, %v91
    %v94 = vmul.f32 %v78, %v92
    %v96 = vlaneseq
    %v97 = vshrl.u32 %v96, 7
    %v98 = vsub.s32 0, %v97
    %v99 = vrot.slane %v65, %v98
    %v101 = vmul.f32 %v93, %v99
    %v102 = vmul.f32 %v94, %v99
    %v104 = vlaneseq
    %v105 = vshrl.u32 %v104, 7
    %v106 = vsub.s32 0, %v105
    %v107 = vrot.slane %v66, %v106
    %v109 = vadd.f32 %v101, %v107
    %v110 = vadd.f32 %v102, %v107
    %v111 = vld [vmem:[%s1] sm:$0x1]
    %v112 = vld [vmem:[%s1 + $0x1] sm:$0x1]
    %v113 = vld [vmem:[%s4] sm:$0xff]
    %v114 = vld [vmem:[%s4 + $0x8] sm:$0xff]
    %v115 = vld [vmem:[%s4 + $0x10] sm:$0xff]
    %v116 = vld [vmem:[%s4 + $0x18] sm:$0xff]
    %v117 = vld [vmem:[%s5] sm:$0x1]
    %v119 = vlaneseq
    %v120 = vshrl.u32 %v119, 7
    %v121 = vsub.s32 0, %v120
    %v122 = vrot.slane %v117, %v121
    %v125 = vsel %vm67, %v109, 0
    %v128 = vsel %vm67, %v110, 0
    %130 = vmatprep.subr.mxu0 0.0
    %131 = vmatpush1.msra.mxu0 %v113
    %132 = vmatprep.subr.mxu0 0.0
    %133 = vmatpush1.msra.mxu0 %v114
    %134 = vmatprep.subr.mxu0 0.0
    %135 = vmatpush1.msra.mxu0 %v115
    %136 = vmatprep.subr.mxu0 0.0
    %137 = vmatpush1.msra.mxu0 %v116
    %138 = vmatprep.subr.mxu0 0.0
    %139 = vmatpush1.msra.mxu0 0.0
    %140 = vmatprep.subr.mxu0 0.0
    %141 = vmatpush1.msra.mxu0 0.0
    %142 = vmatprep.subr.mxu0 0.0
    %143 = vmatpush1.msra.mxu0 0.0
    %144 = vmatprep.subr.mxu0 0.0
    %145 = vmatpush1.msra.mxu0 0.0
    %146 = vmatprep.subr.mxu0 0.0
    %147 = vmatpush1.msra.mxu0 0.0
    %148 = vmatprep.subr.mxu0 0.0
    %149 = vmatpush1.msra.mxu0 0.0
    %150 = vmatprep.subr.mxu0 0.0
    %151 = vmatpush1.msra.mxu0 0.0
    %152 = vmatprep.subr.mxu0 0.0
    %153 = vmatpush1.msra.mxu0 0.0
    %154 = vmatprep.subr.mxu0 0.0
    %155 = vmatpush1.msra.mxu0 0.0
    %156 = vmatprep.subr.mxu0 0.0
    %157 = vmatpush1.msra.mxu0 0.0
    %158 = vmatprep.subr.mxu0 0.0
    %159 = vmatpush1.msra.mxu0 0.0
    %160 = vmatprep.subr.mxu0 0.0
    %161 = vmatpush1.msra.mxu0 0.0
    %162 = vmatprep.subr.mxu0 0.0
    %163 = vmatpush1.msra.mxu0 0.0
    %164 = vmatprep.subr.mxu0 0.0
    %165 = vmatpush1.msra.mxu0 0.0
    %166 = vmatprep.subr.mxu0 0.0
    %167 = vmatpush1.msra.mxu0 0.0
    %168 = vmatprep.subr.mxu0 0.0
    %169 = vmatpush1.msra.mxu0 0.0
    %170 = vmatprep.subr.mxu0 0.0
    %171 = vmatpush1.msra.mxu0 0.0
    %172 = vmatprep.subr.mxu0 0.0
    %173 = vmatpush1.msra.mxu0 0.0
    %174 = vmatprep.subr.mxu0 0.0
    %175 = vmatpush1.msra.mxu0 0.0
    %176 = vmatprep.subr.mxu0 0.0
    %177 = vmatpush1.msra.mxu0 0.0
    %178 = vmatprep.subr.mxu0 0.0
    %179 = vmatpush1.msra.mxu0 0.0
    %180 = vmatprep.subr.mxu0 0.0
    %181 = vmatpush1.msra.mxu0 0.0
    %182 = vmatprep.subr.mxu0 0.0
    %183 = vmatpush1.msra.mxu0 0.0
    %184 = vmatprep.subr.mxu0 0.0
    %185 = vmatpush1.msra.mxu0 0.0
    %186 = vmatprep.subr.mxu0 0.0
    %187 = vmatpush1.msra.mxu0 0.0
    %188 = vmatprep.subr.mxu0 0.0
    %189 = vmatpush1.msra.mxu0 0.0
    %190 = vmatprep.subr.mxu0 0.0
    %191 = vmatpush1.msra.mxu0 0.0
    %192 = vmatprep.subr.mxu0 0.0
    %193 = vmatpush1.msra.mxu0 0.0
    %194 = vmatprep.mubr.f32.mxu0 0.0
    %195 = vmatmul.mubr.f32.gmra.mrb[0].mxu0 %v125
    %v196 = vpop.f32.mrb[0].mxu0
    %v197 = vadd.f32 %v122, %v196
    %v198 = vpop.f32.mrb[0].mxu0
    %199 = vmatprep.mubr.f32.mxu0 0.0
    %200 = vmatmul.mubr.f32.gmra.mrb[0].mxu0 %v128
    %v201 = vpop.f32.mrb[0].mxu0
    %v202 = vadd.f32 %v122, %v201
    %v203 = vpop.f32.mrb[0].mxu0
    %204 = vdwg.mxu0
    %v205 = vld [vmem:[%s6] sm:$0xff]
    %v206 = vld [vmem:[%s6 + $0x8] sm:$0xff]
    %v207 = vld [vmem:[%s6 + $0x10] sm:$0xff]
    %v208 = vld [vmem:[%s6 + $0x18] sm:$0xff]
    %v209 = vld [vmem:[%s7] sm:$0x1]
    %v211 = vlaneseq
    %v212 = vshrl.u32 %v211, 7
    %v213 = vsub.s32 0, %v212
    %v214 = vrot.slane %v209, %v213
    %v216 = vadd.f32 %v214, 0.0
    %218 = vrot.lane.b32.xlu0 %v197, 96
    %v219 = vpop.permute.xlu0 %218
    %vm220 = vcmask 64512
    %v221 = vsel %vm220, %v197, 0
    %v223 = vsel %vm220, %v219, 0
    %225 = vmatprep.subr.mxu0 0.0
    %226 = vmatpush1.xpose.msra.mxu0 %v223
    %227 = vmatprep.subr.mxu0 0.0
    %228 = vmatpush1.xpose.msra.mxu0 0.0
    %229 = vmatprep.subr.mxu0 0.0
    %230 = vmatpush1.xpose.msra.mxu0 0.0
    %231 = vmatprep.subr.mxu0 0.0
    %232 = vmatpush1.xpose.msra.mxu0 0.0
    %233 = vmatprep.subr.mxu0 0.0
    %234 = vmatpush1.xpose.msra.mxu0 0.0
    %235 = vmatprep.subr.mxu0 0.0
    %236 = vmatpush1.xpose.msra.mxu0 0.0
    %237 = vmatprep.subr.mxu0 0.0
    %238 = vmatpush1.xpose.msra.mxu0 0.0
    %239 = vmatprep.subr.mxu0 0.0
    %240 = vmatpush1.xpose.msra.mxu0 0.0
    %241 = vmatprep.subr.mxu0 0.0
    %242 = vmatpush1.xpose.msra.mxu0 0.0
    %243 = vmatprep.subr.mxu0 0.0
    %244 = vmatpush1.xpose.msra.mxu0 0.0
    %245 = vmatprep.subr.mxu0 0.0
    %246 = vmatpush1.xpose.msra.mxu0 0.0
    %247 = vmatprep.subr.mxu0 0.0
    %248 = vmatpush1.xpose.msra.mxu0 0.0
    %249 = vmatprep.subr.mxu0 0.0
    %250 = vmatpush1.xpose.msra.mxu0 0.0
    %251 = vmatprep.subr.mxu0 0.0
    %252 = vmatpush1.xpose.msra.mxu0 0.0
    %253 = vmatprep.subr.mxu0 0.0
    %254 = vmatpush1.xpose.msra.mxu0 0.0
    %255 = vmatprep.subr.mxu0 0.0
    %256 = vmatpush1.xpose.msra.mxu0 0.0
    %257 = vmatprep.subr.mxu0 0.0
    %258 = vmatpush1.xpose.msra.mxu0 0.0
    %259 = vmatprep.subr.mxu0 0.0
    %260 = vmatpush1.xpose.msra.mxu0 0.0
    %261 = vmatprep.subr.mxu0 0.0
    %262 = vmatpush1.xpose.msra.mxu0 0.0
    %263 = vmatprep.subr.mxu0 0.0
    %264 = vmatpush1.xpose.msra.mxu0 0.0
    %265 = vmatprep.subr.mxu0 0.0
    %266 = vmatpush1.xpose.msra.mxu0 0.0
    %267 = vmatprep.subr.mxu0 0.0
    %268 = vmatpush1.xpose.msra.mxu0 0.0
    %269 = vmatprep.subr.mxu0 0.0
    %270 = vmatpush1.xpose.msra.mxu0 0.0
    %271 = vmatprep.subr.mxu0 0.0
    %272 = vmatpush1.xpose.msra.mxu0 0.0
    %273 = vmatprep.subr.mxu0 0.0
    %274 = vmatpush1.xpose.msra.mxu0 0.0
    %275 = vmatprep.subr.mxu0 0.0
    %276 = vmatpush1.xpose.msra.mxu0 0.0
    %277 = vmatprep.subr.mxu0 0.0
    %278 = vmatpush1.xpose.msra.mxu0 0.0
    %279 = vmatprep.subr.mxu0 0.0
    %280 = vmatpush1.xpose.msra.mxu0 0.0
    %281 = vmatprep.subr.mxu0 0.0
    %282 = vmatpush1.xpose.msra.mxu0 0.0
    %283 = vmatprep.subr.mxu0 0.0
    %284 = vmatpush1.xpose.msra.mxu0 0.0
    %285 = vmatprep.subr.mxu0 0.0
    %286 = vmatpush1.xpose.msra.mxu0 0.0
    %287 = vmatprep.subr.mxu0 0.0
    %288 = vmatpush1.xpose.msra.mxu0 0.0
    %289 = vmatprep.mubr.f32.mxu0 0.0
    %290 = vmatmul.mubr.f32.gmra.mrb[0].mxu0 %v221
    %v291 = vpop.f32.mrb[0].mxu0
    %v292 = vadd.f32 0.0, %v291
    %v293 = vpop.f32.mrb[0].mxu0
    %294 = vdwg.mxu0
    %296 = vrot.lane.b32.xlu0 %v202, 96
    %v297 = vpop.permute.xlu0 %296
    %v298 = vsel %vm220, %v202, 0
    %v300 = vsel %vm220, %v297, 0
    %302 = vmatprep.subr.mxu0 0.0
    %303 = vmatpush1.xpose.msra.mxu0 %v300
    %304 = vmatprep.subr.mxu0 0.0
    %305 = vmatpush1.xpose.msra.mxu0 0.0
    %306 = vmatprep.subr.mxu0 0.0
    %307 = vmatpush1.xpose.msra.mxu0 0.0
    %308 = vmatprep.subr.mxu0 0.0
    %309 = vmatpush1.xpose.msra.mxu0 0.0
    %310 = vmatprep.subr.mxu0 0.0
    %311 = vmatpush1.xpose.msra.mxu0 0.0
    %312 = vmatprep.subr.mxu0 0.0
    %313 = vmatpush1.xpose.msra.mxu0 0.0
    %314 = vmatprep.subr.mxu0 0.0
    %315 = vmatpush1.xpose.msra.mxu0 0.0
    %316 = vmatprep.subr.mxu0 0.0
    %317 = vmatpush1.xpose.msra.mxu0 0.0
    %318 = vmatprep.subr.mxu0 0.0
    %319 = vmatpush1.xpose.msra.mxu0 0.0
    %320 = vmatprep.subr.mxu0 0.0
    %321 = vmatpush1.xpose.msra.mxu0 0.0
    %322 = vmatprep.subr.mxu0 0.0
    %323 = vmatpush1.xpose.msra.mxu0 0.0
    %324 = vmatprep.subr.mxu0 0.0
    %325 = vmatpush1.xpose.msra.mxu0 0.0
    %326 = vmatprep.subr.mxu0 0.0
    %327 = vmatpush1.xpose.msra.mxu0 0.0
    %328 = vmatprep.subr.mxu0 0.0
    %329 = vmatpush1.xpose.msra.mxu0 0.0
    %330 = vmatprep.subr.mxu0 0.0
    %331 = vmatpush1.xpose.msra.mxu0 0.0
    %332 = vmatprep.subr.mxu0 0.0
    %333 = vmatpush1.xpose.msra.mxu0 0.0
    %334 = vmatprep.subr.mxu0 0.0
    %335 = vmatpush1.xpose.msra.mxu0 0.0
    %336 = vmatprep.subr.mxu0 0.0
    %337 = vmatpush1.xpose.msra.mxu0 0.0
    %338 = vmatprep.subr.mxu0 0.0
    %339 = vmatpush1.xpose.msra.mxu0 0.0
    %340 = vmatprep.subr.mxu0 0.0
    %341 = vmatpush1.xpose.msra.mxu0 0.0
    %342 = vmatprep.subr.mxu0 0.0
    %343 = vmatpush1.xpose.msra.mxu0 0.0
    %344 = vmatprep.subr.mxu0 0.0
    %345 = vmatpush1.xpose.msra.mxu0 0.0
    %346 = vmatprep.subr.mxu0 0.0
    %347 = vmatpush1.xpose.msra.mxu0 0.0
    %348 = vmatprep.subr.mxu0 0.0
    %349 = vmatpush1.xpose.msra.mxu0 0.0
    %350 = vmatprep.subr.mxu0 0.0
    %351 = vmatpush1.xpose.msra.mxu0 0.0
    %352 = vmatprep.subr.mxu0 0.0
    %353 = vmatpush1.xpose.msra.mxu0 0.0
    %354 = vmatprep.subr.mxu0 0.0
    %355 = vmatpush1.xpose.msra.mxu0 0.0
    %356 = vmatprep.subr.mxu0 0.0
    %357 = vmatpush1.xpose.msra.mxu0 0.0
    %358 = vmatprep.subr.mxu0 0.0
    %359 = vmatpush1.xpose.msra.mxu0 0.0
    %360 = vmatprep.subr.mxu0 0.0
    %361 = vmatpush1.xpose.msra.mxu0 0.0
    %362 = vmatprep.subr.mxu0 0.0
    %363 = vmatpush1.xpose.msra.mxu0 0.0
    %364 = vmatprep.subr.mxu0 0.0
    %365 = vmatpush1.xpose.msra.mxu0 0.0
    %366 = vmatprep.mubr.f32.mxu0 0.0
    %367 = vmatmul.mubr.f32.gmra.mrb[0].mxu0 %v298
    %v368 = vpop.f32.mrb[0].mxu0
    %v369 = vadd.f32 0.0, %v368
    %v370 = vpop.f32.mrb[0].mxu0
    %371 = vdwg.mxu0
    %v372 = vmul.f32 %v292, 0.35355338
    %v373 = vmul.f32 %v369, 0.35355338
    %v376 = vlaneseq
    %v377 = vshrl.u32 %v376, 7
    %v378 = vsub.s32 0, %v377
    %v379 = vrot.slane %v111, %v378
    %v380 = vlaneseq
    %v381 = vshrl.u32 %v380, 7
    %v382 = vsub.s32 0, %v381
    %v383 = vrot.slane %v112, %v382
    %v386 = vadd.f32 %v372, %v379
    %v387 = vadd.f32 %v373, %v383
    %v388 = vsel %vm220, %v386, -inf
    %389 = vmax.xlane.f32.xlu0 %v388
    %v390 = vpop.xlane.xlu0 %389
    %v391 = vsel %vm220, %v387, -inf
    %392 = vmax.xlane.f32.xlu0 %v391
    %v393 = vpop.xlane.xlu0 %392
    %v394 = vsub.f32 %v386, %v390
    %v395 = vsub.f32 %v387, %v393
    %v396 = vmul.f32 %v394, 1.442695
    %v397 = vpow.pop %v396
    %v398 = vmul.f32 %v395, 1.442695
    %v399 = vpow.pop %v398
    %v400 = vsel %vm220, %v397, 0.0
    %401 = vadd.xlane.f32.xlu0 %v400
    %v402 = vpop.xlane.xlu0 %401
    %v403 = vsel %vm220, %v399, 0.0
    %404 = vadd.xlane.f32.xlu0 %v403
    %v405 = vpop.xlane.xlu0 %404
    %v406 = vrcp.pop %v402
    %v407 = vmul.f32 %v397, %v406
    %v408 = vrcp.pop %v405
    %v409 = vmul.f32 %v399, %v408
    %410 = vrot.lane.b32.xlu0 %v197, 64
    %v411 = vpop.permute.xlu0 %410
    %v414 = vsel %vm220, %v407, 0
    %416 = vmatprep.subr.mxu0 0.0
    %417 = vmatpush1.msra.mxu0 %v411
    %418 = vmatprep.subr.mxu0 0.0
    %419 = vmatpush1.msra.mxu0 0.0
    %420 = vmatprep.subr.mxu0 0.0
    %421 = vmatpush1.msra.mxu0 0.0
    %422 = vmatprep.subr.mxu0 0.0
    %423 = vmatpush1.msra.mxu0 0.0
    %424 = vmatprep.subr.mxu0 0.0
    %425 = vmatpush1.msra.mxu0 0.0
    %426 = vmatprep.subr.mxu0 0.0
    %427 = vmatpush1.msra.mxu0 0.0
    %428 = vmatprep.subr.mxu0 0.0
    %429 = vmatpush1.msra.mxu0 0.0
    %430 = vmatprep.subr.mxu0 0.0
    %431 = vmatpush1.msra.mxu0 0.0
    %432 = vmatprep.subr.mxu0 0.0
    %433 = vmatpush1.msra.mxu0 0.0
    %434 = vmatprep.subr.mxu0 0.0
    %435 = vmatpush1.msra.mxu0 0.0
    %436 = vmatprep.subr.mxu0 0.0
    %437 = vmatpush1.msra.mxu0 0.0
    %438 = vmatprep.subr.mxu0 0.0
    %439 = vmatpush1.msra.mxu0 0.0
    %440 = vmatprep.subr.mxu0 0.0
    %441 = vmatpush1.msra.mxu0 0.0
    %442 = vmatprep.subr.mxu0 0.0
    %443 = vmatpush1.msra.mxu0 0.0
    %444 = vmatprep.subr.mxu0 0.0
    %445 = vmatpush1.msra.mxu0 0.0
    %446 = vmatprep.subr.mxu0 0.0
    %447 = vmatpush1.msra.mxu0 0.0
    %448 = vmatprep.subr.mxu0 0.0
    %449 = vmatpush1.msra.mxu0 0.0
    %450 = vmatprep.subr.mxu0 0.0
    %451 = vmatpush1.msra.mxu0 0.0
    %452 = vmatprep.subr.mxu0 0.0
    %453 = vmatpush1.msra.mxu0 0.0
    %454 = vmatprep.subr.mxu0 0.0
    %455 = vmatpush1.msra.mxu0 0.0
    %456 = vmatprep.subr.mxu0 0.0
    %457 = vmatpush1.msra.mxu0 0.0
    %458 = vmatprep.subr.mxu0 0.0
    %459 = vmatpush1.msra.mxu0 0.0
    %460 = vmatprep.subr.mxu0 0.0
    %461 = vmatpush1.msra.mxu0 0.0
    %462 = vmatprep.subr.mxu0 0.0
    %463 = vmatpush1.msra.mxu0 0.0
    %464 = vmatprep.subr.mxu0 0.0
    %465 = vmatpush1.msra.mxu0 0.0
    %466 = vmatprep.subr.mxu0 0.0
    %467 = vmatpush1.msra.mxu0 0.0
    %468 = vmatprep.subr.mxu0 0.0
    %469 = vmatpush1.msra.mxu0 0.0
    %470 = vmatprep.subr.mxu0 0.0
    %471 = vmatpush1.msra.mxu0 0.0
    %472 = vmatprep.subr.mxu0 0.0
    %473 = vmatpush1.msra.mxu0 0.0
    %474 = vmatprep.subr.mxu0 0.0
    %475 = vmatpush1.msra.mxu0 0.0
    %476 = vmatprep.subr.mxu0 0.0
    %477 = vmatpush1.msra.mxu0 0.0
    %478 = vmatprep.subr.mxu0 0.0
    %479 = vmatpush1.msra.mxu0 0.0
    %480 = vmatprep.mubr.f32.mxu0 0.0
    %481 = vmatmul.mubr.f32.gmra.mrb[0].mxu0 %v414
    %v482 = vpop.f32.mrb[0].mxu0
    %v483 = vadd.f32 0.0, %v482
    %v484 = vpop.f32.mrb[0].mxu0
    %485 = vdwg.mxu0
    %486 = vrot.lane.b32.xlu0 %v202, 64
    %v487 = vpop.permute.xlu0 %486
    %v490 = vsel %vm220, %v409, 0
    %492 = vmatprep.subr.mxu0 0.0
    %493 = vmatpush1.msra.mxu0 %v487
    %494 = vmatprep.subr.mxu0 0.0
    %495 = vmatpush1.msra.mxu0 0.0
    %496 = vmatprep.subr.mxu0 0.0
    %497 = vmatpush1.msra.mxu0 0.0
    %498 = vmatprep.subr.mxu0 0.0
    %499 = vmatpush1.msra.mxu0 0.0
    %500 = vmatprep.subr.mxu0 0.0
    %501 = vmatpush1.msra.mxu0 0.0
    %502 = vmatprep.subr.mxu0 0.0
    %503 = vmatpush1.msra.mxu0 0.0
    %504 = vmatprep.subr.mxu0 0.0
    %505 = vmatpush1.msra.mxu0 0.0
    %506 = vmatprep.subr.mxu0 0.0
    %507 = vmatpush1.msra.mxu0 0.0
    %508 = vmatprep.subr.mxu0 0.0
    %509 = vmatpush1.msra.mxu0 0.0
    %510 = vmatprep.subr.mxu0 0.0
    %511 = vmatpush1.msra.mxu0 0.0
    %512 = vmatprep.subr.mxu0 0.0
    %513 = vmatpush1.msra.mxu0 0.0
    %514 = vmatprep.subr.mxu0 0.0
    %515 = vmatpush1.msra.mxu0 0.0
    %516 = vmatprep.subr.mxu0 0.0
    %517 = vmatpush1.msra.mxu0 0.0
    %518 = vmatprep.subr.mxu0 0.0
    %519 = vmatpush1.msra.mxu0 0.0
    %520 = vmatprep.subr.mxu0 0.0
    %521 = vmatpush1.msra.mxu0 0.0
    %522 = vmatprep.subr.mxu0 0.0
    %523 = vmatpush1.msra.mxu0 0.0
    %524 = vmatprep.subr.mxu0 0.0
    %525 = vmatpush1.msra.mxu0 0.0
    %526 = vmatprep.subr.mxu0 0.0
    %527 = vmatpush1.msra.mxu0 0.0
    %528 = vmatprep.subr.mxu0 0.0
    %529 = vmatpush1.msra.mxu0 0.0
    %530 = vmatprep.subr.mxu0 0.0
    %531 = vmatpush1.msra.mxu0 0.0
    %532 = vmatprep.subr.mxu0 0.0
    %533 = vmatpush1.msra.mxu0 0.0
    %534 = vmatprep.subr.mxu0 0.0
    %535 = vmatpush1.msra.mxu0 0.0
    %536 = vmatprep.subr.mxu0 0.0
    %537 = vmatpush1.msra.mxu0 0.0
    %538 = vmatprep.subr.mxu0 0.0
    %539 = vmatpush1.msra.mxu0 0.0
    %540 = vmatprep.subr.mxu0 0.0
    %541 = vmatpush1.msra.mxu0 0.0
    %542 = vmatprep.subr.mxu0 0.0
    %543 = vmatpush1.msra.mxu0 0.0
    %544 = vmatprep.subr.mxu0 0.0
    %545 = vmatpush1.msra.mxu0 0.0
    %546 = vmatprep.subr.mxu0 0.0
    %547 = vmatpush1.msra.mxu0 0.0
    %548 = vmatprep.subr.mxu0 0.0
    %549 = vmatpush1.msra.mxu0 0.0
    %550 = vmatprep.subr.mxu0 0.0
    %551 = vmatpush1.msra.mxu0 0.0
    %552 = vmatprep.subr.mxu0 0.0
    %553 = vmatpush1.msra.mxu0 0.0
    %554 = vmatprep.subr.mxu0 0.0
    %555 = vmatpush1.msra.mxu0 0.0
    %556 = vmatprep.mubr.f32.mxu0 0.0
    %557 = vmatmul.mubr.f32.gmra.mrb[0].mxu0 %v490
    %v558 = vpop.f32.mrb[0].mxu0
    %v559 = vadd.f32 0.0, %v558
    %v560 = vpop.f32.mrb[0].mxu0
    %561 = vdwg.mxu0
    %v563 = vsel %vm220, %v483, 0
    %v566 = vsel %vm220, %v559, 0
    %568 = vmatprep.subr.mxu0 0.0
    %569 = vmatpush1.msra.mxu0 %v205
    %570 = vmatprep.subr.mxu0 0.0
    %571 = vmatpush1.msra.mxu0 0.0
    %572 = vmatprep.subr.mxu0 0.0
    %573 = vmatpush1.msra.mxu0 0.0
    %574 = vmatprep.subr.mxu0 0.0
    %575 = vmatpush1.msra.mxu0 0.0
    %576 = vmatprep.subr.mxu0 0.0
    %577 = vmatpush1.msra.mxu0 0.0
    %578 = vmatprep.subr.mxu0 0.0
    %579 = vmatpush1.msra.mxu0 0.0
    %580 = vmatprep.subr.mxu0 0.0
    %581 = vmatpush1.msra.mxu0 0.0
    %582 = vmatprep.subr.mxu0 0.0
    %583 = vmatpush1.msra.mxu0 0.0
    %584 = vmatprep.subr.mxu0 0.0
    %585 = vmatpush1.msra.mxu0 0.0
    %586 = vmatprep.subr.mxu0 0.0
    %587 = vmatpush1.msra.mxu0 0.0
    %588 = vmatprep.subr.mxu0 0.0
    %589 = vmatpush1.msra.mxu0 0.0
    %590 = vmatprep.subr.mxu0 0.0
    %591 = vmatpush1.msra.mxu0 0.0
    %592 = vmatprep.subr.mxu0 0.0
    %593 = vmatpush1.msra.mxu0 0.0
    %594 = vmatprep.subr.mxu0 0.0
    %595 = vmatpush1.msra.mxu0 0.0
    %596 = vmatprep.subr.mxu0 0.0
    %597 = vmatpush1.msra.mxu0 0.0
    %598 = vmatprep.subr.mxu0 0.0
    %599 = vmatpush1.msra.mxu0 0.0
    %600 = vmatprep.subr.mxu0 0.0
    %601 = vmatpush1.msra.mxu0 0.0
    %602 = vmatprep.subr.mxu0 0.0
    %603 = vmatpush1.msra.mxu0 0.0
    %604 = vmatprep.subr.mxu0 0.0
    %605 = vmatpush1.msra.mxu0 0.0
    %606 = vmatprep.subr.mxu0 0.0
    %607 = vmatpush1.msra.mxu0 0.0
    %608 = vmatprep.subr.mxu0 0.0
    %609 = vmatpush1.msra.mxu0 0.0
    %610 = vmatprep.subr.mxu0 0.0
    %611 = vmatpush1.msra.mxu0 0.0
    %612 = vmatprep.subr.mxu0 0.0
    %613 = vmatpush1.msra.mxu0 0.0
    %614 = vmatprep.subr.mxu0 0.0
    %615 = vmatpush1.msra.mxu0 0.0
    %616 = vmatprep.subr.mxu0 0.0
    %617 = vmatpush1.msra.mxu0 0.0
    %618 = vmatprep.subr.mxu0 0.0
    %619 = vmatpush1.msra.mxu0 0.0
    %620 = vmatprep.subr.mxu0 0.0
    %621 = vmatpush1.msra.mxu0 0.0
    %622 = vmatprep.subr.mxu0 0.0
    %623 = vmatpush1.msra.mxu0 0.0
    %624 = vmatprep.subr.mxu0 0.0
    %625 = vmatpush1.msra.mxu0 0.0
    %626 = vmatprep.subr.mxu0 0.0
    %627 = vmatpush1.msra.mxu0 0.0
    %628 = vmatprep.subr.mxu0 0.0
    %629 = vmatpush1.msra.mxu0 0.0
    %630 = vmatprep.subr.mxu0 0.0
    %631 = vmatpush1.msra.mxu0 0.0
    %632 = vmatprep.mubr.f32.mxu0 0.0
    %633 = vmatmul.mubr.f32.gmra.mrb[0].mxu0 %v563
    %v634 = vpop.f32.mrb[0].mxu0
    %v635 = vadd.f32 0.0, %v634
    %v636 = vpop.f32.mrb[0].mxu0
    %637 = vmatprep.mubr.f32.mxu0 0.0
    %638 = vmatmul.mubr.f32.gmra.mrb[0].mxu0 %v566
    %v639 = vpop.f32.mrb[0].mxu0
    %v640 = vadd.f32 0.0, %v639
    %v641 = vpop.f32.mrb[0].mxu0
    %642 = vdwg.mxu0
    %v643 = vadd.f32 %v216, %v635
    %v644 = vadd.f32 %v216, %v640
    %645 = vrot.lane.b32.xlu0 %v197, 120
    %v646 = vpop.permute.xlu0 %645
    %647 = vrot.lane.b32.xlu0 %v197, 88
    %v648 = vpop.permute.xlu0 %647
    %v649 = vsel %vm220, %v646, 0
    %v651 = vsel %vm220, %v648, 0
    %653 = vmatprep.subr.mxu0 0.0
    %654 = vmatpush1.xpose.msra.mxu0 %v651
    %655 = vmatprep.subr.mxu0 0.0
    %656 = vmatpush1.xpose.msra.mxu0 0.0
    %657 = vmatprep.subr.mxu0 0.0
    %658 = vmatpush1.xpose.msra.mxu0 0.0
    %659 = vmatprep.subr.mxu0 0.0
    %660 = vmatpush1.xpose.msra.mxu0 0.0
    %661 = vmatprep.subr.mxu0 0.0
    %662 = vmatpush1.xpose.msra.mxu0 0.0
    %663 = vmatprep.subr.mxu0 0.0
    %664 = vmatpush1.xpose.msra.mxu0 0.0
    %665 = vmatprep.subr.mxu0 0.0
    %666 = vmatpush1.xpose.msra.mxu0 0.0
    %667 = vmatprep.subr.mxu0 0.0
    %668 = vmatpush1.xpose.msra.mxu0 0.0
    %669 = vmatprep.subr.mxu0 0.0
    %670 = vmatpush1.xpose.msra.mxu0 0.0
    %671 = vmatprep.subr.mxu0 0.0
    %672 = vmatpush1.xpose.msra.mxu0 0.0
    %673 = vmatprep.subr.mxu0 0.0
    %674 = vmatpush1.xpose.msra.mxu0 0.0
    %675 = vmatprep.subr.mxu0 0.0
    %676 = vmatpush1.xpose.msra.mxu0 0.0
    %677 = vmatprep.subr.mxu0 0.0
    %678 = vmatpush1.xpose.msra.mxu0 0.0
    %679 = vmatprep.subr.mxu0 0.0
    %680 = vmatpush1.xpose.msra.mxu0 0.0
    %681 = vmatprep.subr.mxu0 0.0
    %682 = vmatpush1.xpose.msra.mxu0 0.0
    %683 = vmatprep.subr.mxu0 0.0
    %684 = vmatpush1.xpose.msra.mxu0 0.0
    %685 = vmatprep.subr.mxu0 0.0
    %686 = vmatpush1.xpose.msra.mxu0 0.0
    %687 = vmatprep.subr.mxu0 0.0
    %688 = vmatpush1.xpose.msra.mxu0 0.0
    %689 = vmatprep.subr.mxu0 0.0
    %690 = vmatpush1.xpose.msra.mxu0 0.0
    %691 = vmatprep.subr.mxu0 0.0
    %692 = vmatpush1.xpose.msra.mxu0 0.0
    %693 = vmatprep.subr.mxu0 0.0
    %694 = vmatpush1.xpose.msra.mxu0 0.0
    %695 = vmatprep.subr.mxu0 0.0
    %696 = vmatpush1.xpose.msra.mxu0 0.0
    %697 = vmatprep.subr.mxu0 0.0
    %698 = vmatpush1.xpose.msra.mxu0 0.0
    %699 = vmatprep.subr.mxu0 0.0
    %700 = vmatpush1.xpose.msra.mxu0 0.0
    %701 = vmatprep.subr.mxu0 0.0
    %702 = vmatpush1.xpose.msra.mxu0 0.0
    %703 = vmatprep.subr.mxu0 0.0
    %704 = vmatpush1.xpose.msra.mxu0 0.0
    %705 = vmatprep.subr.mxu0 0.0
    %706 = vmatpush1.xpose.msra.mxu0 0.0
    %707 = vmatprep.subr.mxu0 0.0
    %708 = vmatpush1.xpose.msra.mxu0 0.0
    %709 = vmatprep.subr.mxu0 0.0
    %710 = vmatpush1.xpose.msra.mxu0 0.0
    %711 = vmatprep.subr.mxu0 0.0
    %712 = vmatpush1.xpose.msra.mxu0 0.0
    %713 = vmatprep.subr.mxu0 0.0
    %714 = vmatpush1.xpose.msra.mxu0 0.0
    %715 = vmatprep.subr.mxu0 0.0
    %716 = vmatpush1.xpose.msra.mxu0 0.0
    %717 = vmatprep.mubr.f32.mxu0 0.0
    %718 = vmatmul.mubr.f32.gmra.mrb[0].mxu0 %v649
    %v719 = vpop.f32.mrb[0].mxu0
    %v720 = vadd.f32 0.0, %v719
    %v721 = vpop.f32.mrb[0].mxu0
    %722 = vdwg.mxu0
    %723 = vrot.lane.b32.xlu0 %v202, 120
    %v724 = vpop.permute.xlu0 %723
    %725 = vrot.lane.b32.xlu0 %v202, 88
    %v726 = vpop.permute.xlu0 %725
    %v727 = vsel %vm220, %v724, 0
    %v729 = vsel %vm220, %v726, 0
    %731 = vmatprep.subr.mxu0 0.0
    %732 = vmatpush1.xpose.msra.mxu0 %v729
    %733 = vmatprep.subr.mxu0 0.0
    %734 = vmatpush1.xpose.msra.mxu0 0.0
    %735 = vmatprep.subr.mxu0 0.0
    %736 = vmatpush1.xpose.msra.mxu0 0.0
    %737 = vmatprep.subr.mxu0 0.0
    %738 = vmatpush1.xpose.msra.mxu0 0.0
    %739 = vmatprep.subr.mxu0 0.0
    %740 = vmatpush1.xpose.msra.mxu0 0.0
    %741 = vmatprep.subr.mxu0 0.0
    %742 = vmatpush1.xpose.msra.mxu0 0.0
    %743 = vmatprep.subr.mxu0 0.0
    %744 = vmatpush1.xpose.msra.mxu0 0.0
    %745 = vmatprep.subr.mxu0 0.0
    %746 = vmatpush1.xpose.msra.mxu0 0.0
    %747 = vmatprep.subr.mxu0 0.0
    %748 = vmatpush1.xpose.msra.mxu0 0.0
    %749 = vmatprep.subr.mxu0 0.0
    %750 = vmatpush1.xpose.msra.mxu0 0.0
    %751 = vmatprep.subr.mxu0 0.0
    %752 = vmatpush1.xpose.msra.mxu0 0.0
    %753 = vmatprep.subr.mxu0 0.0
    %754 = vmatpush1.xpose.msra.mxu0 0.0
    %755 = vmatprep.subr.mxu0 0.0
    %756 = vmatpush1.xpose.msra.mxu0 0.0
    %757 = vmatprep.subr.mxu0 0.0
    %758 = vmatpush1.xpose.msra.mxu0 0.0
    %759 = vmatprep.subr.mxu0 0.0
    %760 = vmatpush1.xpose.msra.mxu0 0.0
    %761 = vmatprep.subr.mxu0 0.0
    %762 = vmatpush1.xpose.msra.mxu0 0.0
    %763 = vmatprep.subr.mxu0 0.0
    %764 = vmatpush1.xpose.msra.mxu0 0.0
    %765 = vmatprep.subr.mxu0 0.0
    %766 = vmatpush1.xpose.msra.mxu0 0.0
    %767 = vmatprep.subr.mxu0 0.0
    %768 = vmatpush1.xpose.msra.mxu0 0.0
    %769 = vmatprep.subr.mxu0 0.0
    %770 = vmatpush1.xpose.msra.mxu0 0.0
    %771 = vmatprep.subr.mxu0 0.0
    %772 = vmatpush1.xpose.msra.mxu0 0.0
    %773 = vmatprep.subr.mxu0 0.0
    %774 = vmatpush1.xpose.msra.mxu0 0.0
    %775 = vmatprep.subr.mxu0 0.0
    %776 = vmatpush1.xpose.msra.mxu0 0.0
    %777 = vmatprep.subr.mxu0 0.0
    %778 = vmatpush1.xpose.msra.mxu0 0.0
    %779 = vmatprep.subr.mxu0 0.0
    %780 = vmatpush1.xpose.msra.mxu0 0.0
    %781 = vmatprep.subr.mxu0 0.0
    %782 = vmatpush1.xpose.msra.mxu0 0.0
    %783 = vmatprep.subr.mxu0 0.0
    %784 = vmatpush1.xpose.msra.mxu0 0.0
    %785 = vmatprep.subr.mxu0 0.0
    %786 = vmatpush1.xpose.msra.mxu0 0.0
    %787 = vmatprep.subr.mxu0 0.0
    %788 = vmatpush1.xpose.msra.mxu0 0.0
    %789 = vmatprep.subr.mxu0 0.0
    %790 = vmatpush1.xpose.msra.mxu0 0.0
    %791 = vmatprep.subr.mxu0 0.0
    %792 = vmatpush1.xpose.msra.mxu0 0.0
    %793 = vmatprep.subr.mxu0 0.0
    %794 = vmatpush1.xpose.msra.mxu0 0.0
    %795 = vmatprep.mubr.f32.mxu0 0.0
    %796 = vmatmul.mubr.f32.gmra.mrb[0].mxu0 %v727
    %v797 = vpop.f32.mrb[0].mxu0
    %v798 = vadd.f32 0.0, %v797
    %v799 = vpop.f32.mrb[0].mxu0
    %800 = vdwg.mxu0
    %v801 = vmul.f32 %v720, 0.35355338
    %v802 = vmul.f32 %v798, 0.35355338
    %v803 = vadd.f32 %v801, %v379
    %v804 = vadd.f32 %v802, %v383
    %v805 = vsel %vm220, %v803, -inf
    %806 = vmax.xlane.f32.xlu0 %v805
    %v807 = vpop.xlane.xlu0 %806
    %v808 = vsel %vm220, %v804, -inf
    %809 = vmax.xlane.f32.xlu0 %v808
    %v810 = vpop.xlane.xlu0 %809
    %v811 = vsub.f32 %v803, %v807
    %v812 = vsub.f32 %v804, %v810
    %v813 = vmul.f32 %v811, 1.442695
    %v814 = vpow.pop %v813
    %v815 = vmul.f32 %v812, 1.442695
    %v816 = vpow.pop %v815
    %v817 = vsel %vm220, %v814, 0.0
    %818 = vadd.xlane.f32.xlu0 %v817
    %v819 = vpop.xlane.xlu0 %818
    %v820 = vsel %vm220, %v816, 0.0
    %821 = vadd.xlane.f32.xlu0 %v820
    %v822 = vpop.xlane.xlu0 %821
    %v823 = vrcp.pop %v819
    %v824 = vmul.f32 %v814, %v823
    %v825 = vrcp.pop %v822
    %v826 = vmul.f32 %v816, %v825
    %827 = vrot.lane.b32.xlu0 %v197, 56
    %v828 = vpop.permute.xlu0 %827
    %v831 = vsel %vm220, %v824, 0
    %833 = vmatprep.subr.mxu0 0.0
    %834 = vmatpush1.msra.mxu0 %v828
    %835 = vmatprep.subr.mxu0 0.0
    %836 = vmatpush1.msra.mxu0 0.0
    %837 = vmatprep.subr.mxu0 0.0
    %838 = vmatpush1.msra.mxu0 0.0
    %839 = vmatprep.subr.mxu0 0.0
    %840 = vmatpush1.msra.mxu0 0.0
    %841 = vmatprep.subr.mxu0 0.0
    %842 = vmatpush1.msra.mxu0 0.0
    %843 = vmatprep.subr.mxu0 0.0
    %844 = vmatpush1.msra.mxu0 0.0
    %845 = vmatprep.subr.mxu0 0.0
    %846 = vmatpush1.msra.mxu0 0.0
    %847 = vmatprep.subr.mxu0 0.0
    %848 = vmatpush1.msra.mxu0 0.0
    %849 = vmatprep.subr.mxu0 0.0
    %850 = vmatpush1.msra.mxu0 0.0
    %851 = vmatprep.subr.mxu0 0.0
    %852 = vmatpush1.msra.mxu0 0.0
    %853 = vmatprep.subr.mxu0 0.0
    %854 = vmatpush1.msra.mxu0 0.0
    %855 = vmatprep.subr.mxu0 0.0
    %856 = vmatpush1.msra.mxu0 0.0
    %857 = vmatprep.subr.mxu0 0.0
    %858 = vmatpush1.msra.mxu0 0.0
    %859 = vmatprep.subr.mxu0 0.0
    %860 = vmatpush1.msra.mxu0 0.0
    %861 = vmatprep.subr.mxu0 0.0
    %862 = vmatpush1.msra.mxu0 0.0
    %863 = vmatprep.subr.mxu0 0.0
    %864 = vmatpush1.msra.mxu0 0.0
    %865 = vmatprep.subr.mxu0 0.0
    %866 = vmatpush1.msra.mxu0 0.0
    %867 = vmatprep.subr.mxu0 0.0
    %868 = vmatpush1.msra.mxu0 0.0
    %869 = vmatprep.subr.mxu0 0.0
    %870 = vmatpush1.msra.mxu0 0.0
    %871 = vmatprep.subr.mxu0 0.0
    %872 = vmatpush1.msra.mxu0 0.0
    %873 = vmatprep.subr.mxu0 0.0
    %874 = vmatpush1.msra.mxu0 0.0
    %875 = vmatprep.subr.mxu0 0.0
    %876 = vmatpush1.msra.mxu0 0.0
    %877 = vmatprep.subr.mxu0 0.0
    %878 = vmatpush1.msra.mxu0 0.0
    %879 = vmatprep.subr.mxu0 0.0
    %880 = vmatpush1.msra.mxu0 0.0
    %881 = vmatprep.subr.mxu0 0.0
    %882 = vmatpush1.msra.mxu0 0.0
    %883 = vmatprep.subr.mxu0 0.0
    %884 = vmatpush1.msra.mxu0 0.0
    %885 = vmatprep.subr.mxu0 0.0
    %886 = vmatpush1.msra.mxu0 0.0
    %887 = vmatprep.subr.mxu0 0.0
    %888 = vmatpush1.msra.mxu0 0.0
    %889 = vmatprep.subr.mxu0 0.0
    %890 = vmatpush1.msra.mxu0 0.0
    %891 = vmatprep.subr.mxu0 0.0
    %892 = vmatpush1.msra.mxu0 0.0
    %893 = vmatprep.subr.mxu0 0.0
    %894 = vmatpush1.msra.mxu0 0.0
    %895 = vmatprep.subr.mxu0 0.0
    %896 = vmatpush1.msra.mxu0 0.0
    %897 = vmatprep.mubr.f32.mxu0 0.0
    %898 = vmatmul.mubr.f32.gmra.mrb[0].mxu0 %v831
    %v899 = vpop.f32.mrb[0].mxu0
    %v900 = vadd.f32 0.0, %v899
    %v901 = vpop.f32.mrb[0].mxu0
    %902 = vdwg.mxu0
    %903 = vrot.lane.b32.xlu0 %v202, 56
    %v904 = vpop.permute.xlu0 %903
    %v907 = vsel %vm220, %v826, 0
    %909 = vmatprep.subr.mxu0 0.0
    %910 = vmatpush1.msra.mxu0 %v904
    %911 = vmatprep.subr.mxu0 0.0
    %912 = vmatpush1.msra.mxu0 0.0
    %913 = vmatprep.subr.mxu0 0.0
    %914 = vmatpush1.msra.mxu0 0.0
    %915 = vmatprep.subr.mxu0 0.0
    %916 = vmatpush1.msra.mxu0 0.0
    %917 = vmatprep.subr.mxu0 0.0
    %918 = vmatpush1.msra.mxu0 0.0
    %919 = vmatprep.subr.mxu0 0.0
    %920 = vmatpush1.msra.mxu0 0.0
    %921 = vmatprep.subr.mxu0 0.0
    %922 = vmatpush1.msra.mxu0 0.0
    %923 = vmatprep.subr.mxu0 0.0
    %924 = vmatpush1.msra.mxu0 0.0
    %925 = vmatprep.subr.mxu0 0.0
    %926 = vmatpush1.msra.mxu0 0.0
    %927 = vmatprep.subr.mxu0 0.0
    %928 = vmatpush1.msra.mxu0 0.0
    %929 = vmatprep.subr.mxu0 0.0
    %930 = vmatpush1.msra.mxu0 0.0
    %931 = vmatprep.subr.mxu0 0.0
    %932 = vmatpush1.msra.mxu0 0.0
    %933 = vmatprep.subr.mxu0 0.0
    %934 = vmatpush1.msra.mxu0 0.0
    %935 = vmatprep.subr.mxu0 0.0
    %936 = vmatpush1.msra.mxu0 0.0
    %937 = vmatprep.subr.mxu0 0.0
    %938 = vmatpush1.msra.mxu0 0.0
    %939 = vmatprep.subr.mxu0 0.0
    %940 = vmatpush1.msra.mxu0 0.0
    %941 = vmatprep.subr.mxu0 0.0
    %942 = vmatpush1.msra.mxu0 0.0
    %943 = vmatprep.subr.mxu0 0.0
    %944 = vmatpush1.msra.mxu0 0.0
    %945 = vmatprep.subr.mxu0 0.0
    %946 = vmatpush1.msra.mxu0 0.0
    %947 = vmatprep.subr.mxu0 0.0
    %948 = vmatpush1.msra.mxu0 0.0
    %949 = vmatprep.subr.mxu0 0.0
    %950 = vmatpush1.msra.mxu0 0.0
    %951 = vmatprep.subr.mxu0 0.0
    %952 = vmatpush1.msra.mxu0 0.0
    %953 = vmatprep.subr.mxu0 0.0
    %954 = vmatpush1.msra.mxu0 0.0
    %955 = vmatprep.subr.mxu0 0.0
    %956 = vmatpush1.msra.mxu0 0.0
    %957 = vmatprep.subr.mxu0 0.0
    %958 = vmatpush1.msra.mxu0 0.0
    %959 = vmatprep.subr.mxu0 0.0
    %960 = vmatpush1.msra.mxu0 0.0
    %961 = vmatprep.subr.mxu0 0.0
    %962 = vmatpush1.msra.mxu0 0.0
    %963 = vmatprep.subr.mxu0 0.0
    %964 = vmatpush1.msra.mxu0 0.0
    %965 = vmatprep.subr.mxu0 0.0
    %966 = vmatpush1.msra.mxu0 0.0
    %967 = vmatprep.subr.mxu0 0.0
    %968 = vmatpush1.msra.mxu0 0.0
    %969 = vmatprep.subr.mxu0 0.0
    %970 = vmatpush1.msra.mxu0 0.0
    %971 = vmatprep.subr.mxu0 0.0
    %972 = vmatpush1.msra.mxu0 0.0
    %973 = vmatprep.mubr.f32.mxu0 0.0
    %974 = vmatmul.mubr.f32.gmra.mrb[0].mxu0 %v907
    %v975 = vpop.f32.mrb[0].mxu0
    %v976 = vadd.f32 0.0, %v975
    %v977 = vpop.f32.mrb[0].mxu0
    %978 = vdwg.mxu0
    %v980 = vsel %vm220, %v900, 0
    %v983 = vsel %vm220, %v976, 0
    %985 = vmatprep.subr.mxu0 0.0
    %986 = vmatpush1.msra.mxu0 %v206
    %987 = vmatprep.subr.mxu0 0.0
    %988 = vmatpush1.msra.mxu0 0.0
    %989 = vmatprep.subr.mxu0 0.0
    %990 = vmatpush1.msra.mxu0 0.0
    %991 = vmatprep.subr.mxu0 0.0
    %992 = vmatpush1.msra.mxu0 0.0
    %993 = vmatprep.subr.mxu0 0.0
    %994 = vmatpush1.msra.mxu0 0.0
    %995 = vmatprep.subr.mxu0 0.0
    %996 = vmatpush1.msra.mxu0 0.0
    %997 = vmatprep.subr.mxu0 0.0
    %998 = vmatpush1.msra.mxu0 0.0
    %999 = vmatprep.subr.mxu0 0.0
    %1000 = vmatpush1.msra.mxu0 0.0
    %1001 = vmatprep.subr.mxu0 0.0
    %1002 = vmatpush1.msra.mxu0 0.0
    %1003 = vmatprep.subr.mxu0 0.0
    %1004 = vmatpush1.msra.mxu0 0.0
    %1005 = vmatprep.subr.mxu0 0.0
    %1006 = vmatpush1.msra.mxu0 0.0
    %1007 = vmatprep.subr.mxu0 0.0
    %1008 = vmatpush1.msra.mxu0 0.0
    %1009 = vmatprep.subr.mxu0 0.0
    %1010 = vmatpush1.msra.mxu0 0.0
    %1011 = vmatprep.subr.mxu0 0.0
    %1012 = vmatpush1.msra.mxu0 0.0
    %1013 = vmatprep.subr.mxu0 0.0
    %1014 = vmatpush1.msra.mxu0 0.0
    %1015 = vmatprep.subr.mxu0 0.0
    %1016 = vmatpush1.msra.mxu0 0.0
    %1017 = vmatprep.subr.mxu0 0.0
    %1018 = vmatpush1.msra.mxu0 0.0
    %1019 = vmatprep.subr.mxu0 0.0
    %1020 = vmatpush1.msra.mxu0 0.0
    %1021 = vmatprep.subr.mxu0 0.0
    %1022 = vmatpush1.msra.mxu0 0.0
    %1023 = vmatprep.subr.mxu0 0.0
    %1024 = vmatpush1.msra.mxu0 0.0
    %1025 = vmatprep.subr.mxu0 0.0
    %1026 = vmatpush1.msra.mxu0 0.0
    %1027 = vmatprep.subr.mxu0 0.0
    %1028 = vmatpush1.msra.mxu0 0.0
    %1029 = vmatprep.subr.mxu0 0.0
    %1030 = vmatpush1.msra.mxu0 0.0
    %1031 = vmatprep.subr.mxu0 0.0
    %1032 = vmatpush1.msra.mxu0 0.0
    %1033 = vmatprep.subr.mxu0 0.0
    %1034 = vmatpush1.msra.mxu0 0.0
    %1035 = vmatprep.subr.mxu0 0.0
    %1036 = vmatpush1.msra.mxu0 0.0
    %1037 = vmatprep.subr.mxu0 0.0
    %1038 = vmatpush1.msra.mxu0 0.0
    %1039 = vmatprep.subr.mxu0 0.0
    %1040 = vmatpush1.msra.mxu0 0.0
    %1041 = vmatprep.subr.mxu0 0.0
    %1042 = vmatpush1.msra.mxu0 0.0
    %1043 = vmatprep.subr.mxu0 0.0
    %1044 = vmatpush1.msra.mxu0 0.0
    %1045 = vmatprep.subr.mxu0 0.0
    %1046 = vmatpush1.msra.mxu0 0.0
    %1047 = vmatprep.subr.mxu0 0.0
    %1048 = vmatpush1.msra.mxu0 0.0
    %1049 = vmatprep.mubr.f32.mxu0 0.0
    %1050 = vmatmul.mubr.f32.gmra.mrb[0].mxu0 %v980
    %v1051 = vpop.f32.mrb[0].mxu0
    %v1052 = vadd.f32 0.0, %v1051
    %v1053 = vpop.f32.mrb[0].mxu0
    %1054 = vmatprep.mubr.f32.mxu0 0.0
    %1055 = vmatmul.mubr.f32.gmra.mrb[0].mxu0 %v983
    %v1056 = vpop.f32.mrb[0].mxu0
    %v1057 = vadd.f32 0.0, %v1056
    %v1058 = vpop.f32.mrb[0].mxu0
    %1059 = vdwg.mxu0
    %v1060 = vadd.f32 %v643, %v1052
    %v1061 = vadd.f32 %v644, %v1057
    %1062 = vrot.lane.b32.xlu0 %v197, 112
    %v1063 = vpop.permute.xlu0 %1062
    %1064 = vrot.lane.b32.xlu0 %v197, 80
    %v1065 = vpop.permute.xlu0 %1064
    %v1066 = vsel %vm220, %v1063, 0
    %v1068 = vsel %vm220, %v1065, 0
    %1070 = vmatprep.subr.mxu0 0.0
    %1071 = vmatpush1.xpose.msra.mxu0 %v1068
    %1072 = vmatprep.subr.mxu0 0.0
    %1073 = vmatpush1.xpose.msra.mxu0 0.0
    %1074 = vmatprep.subr.mxu0 0.0
    %1075 = vmatpush1.xpose.msra.mxu0 0.0
    %1076 = vmatprep.subr.mxu0 0.0
    %1077 = vmatpush1.xpose.msra.mxu0 0.0
    %1078 = vmatprep.subr.mxu0 0.0
    %1079 = vmatpush1.xpose.msra.mxu0 0.0
    %1080 = vmatprep.subr.mxu0 0.0
    %1081 = vmatpush1.xpose.msra.mxu0 0.0
    %1082 = vmatprep.subr.mxu0 0.0
    %1083 = vmatpush1.xpose.msra.mxu0 0.0
    %1084 = vmatprep.subr.mxu0 0.0
    %1085 = vmatpush1.xpose.msra.mxu0 0.0
    %1086 = vmatprep.subr.mxu0 0.0
    %1087 = vmatpush1.xpose.msra.mxu0 0.0
    %1088 = vmatprep.subr.mxu0 0.0
    %1089 = vmatpush1.xpose.msra.mxu0 0.0
    %1090 = vmatprep.subr.mxu0 0.0
    %1091 = vmatpush1.xpose.msra.mxu0 0.0
    %1092 = vmatprep.subr.mxu0 0.0
    %1093 = vmatpush1.xpose.msra.mxu0 0.0
    %1094 = vmatprep.subr.mxu0 0.0
    %1095 = vmatpush1.xpose.msra.mxu0 0.0
    %1096 = vmatprep.subr.mxu0 0.0
    %1097 = vmatpush1.xpose.msra.mxu0 0.0
    %1098 = vmatprep.subr.mxu0 0.0
    %1099 = vmatpush1.xpose.msra.mxu0 0.0
    %1100 = vmatprep.subr.mxu0 0.0
    %1101 = vmatpush1.xpose.msra.mxu0 0.0
    %1102 = vmatprep.subr.mxu0 0.0
    %1103 = vmatpush1.xpose.msra.mxu0 0.0
    %1104 = vmatprep.subr.mxu0 0.0
    %1105 = vmatpush1.xpose.msra.mxu0 0.0
    %1106 = vmatprep.subr.mxu0 0.0
    %1107 = vmatpush1.xpose.msra.mxu0 0.0
    %1108 = vmatprep.subr.mxu0 0.0
    %1109 = vmatpush1.xpose.msra.mxu0 0.0
    %1110 = vmatprep.subr.mxu0 0.0
    %1111 = vmatpush1.xpose.msra.mxu0 0.0
    %1112 = vmatprep.subr.mxu0 0.0
    %1113 = vmatpush1.xpose.msra.mxu0 0.0
    %1114 = vmatprep.subr.mxu0 0.0
    %1115 = vmatpush1.xpose.msra.mxu0 0.0
    %1116 = vmatprep.subr.mxu0 0.0
    %1117 = vmatpush1.xpose.msra.mxu0 0.0
    %1118 = vmatprep.subr.mxu0 0.0
    %1119 = vmatpush1.xpose.msra.mxu0 0.0
    %1120 = vmatprep.subr.mxu0 0.0
    %1121 = vmatpush1.xpose.msra.mxu0 0.0
    %1122 = vmatprep.subr.mxu0 0.0
    %1123 = vmatpush1.xpose.msra.mxu0 0.0
    %1124 = vmatprep.subr.mxu0 0.0
    %1125 = vmatpush1.xpose.msra.mxu0 0.0
    %1126 = vmatprep.subr.mxu0 0.0
    %1127 = vmatpush1.xpose.msra.mxu0 0.0
    %1128 = vmatprep.subr.mxu0 0.0
    %1129 = vmatpush1.xpose.msra.mxu0 0.0
    %1130 = vmatprep.subr.mxu0 0.0
    %1131 = vmatpush1.xpose.msra.mxu0 0.0
    %1132 = vmatprep.subr.mxu0 0.0
    %1133 = vmatpush1.xpose.msra.mxu0 0.0
    %1134 = vmatprep.mubr.f32.mxu0 0.0
    %1135 = vmatmul.mubr.f32.gmra.mrb[0].mxu0 %v1066
    %v1136 = vpop.f32.mrb[0].mxu0
    %v1137 = vadd.f32 0.0, %v1136
    %v1138 = vpop.f32.mrb[0].mxu0
    %1139 = vdwg.mxu0
    %1140 = vrot.lane.b32.xlu0 %v202, 112
    %v1141 = vpop.permute.xlu0 %1140
    %1142 = vrot.lane.b32.xlu0 %v202, 80
    %v1143 = vpop.permute.xlu0 %1142
    %v1144 = vsel %vm220, %v1141, 0
    %v1146 = vsel %vm220, %v1143, 0
    %1148 = vmatprep.subr.mxu0 0.0
    %1149 = vmatpush1.xpose.msra.mxu0 %v1146
    %1150 = vmatprep.subr.mxu0 0.0
    %1151 = vmatpush1.xpose.msra.mxu0 0.0
    %1152 = vmatprep.subr.mxu0 0.0
    %1153 = vmatpush1.xpose.msra.mxu0 0.0
    %1154 = vmatprep.subr.mxu0 0.0
    %1155 = vmatpush1.xpose.msra.mxu0 0.0
    %1156 = vmatprep.subr.mxu0 0.0
    %1157 = vmatpush1.xpose.msra.mxu0 0.0
    %1158 = vmatprep.subr.mxu0 0.0
    %1159 = vmatpush1.xpose.msra.mxu0 0.0
    %1160 = vmatprep.subr.mxu0 0.0
    %1161 = vmatpush1.xpose.msra.mxu0 0.0
    %1162 = vmatprep.subr.mxu0 0.0
    %1163 = vmatpush1.xpose.msra.mxu0 0.0
    %1164 = vmatprep.subr.mxu0 0.0
    %1165 = vmatpush1.xpose.msra.mxu0 0.0
    %1166 = vmatprep.subr.mxu0 0.0
    %1167 = vmatpush1.xpose.msra.mxu0 0.0
    %1168 = vmatprep.subr.mxu0 0.0
    %1169 = vmatpush1.xpose.msra.mxu0 0.0
    %1170 = vmatprep.subr.mxu0 0.0
    %1171 = vmatpush1.xpose.msra.mxu0 0.0
    %1172 = vmatprep.subr.mxu0 0.0
    %1173 = vmatpush1.xpose.msra.mxu0 0.0
    %1174 = vmatprep.subr.mxu0 0.0
    %1175 = vmatpush1.xpose.msra.mxu0 0.0
    %1176 = vmatprep.subr.mxu0 0.0
    %1177 = vmatpush1.xpose.msra.mxu0 0.0
    %1178 = vmatprep.subr.mxu0 0.0
    %1179 = vmatpush1.xpose.msra.mxu0 0.0
    %1180 = vmatprep.subr.mxu0 0.0
    %1181 = vmatpush1.xpose.msra.mxu0 0.0
    %1182 = vmatprep.subr.mxu0 0.0
    %1183 = vmatpush1.xpose.msra.mxu0 0.0
    %1184 = vmatprep.subr.mxu0 0.0
    %1185 = vmatpush1.xpose.msra.mxu0 0.0
    %1186 = vmatprep.subr.mxu0 0.0
    %1187 = vmatpush1.xpose.msra.mxu0 0.0
    %1188 = vmatprep.subr.mxu0 0.0
    %1189 = vmatpush1.xpose.msra.mxu0 0.0
    %1190 = vmatprep.subr.mxu0 0.0
    %1191 = vmatpush1.xpose.msra.mxu0 0.0
    %1192 = vmatprep.subr.mxu0 0.0
    %1193 = vmatpush1.xpose.msra.mxu0 0.0
    %1194 = vmatprep.subr.mxu0 0.0
    %1195 = vmatpush1.xpose.msra.mxu0 0.0
    %1196 = vmatprep.subr.mxu0 0.0
    %1197 = vmatpush1.xpose.msra.mxu0 0.0
    %1198 = vmatprep.subr.mxu0 0.0
    %1199 = vmatpush1.xpose.msra.mxu0 0.0
    %1200 = vmatprep.subr.mxu0 0.0
    %1201 = vmatpush1.xpose.msra.mxu0 0.0
    %1202 = vmatprep.subr.mxu0 0.0
    %1203 = vmatpush1.xpose.msra.mxu0 0.0
    %1204 = vmatprep.subr.mxu0 0.0
    %1205 = vmatpush1.xpose.msra.mxu0 0.0
    %1206 = vmatprep.subr.mxu0 0.0
    %1207 = vmatpush1.xpose.msra.mxu0 0.0
    %1208 = vmatprep.subr.mxu0 0.0
    %1209 = vmatpush1.xpose.msra.mxu0 0.0
    %1210 = vmatprep.subr.mxu0 0.0
    %1211 = vmatpush1.xpose.msra.mxu0 0.0
    %1212 = vmatprep.mubr.f32.mxu0 0.0
    %1213 = vmatmul.mubr.f32.gmra.mrb[0].mxu0 %v1144
    %v1214 = vpop.f32.mrb[0].mxu0
    %v1215 = vadd.f32 0.0, %v1214
    %v1216 = vpop.f32.mrb[0].mxu0
    %1217 = vdwg.mxu0
    %v1218 = vmul.f32 %v1137, 0.35355338
    %v1219 = vmul.f32 %v1215, 0.35355338
    %v1220 = vadd.f32 %v1218, %v379
    %v1221 = vadd.f32 %v1219, %v383
    %v1222 = vsel %vm220, %v1220, -inf
    %1223 = vmax.xlane.f32.xlu0 %v1222
    %v1224 = vpop.xlane.xlu0 %1223
    %v1225 = vsel %vm220, %v1221, -inf
    %1226 = vmax.xlane.f32.xlu0 %v1225
    %v1227 = vpop.xlane.xlu0 %1226
    %v1228 = vsub.f32 %v1220, %v1224
    %v1229 = vsub.f32 %v1221, %v1227
    %v1230 = vmul.f32 %v1228, 1.442695
    %v1231 = vpow.pop %v1230
    %v1232 = vmul.f32 %v1229, 1.442695
    %v1233 = vpow.pop %v1232
    %v1234 = vsel %vm220, %v1231, 0.0
    %1235 = vadd.xlane.f32.xlu0 %v1234
    %v1236 = vpop.xlane.xlu0 %1235
    %v1237 = vsel %vm220, %v1233, 0.0
    %1238 = vadd.xlane.f32.xlu0 %v1237
    %v1239 = vpop.xlane.xlu0 %1238
    %v1240 = vrcp.pop %v1236
    %v1241 = vmul.f32 %v1231, %v1240
    %v1242 = vrcp.pop %v1239
    %v1243 = vmul.f32 %v1233, %v1242
    %1244 = vrot.lane.b32.xlu0 %v197, 48
    %v1245 = vpop.permute.xlu0 %1244
    %v1248 = vsel %vm220, %v1241, 0
    %1250 = vmatprep.subr.mxu0 0.0
    %1251 = vmatpush1.msra.mxu0 %v1245
    %1252 = vmatprep.subr.mxu0 0.0
    %1253 = vmatpush1.msra.mxu0 0.0
    %1254 = vmatprep.subr.mxu0 0.0
    %1255 = vmatpush1.msra.mxu0 0.0
    %1256 = vmatprep.subr.mxu0 0.0
    %1257 = vmatpush1.msra.mxu0 0.0
    %1258 = vmatprep.subr.mxu0 0.0
    %1259 = vmatpush1.msra.mxu0 0.0
    %1260 = vmatprep.subr.mxu0 0.0
    %1261 = vmatpush1.msra.mxu0 0.0
    %1262 = vmatprep.subr.mxu0 0.0
    %1263 = vmatpush1.msra.mxu0 0.0
    %1264 = vmatprep.subr.mxu0 0.0
    %1265 = vmatpush1.msra.mxu0 0.0
    %1266 = vmatprep.subr.mxu0 0.0
    %1267 = vmatpush1.msra.mxu0 0.0
    %1268 = vmatprep.subr.mxu0 0.0
    %1269 = vmatpush1.msra.mxu0 0.0
    %1270 = vmatprep.subr.mxu0 0.0
    %1271 = vmatpush1.msra.mxu0 0.0
    %1272 = vmatprep.subr.mxu0 0.0
    %1273 = vmatpush1.msra.mxu0 0.0
    %1274 = vmatprep.subr.mxu0 0.0
    %1275 = vmatpush1.msra.mxu0 0.0
    %1276 = vmatprep.subr.mxu0 0.0
    %1277 = vmatpush1.msra.mxu0 0.0
    %1278 = vmatprep.subr.mxu0 0.0
    %1279 = vmatpush1.msra.mxu0 0.0
    %1280 = vmatprep.subr.mxu0 0.0
    %1281 = vmatpush1.msra.mxu0 0.0
    %1282 = vmatprep.subr.mxu0 0.0
    %1283 = vmatpush1.msra.mxu0 0.0
    %1284 = vmatprep.subr.mxu0 0.0
    %1285 = vmatpush1.msra.mxu0 0.0
    %1286 = vmatprep.subr.mxu0 0.0
    %1287 = vmatpush1.msra.mxu0 0.0
    %1288 = vmatprep.subr.mxu0 0.0
    %1289 = vmatpush1.msra.mxu0 0.0
    %1290 = vmatprep.subr.mxu0 0.0
    %1291 = vmatpush1.msra.mxu0 0.0
    %1292 = vmatprep.subr.mxu0 0.0
    %1293 = vmatpush1.msra.mxu0 0.0
    %1294 = vmatprep.subr.mxu0 0.0
    %1295 = vmatpush1.msra.mxu0 0.0
    %1296 = vmatprep.subr.mxu0 0.0
    %1297 = vmatpush1.msra.mxu0 0.0
    %1298 = vmatprep.subr.mxu0 0.0
    %1299 = vmatpush1.msra.mxu0 0.0
    %1300 = vmatprep.subr.mxu0 0.0
    %1301 = vmatpush1.msra.mxu0 0.0
    %1302 = vmatprep.subr.mxu0 0.0
    %1303 = vmatpush1.msra.mxu0 0.0
    %1304 = vmatprep.subr.mxu0 0.0
    %1305 = vmatpush1.msra.mxu0 0.0
    %1306 = vmatprep.subr.mxu0 0.0
    %1307 = vmatpush1.msra.mxu0 0.0
    %1308 = vmatprep.subr.mxu0 0.0
    %1309 = vmatpush1.msra.mxu0 0.0
    %1310 = vmatprep.subr.mxu0 0.0
    %1311 = vmatpush1.msra.mxu0 0.0
    %1312 = vmatprep.subr.mxu0 0.0
    %1313 = vmatpush1.msra.mxu0 0.0
    %1314 = vmatprep.mubr.f32.mxu0 0.0
    %1315 = vmatmul.mubr.f32.gmra.mrb[0].mxu0 %v1248
    %v1316 = vpop.f32.mrb[0].mxu0
    %v1317 = vadd.f32 0.0, %v1316
    %v1318 = vpop.f32.mrb[0].mxu0
    %1319 = vdwg.mxu0
    %1320 = vrot.lane.b32.xlu0 %v202, 48
    %v1321 = vpop.permute.xlu0 %1320
    %v1324 = vsel %vm220, %v1243, 0
    %1326 = vmatprep.subr.mxu0 0.0
    %1327 = vmatpush1.msra.mxu0 %v1321
    %1328 = vmatprep.subr.mxu0 0.0
    %1329 = vmatpush1.msra.mxu0 0.0
    %1330 = vmatprep.subr.mxu0 0.0
    %1331 = vmatpush1.msra.mxu0 0.0
    %1332 = vmatprep.subr.mxu0 0.0
    %1333 = vmatpush1.msra.mxu0 0.0
    %1334 = vmatprep.subr.mxu0 0.0
    %1335 = vmatpush1.msra.mxu0 0.0
    %1336 = vmatprep.subr.mxu0 0.0
    %1337 = vmatpush1.msra.mxu0 0.0
    %1338 = vmatprep.subr.mxu0 0.0
    %1339 = vmatpush1.msra.mxu0 0.0
    %1340 = vmatprep.subr.mxu0 0.0
    %1341 = vmatpush1.msra.mxu0 0.0
    %1342 = vmatprep.subr.mxu0 0.0
    %1343 = vmatpush1.msra.mxu0 0.0
    %1344 = vmatprep.subr.mxu0 0.0
    %1345 = vmatpush1.msra.mxu0 0.0
    %1346 = vmatprep.subr.mxu0 0.0
    %1347 = vmatpush1.msra.mxu0 0.0
    %1348 = vmatprep.subr.mxu0 0.0
    %1349 = vmatpush1.msra.mxu0 0.0
    %1350 = vmatprep.subr.mxu0 0.0
    %1351 = vmatpush1.msra.mxu0 0.0
    %1352 = vmatprep.subr.mxu0 0.0
    %1353 = vmatpush1.msra.mxu0 0.0
    %1354 = vmatprep.subr.mxu0 0.0
    %1355 = vmatpush1.msra.mxu0 0.0
    %1356 = vmatprep.subr.mxu0 0.0
    %1357 = vmatpush1.msra.mxu0 0.0
    %1358 = vmatprep.subr.mxu0 0.0
    %1359 = vmatpush1.msra.mxu0 0.0
    %1360 = vmatprep.subr.mxu0 0.0
    %1361 = vmatpush1.msra.mxu0 0.0
    %1362 = vmatprep.subr.mxu0 0.0
    %1363 = vmatpush1.msra.mxu0 0.0
    %1364 = vmatprep.subr.mxu0 0.0
    %1365 = vmatpush1.msra.mxu0 0.0
    %1366 = vmatprep.subr.mxu0 0.0
    %1367 = vmatpush1.msra.mxu0 0.0
    %1368 = vmatprep.subr.mxu0 0.0
    %1369 = vmatpush1.msra.mxu0 0.0
    %1370 = vmatprep.subr.mxu0 0.0
    %1371 = vmatpush1.msra.mxu0 0.0
    %1372 = vmatprep.subr.mxu0 0.0
    %1373 = vmatpush1.msra.mxu0 0.0
    %1374 = vmatprep.subr.mxu0 0.0
    %1375 = vmatpush1.msra.mxu0 0.0
    %1376 = vmatprep.subr.mxu0 0.0
    %1377 = vmatpush1.msra.mxu0 0.0
    %1378 = vmatprep.subr.mxu0 0.0
    %1379 = vmatpush1.msra.mxu0 0.0
    %1380 = vmatprep.subr.mxu0 0.0
    %1381 = vmatpush1.msra.mxu0 0.0
    %1382 = vmatprep.subr.mxu0 0.0
    %1383 = vmatpush1.msra.mxu0 0.0
    %1384 = vmatprep.subr.mxu0 0.0
    %1385 = vmatpush1.msra.mxu0 0.0
    %1386 = vmatprep.subr.mxu0 0.0
    %1387 = vmatpush1.msra.mxu0 0.0
    %1388 = vmatprep.subr.mxu0 0.0
    %1389 = vmatpush1.msra.mxu0 0.0
    %1390 = vmatprep.mubr.f32.mxu0 0.0
    %1391 = vmatmul.mubr.f32.gmra.mrb[0].mxu0 %v1324
    %v1392 = vpop.f32.mrb[0].mxu0
    %v1393 = vadd.f32 0.0, %v1392
    %v1394 = vpop.f32.mrb[0].mxu0
    %1395 = vdwg.mxu0
    %v1397 = vsel %vm220, %v1317, 0
    %v1400 = vsel %vm220, %v1393, 0
    %1402 = vmatprep.subr.mxu0 0.0
    %1403 = vmatpush1.msra.mxu0 %v207
    %1404 = vmatprep.subr.mxu0 0.0
    %1405 = vmatpush1.msra.mxu0 0.0
    %1406 = vmatprep.subr.mxu0 0.0
    %1407 = vmatpush1.msra.mxu0 0.0
    %1408 = vmatprep.subr.mxu0 0.0
    %1409 = vmatpush1.msra.mxu0 0.0
    %1410 = vmatprep.subr.mxu0 0.0
    %1411 = vmatpush1.msra.mxu0 0.0
    %1412 = vmatprep.subr.mxu0 0.0
    %1413 = vmatpush1.msra.mxu0 0.0
    %1414 = vmatprep.subr.mxu0 0.0
    %1415 = vmatpush1.msra.mxu0 0.0
    %1416 = vmatprep.subr.mxu0 0.0
    %1417 = vmatpush1.msra.mxu0 0.0
    %1418 = vmatprep.subr.mxu0 0.0
    %1419 = vmatpush1.msra.mxu0 0.0
    %1420 = vmatprep.subr.mxu0 0.0
    %1421 = vmatpush1.msra.mxu0 0.0
    %1422 = vmatprep.subr.mxu0 0.0
    %1423 = vmatpush1.msra.mxu0 0.0
    %1424 = vmatprep.subr.mxu0 0.0
    %1425 = vmatpush1.msra.mxu0 0.0
    %1426 = vmatprep.subr.mxu0 0.0
    %1427 = vmatpush1.msra.mxu0 0.0
    %1428 = vmatprep.subr.mxu0 0.0
    %1429 = vmatpush1.msra.mxu0 0.0
    %1430 = vmatprep.subr.mxu0 0.0
    %1431 = vmatpush1.msra.mxu0 0.0
    %1432 = vmatprep.subr.mxu0 0.0
    %1433 = vmatpush1.msra.mxu0 0.0
    %1434 = vmatprep.subr.mxu0 0.0
    %1435 = vmatpush1.msra.mxu0 0.0
    %1436 = vmatprep.subr.mxu0 0.0
    %1437 = vmatpush1.msra.mxu0 0.0
    %1438 = vmatprep.subr.mxu0 0.0
    %1439 = vmatpush1.msra.mxu0 0.0
    %1440 = vmatprep.subr.mxu0 0.0
    %1441 = vmatpush1.msra.mxu0 0.0
    %1442 = vmatprep.subr.mxu0 0.0
    %1443 = vmatpush1.msra.mxu0 0.0
    %1444 = vmatprep.subr.mxu0 0.0
    %1445 = vmatpush1.msra.mxu0 0.0
    %1446 = vmatprep.subr.mxu0 0.0
    %1447 = vmatpush1.msra.mxu0 0.0
    %1448 = vmatprep.subr.mxu0 0.0
    %1449 = vmatpush1.msra.mxu0 0.0
    %1450 = vmatprep.subr.mxu0 0.0
    %1451 = vmatpush1.msra.mxu0 0.0
    %1452 = vmatprep.subr.mxu0 0.0
    %1453 = vmatpush1.msra.mxu0 0.0
    %1454 = vmatprep.subr.mxu0 0.0
    %1455 = vmatpush1.msra.mxu0 0.0
    %1456 = vmatprep.subr.mxu0 0.0
    %1457 = vmatpush1.msra.mxu0 0.0
    %1458 = vmatprep.subr.mxu0 0.0
    %1459 = vmatpush1.msra.mxu0 0.0
    %1460 = vmatprep.subr.mxu0 0.0
    %1461 = vmatpush1.msra.mxu0 0.0
    %1462 = vmatprep.subr.mxu0 0.0
    %1463 = vmatpush1.msra.mxu0 0.0
    %1464 = vmatprep.subr.mxu0 0.0
    %1465 = vmatpush1.msra.mxu0 0.0
    %1466 = vmatprep.mubr.f32.mxu0 0.0
    %1467 = vmatmul.mubr.f32.gmra.mrb[0].mxu0 %v1397
    %v1468 = vpop.f32.mrb[0].mxu0
    %v1469 = vadd.f32 0.0, %v1468
    %v1470 = vpop.f32.mrb[0].mxu0
    %1471 = vmatprep.mubr.f32.mxu0 0.0
    %1472 = vmatmul.mubr.f32.gmra.mrb[0].mxu0 %v1400
    %v1473 = vpop.f32.mrb[0].mxu0
    %v1474 = vadd.f32 0.0, %v1473
    %v1475 = vpop.f32.mrb[0].mxu0
    %1476 = vdwg.mxu0
    %v1477 = vadd.f32 %v1060, %v1469
    %v1478 = vadd.f32 %v1061, %v1474
    %1479 = vrot.lane.b32.xlu0 %v197, 104
    %v1480 = vpop.permute.xlu0 %1479
    %1481 = vrot.lane.b32.xlu0 %v197, 72
    %v1482 = vpop.permute.xlu0 %1481
    %v1483 = vsel %vm220, %v1480, 0
    %v1485 = vsel %vm220, %v1482, 0
    %1487 = vmatprep.subr.mxu0 0.0
    %1488 = vmatpush1.xpose.msra.mxu0 %v1485
    %1489 = vmatprep.subr.mxu0 0.0
    %1490 = vmatpush1.xpose.msra.mxu0 0.0
    %1491 = vmatprep.subr.mxu0 0.0
    %1492 = vmatpush1.xpose.msra.mxu0 0.0
    %1493 = vmatprep.subr.mxu0 0.0
    %1494 = vmatpush1.xpose.msra.mxu0 0.0
    %1495 = vmatprep.subr.mxu0 0.0
    %1496 = vmatpush1.xpose.msra.mxu0 0.0
    %1497 = vmatprep.subr.mxu0 0.0
    %1498 = vmatpush1.xpose.msra.mxu0 0.0
    %1499 = vmatprep.subr.mxu0 0.0
    %1500 = vmatpush1.xpose.msra.mxu0 0.0
    %1501 = vmatprep.subr.mxu0 0.0
    %1502 = vmatpush1.xpose.msra.mxu0 0.0
    %1503 = vmatprep.subr.mxu0 0.0
    %1504 = vmatpush1.xpose.msra.mxu0 0.0
    %1505 = vmatprep.subr.mxu0 0.0
    %1506 = vmatpush1.xpose.msra.mxu0 0.0
    %1507 = vmatprep.subr.mxu0 0.0
    %1508 = vmatpush1.xpose.msra.mxu0 0.0
    %1509 = vmatprep.subr.mxu0 0.0
    %1510 = vmatpush1.xpose.msra.mxu0 0.0
    %1511 = vmatprep.subr.mxu0 0.0
    %1512 = vmatpush1.xpose.msra.mxu0 0.0
    %1513 = vmatprep.subr.mxu0 0.0
    %1514 = vmatpush1.xpose.msra.mxu0 0.0
    %1515 = vmatprep.subr.mxu0 0.0
    %1516 = vmatpush1.xpose.msra.mxu0 0.0
    %1517 = vmatprep.subr.mxu0 0.0
    %1518 = vmatpush1.xpose.msra.mxu0 0.0
    %1519 = vmatprep.subr.mxu0 0.0
    %1520 = vmatpush1.xpose.msra.mxu0 0.0
    %1521 = vmatprep.subr.mxu0 0.0
    %1522 = vmatpush1.xpose.msra.mxu0 0.0
    %1523 = vmatprep.subr.mxu0 0.0
    %1524 = vmatpush1.xpose.msra.mxu0 0.0
    %1525 = vmatprep.subr.mxu0 0.0
    %1526 = vmatpush1.xpose.msra.mxu0 0.0
    %1527 = vmatprep.subr.mxu0 0.0
    %1528 = vmatpush1.xpose.msra.mxu0 0.0
    %1529 = vmatprep.subr.mxu0 0.0
    %1530 = vmatpush1.xpose.msra.mxu0 0.0
    %1531 = vmatprep.subr.mxu0 0.0
    %1532 = vmatpush1.xpose.msra.mxu0 0.0
    %1533 = vmatprep.subr.mxu0 0.0
    %1534 = vmatpush1.xpose.msra.mxu0 0.0
    %1535 = vmatprep.subr.mxu0 0.0
    %1536 = vmatpush1.xpose.msra.mxu0 0.0
    %1537 = vmatprep.subr.mxu0 0.0
    %1538 = vmatpush1.xpose.msra.mxu0 0.0
    %1539 = vmatprep.subr.mxu0 0.0
    %1540 = vmatpush1.xpose.msra.mxu0 0.0
    %1541 = vmatprep.subr.mxu0 0.0
    %1542 = vmatpush1.xpose.msra.mxu0 0.0
    %1543 = vmatprep.subr.mxu0 0.0
    %1544 = vmatpush1.xpose.msra.mxu0 0.0
    %1545 = vmatprep.subr.mxu0 0.0
    %1546 = vmatpush1.xpose.msra.mxu0 0.0
    %1547 = vmatprep.subr.mxu0 0.0
    %1548 = vmatpush1.xpose.msra.mxu0 0.0
    %1549 = vmatprep.subr.mxu0 0.0
    %1550 = vmatpush1.xpose.msra.mxu0 0.0
    %1551 = vmatprep.mubr.f32.mxu0 0.0
    %1552 = vmatmul.mubr.f32.gmra.mrb[0].mxu0 %v1483
    %v1553 = vpop.f32.mrb[0].mxu0
    %v1554 = vadd.f32 0.0, %v1553
    %v1555 = vpop.f32.mrb[0].mxu0
    %1556 = vdwg.mxu0
    %1557 = vrot.lane.b32.xlu0 %v202, 104
    %v1558 = vpop.permute.xlu0 %1557
    %1559 = vrot.lane.b32.xlu0 %v202, 72
    %v1560 = vpop.permute.xlu0 %1559
    %v1561 = vsel %vm220, %v1558, 0
    %v1563 = vsel %vm220, %v1560, 0
    %1565 = vmatprep.subr.mxu0 0.0
    %1566 = vmatpush1.xpose.msra.mxu0 %v1563
    %1567 = vmatprep.subr.mxu0 0.0
    %1568 = vmatpush1.xpose.msra.mxu0 0.0
    %1569 = vmatprep.subr.mxu0 0.0
    %1570 = vmatpush1.xpose.msra.mxu0 0.0
    %1571 = vmatprep.subr.mxu0 0.0
    %1572 = vmatpush1.xpose.msra.mxu0 0.0
    %1573 = vmatprep.subr.mxu0 0.0
    %1574 = vmatpush1.xpose.msra.mxu0 0.0
    %1575 = vmatprep.subr.mxu0 0.0
    %1576 = vmatpush1.xpose.msra.mxu0 0.0
    %1577 = vmatprep.subr.mxu0 0.0
    %1578 = vmatpush1.xpose.msra.mxu0 0.0
    %1579 = vmatprep.subr.mxu0 0.0
    %1580 = vmatpush1.xpose.msra.mxu0 0.0
    %1581 = vmatprep.subr.mxu0 0.0
    %1582 = vmatpush1.xpose.msra.mxu0 0.0
    %1583 = vmatprep.subr.mxu0 0.0
    %1584 = vmatpush1.xpose.msra.mxu0 0.0
    %1585 = vmatprep.subr.mxu0 0.0
    %1586 = vmatpush1.xpose.msra.mxu0 0.0
    %1587 = vmatprep.subr.mxu0 0.0
    %1588 = vmatpush1.xpose.msra.mxu0 0.0
    %1589 = vmatprep.subr.mxu0 0.0
    %1590 = vmatpush1.xpose.msra.mxu0 0.0
    %1591 = vmatprep.subr.mxu0 0.0
    %1592 = vmatpush1.xpose.msra.mxu0 0.0
    %1593 = vmatprep.subr.mxu0 0.0
    %1594 = vmatpush1.xpose.msra.mxu0 0.0
    %1595 = vmatprep.subr.mxu0 0.0
    %1596 = vmatpush1.xpose.msra.mxu0 0.0
    %1597 = vmatprep.subr.mxu0 0.0
    %1598 = vmatpush1.xpose.msra.mxu0 0.0
    %1599 = vmatprep.subr.mxu0 0.0
    %1600 = vmatpush1.xpose.msra.mxu0 0.0
    %1601 = vmatprep.subr.mxu0 0.0
    %1602 = vmatpush1.xpose.msra.mxu0 0.0
    %1603 = vmatprep.subr.mxu0 0.0
    %1604 = vmatpush1.xpose.msra.mxu0 0.0
    %1605 = vmatprep.subr.mxu0 0.0
    %1606 = vmatpush1.xpose.msra.mxu0 0.0
    %1607 = vmatprep.subr.mxu0 0.0
    %1608 = vmatpush1.xpose.msra.mxu0 0.0
    %1609 = vmatprep.subr.mxu0 0.0
    %1610 = vmatpush1.xpose.msra.mxu0 0.0
    %1611 = vmatprep.subr.mxu0 0.0
    %1612 = vmatpush1.xpose.msra.mxu0 0.0
    %1613 = vmatprep.subr.mxu0 0.0
    %1614 = vmatpush1.xpose.msra.mxu0 0.0
    %1615 = vmatprep.subr.mxu0 0.0
    %1616 = vmatpush1.xpose.msra.mxu0 0.0
    %1617 = vmatprep.subr.mxu0 0.0
    %1618 = vmatpush1.xpose.msra.mxu0 0.0
    %1619 = vmatprep.subr.mxu0 0.0
    %1620 = vmatpush1.xpose.msra.mxu0 0.0
    %1621 = vmatprep.subr.mxu0 0.0
    %1622 = vmatpush1.xpose.msra.mxu0 0.0
    %1623 = vmatprep.subr.mxu0 0.0
    %1624 = vmatpush1.xpose.msra.mxu0 0.0
    %1625 = vmatprep.subr.mxu0 0.0
    %1626 = vmatpush1.xpose.msra.mxu0 0.0
    %1627 = vmatprep.subr.mxu0 0.0
    %1628 = vmatpush1.xpose.msra.mxu0 0.0
    %1629 = vmatprep.mubr.f32.mxu0 0.0
    %1630 = vmatmul.mubr.f32.gmra.mrb[0].mxu0 %v1561
    %v1631 = vpop.f32.mrb[0].mxu0
    %v1632 = vadd.f32 0.0, %v1631
    %v1633 = vpop.f32.mrb[0].mxu0
    %1634 = vdwg.mxu0
    %v1635 = vmul.f32 %v1554, 0.35355338
    %v1636 = vmul.f32 %v1632, 0.35355338
    %v1637 = vadd.f32 %v1635, %v379
    %v1638 = vadd.f32 %v1636, %v383
    %v1639 = vsel %vm220, %v1637, -inf
    %1640 = vmax.xlane.f32.xlu0 %v1639
    %v1641 = vpop.xlane.xlu0 %1640
    %v1642 = vsel %vm220, %v1638, -inf
    %1643 = vmax.xlane.f32.xlu0 %v1642
    %v1644 = vpop.xlane.xlu0 %1643
    %v1645 = vsub.f32 %v1637, %v1641
    %v1646 = vsub.f32 %v1638, %v1644
    %v1647 = vmul.f32 %v1645, 1.442695
    %v1648 = vpow.pop %v1647
    %v1649 = vmul.f32 %v1646, 1.442695
    %v1650 = vpow.pop %v1649
    %v1651 = vsel %vm220, %v1648, 0.0
    %1652 = vadd.xlane.f32.xlu0 %v1651
    %v1653 = vpop.xlane.xlu0 %1652
    %v1654 = vsel %vm220, %v1650, 0.0
    %1655 = vadd.xlane.f32.xlu0 %v1654
    %v1656 = vpop.xlane.xlu0 %1655
    %v1657 = vrcp.pop %v1653
    %v1658 = vmul.f32 %v1648, %v1657
    %v1659 = vrcp.pop %v1656
    %v1660 = vmul.f32 %v1650, %v1659
    %1661 = vrot.lane.b32.xlu0 %v197, 40
    %v1662 = vpop.permute.xlu0 %1661
    %v1665 = vsel %vm220, %v1658, 0
    %1667 = vmatprep.subr.mxu0 0.0
    %1668 = vmatpush1.msra.mxu0 %v1662
    %1669 = vmatprep.subr.mxu0 0.0
    %1670 = vmatpush1.msra.mxu0 0.0
    %1671 = vmatprep.subr.mxu0 0.0
    %1672 = vmatpush1.msra.mxu0 0.0
    %1673 = vmatprep.subr.mxu0 0.0
    %1674 = vmatpush1.msra.mxu0 0.0
    %1675 = vmatprep.subr.mxu0 0.0
    %1676 = vmatpush1.msra.mxu0 0.0
    %1677 = vmatprep.subr.mxu0 0.0
    %1678 = vmatpush1.msra.mxu0 0.0
    %1679 = vmatprep.subr.mxu0 0.0
    %1680 = vmatpush1.msra.mxu0 0.0
    %1681 = vmatprep.subr.mxu0 0.0
    %1682 = vmatpush1.msra.mxu0 0.0
    %1683 = vmatprep.subr.mxu0 0.0
    %1684 = vmatpush1.msra.mxu0 0.0
    %1685 = vmatprep.subr.mxu0 0.0
    %1686 = vmatpush1.msra.mxu0 0.0
    %1687 = vmatprep.subr.mxu0 0.0
    %1688 = vmatpush1.msra.mxu0 0.0
    %1689 = vmatprep.subr.mxu0 0.0
    %1690 = vmatpush1.msra.mxu0 0.0
    %1691 = vmatprep.subr.mxu0 0.0
    %1692 = vmatpush1.msra.mxu0 0.0
    %1693 = vmatprep.subr.mxu0 0.0
    %1694 = vmatpush1.msra.mxu0 0.0
    %1695 = vmatprep.subr.mxu0 0.0
    %1696 = vmatpush1.msra.mxu0 0.0
    %1697 = vmatprep.subr.mxu0 0.0
    %1698 = vmatpush1.msra.mxu0 0.0
    %1699 = vmatprep.subr.mxu0 0.0
    %1700 = vmatpush1.msra.mxu0 0.0
    %1701 = vmatprep.subr.mxu0 0.0
    %1702 = vmatpush1.msra.mxu0 0.0
    %1703 = vmatprep.subr.mxu0 0.0
    %1704 = vmatpush1.msra.mxu0 0.0
    %1705 = vmatprep.subr.mxu0 0.0
    %1706 = vmatpush1.msra.mxu0 0.0
    %1707 = vmatprep.subr.mxu0 0.0
    %1708 = vmatpush1.msra.mxu0 0.0
    %1709 = vmatprep.subr.mxu0 0.0
    %1710 = vmatpush1.msra.mxu0 0.0
    %1711 = vmatprep.subr.mxu0 0.0
    %1712 = vmatpush1.msra.mxu0 0.0
    %1713 = vmatprep.subr.mxu0 0.0
    %1714 = vmatpush1.msra.mxu0 0.0
    %1715 = vmatprep.subr.mxu0 0.0
    %1716 = vmatpush1.msra.mxu0 0.0
    %1717 = vmatprep.subr.mxu0 0.0
    %1718 = vmatpush1.msra.mxu0 0.0
    %1719 = vmatprep.subr.mxu0 0.0
    %1720 = vmatpush1.msra.mxu0 0.0
    %1721 = vmatprep.subr.mxu0 0.0
    %1722 = vmatpush1.msra.mxu0 0.0
    %1723 = vmatprep.subr.mxu0 0.0
    %1724 = vmatpush1.msra.mxu0 0.0
    %1725 = vmatprep.subr.mxu0 0.0
    %1726 = vmatpush1.msra.mxu0 0.0
    %1727 = vmatprep.subr.mxu0 0.0
    %1728 = vmatpush1.msra.mxu0 0.0
    %1729 = vmatprep.subr.mxu0 0.0
    %1730 = vmatpush1.msra.mxu0 0.0
    %1731 = vmatprep.mubr.f32.mxu0 0.0
    %1732 = vmatmul.mubr.f32.gmra.mrb[0].mxu0 %v1665
    %v1733 = vpop.f32.mrb[0].mxu0
    %v1734 = vadd.f32 0.0, %v1733
    %v1735 = vpop.f32.mrb[0].mxu0
    %1736 = vdwg.mxu0
    %1737 = vrot.lane.b32.xlu0 %v202, 40
    %v1738 = vpop.permute.xlu0 %1737
    %v1741 = vsel %vm220, %v1660, 0
    %1743 = vmatprep.subr.mxu0 0.0
    %1744 = vmatpush1.msra.mxu0 %v1738
    %1745 = vmatprep.subr.mxu0 0.0
    %1746 = vmatpush1.msra.mxu0 0.0
    %1747 = vmatprep.subr.mxu0 0.0
    %1748 = vmatpush1.msra.mxu0 0.0
    %1749 = vmatprep.subr.mxu0 0.0
    %1750 = vmatpush1.msra.mxu0 0.0
    %1751 = vmatprep.subr.mxu0 0.0
    %1752 = vmatpush1.msra.mxu0 0.0
    %1753 = vmatprep.subr.mxu0 0.0
    %1754 = vmatpush1.msra.mxu0 0.0
    %1755 = vmatprep.subr.mxu0 0.0
    %1756 = vmatpush1.msra.mxu0 0.0
    %1757 = vmatprep.subr.mxu0 0.0
    %1758 = vmatpush1.msra.mxu0 0.0
    %1759 = vmatprep.subr.mxu0 0.0
    %1760 = vmatpush1.msra.mxu0 0.0
    %1761 = vmatprep.subr.mxu0 0.0
    %1762 = vmatpush1.msra.mxu0 0.0
    %1763 = vmatprep.subr.mxu0 0.0
    %1764 = vmatpush1.msra.mxu0 0.0
    %1765 = vmatprep.subr.mxu0 0.0
    %1766 = vmatpush1.msra.mxu0 0.0
    %1767 = vmatprep.subr.mxu0 0.0
    %1768 = vmatpush1.msra.mxu0 0.0
    %1769 = vmatprep.subr.mxu0 0.0
    %1770 = vmatpush1.msra.mxu0 0.0
    %1771 = vmatprep.subr.mxu0 0.0
    %1772 = vmatpush1.msra.mxu0 0.0
    %1773 = vmatprep.subr.mxu0 0.0
    %1774 = vmatpush1.msra.mxu0 0.0
    %1775 = vmatprep.subr.mxu0 0.0
    %1776 = vmatpush1.msra.mxu0 0.0
    %1777 = vmatprep.subr.mxu0 0.0
    %1778 = vmatpush1.msra.mxu0 0.0
    %1779 = vmatprep.subr.mxu0 0.0
    %1780 = vmatpush1.msra.mxu0 0.0
    %1781 = vmatprep.subr.mxu0 0.0
    %1782 = vmatpush1.msra.mxu0 0.0
    %1783 = vmatprep.subr.mxu0 0.0
    %1784 = vmatpush1.msra.mxu0 0.0
    %1785 = vmatprep.subr.mxu0 0.0
    %1786 = vmatpush1.msra.mxu0 0.0
    %1787 = vmatprep.subr.mxu0 0.0
    %1788 = vmatpush1.msra.mxu0 0.0
    %1789 = vmatprep.subr.mxu0 0.0
    %1790 = vmatpush1.msra.mxu0 0.0
    %1791 = vmatprep.subr.mxu0 0.0
    %1792 = vmatpush1.msra.mxu0 0.0
    %1793 = vmatprep.subr.mxu0 0.0
    %1794 = vmatpush1.msra.mxu0 0.0
    %1795 = vmatprep.subr.mxu0 0.0
    %1796 = vmatpush1.msra.mxu0 0.0
    %1797 = vmatprep.subr.mxu0 0.0
    %1798 = vmatpush1.msra.mxu0 0.0
    %1799 = vmatprep.subr.mxu0 0.0
    %1800 = vmatpush1.msra.mxu0 0.0
    %1801 = vmatprep.subr.mxu0 0.0
    %1802 = vmatpush1.msra.mxu0 0.0
    %1803 = vmatprep.subr.mxu0 0.0
    %1804 = vmatpush1.msra.mxu0 0.0
    %1805 = vmatprep.subr.mxu0 0.0
    %1806 = vmatpush1.msra.mxu0 0.0
    %1807 = vmatprep.mubr.f32.mxu0 0.0
    %1808 = vmatmul.mubr.f32.gmra.mrb[0].mxu0 %v1741
    %v1809 = vpop.f32.mrb[0].mxu0
    %v1810 = vadd.f32 0.0, %v1809
    %v1811 = vpop.f32.mrb[0].mxu0
    %1812 = vdwg.mxu0
    %v1814 = vsel %vm220, %v1734, 0
    %v1817 = vsel %vm220, %v1810, 0
    %1819 = vmatprep.subr.mxu0 0.0
    %1820 = vmatpush1.msra.mxu0 %v208
    %1821 = vmatprep.subr.mxu0 0.0
    %1822 = vmatpush1.msra.mxu0 0.0
    %1823 = vmatprep.subr.mxu0 0.0
    %1824 = vmatpush1.msra.mxu0 0.0
    %1825 = vmatprep.subr.mxu0 0.0
    %1826 = vmatpush1.msra.mxu0 0.0
    %1827 = vmatprep.subr.mxu0 0.0
    %1828 = vmatpush1.msra.mxu0 0.0
    %1829 = vmatprep.subr.mxu0 0.0
    %1830 = vmatpush1.msra.mxu0 0.0
    %1831 = vmatprep.subr.mxu0 0.0
    %1832 = vmatpush1.msra.mxu0 0.0
    %1833 = vmatprep.subr.mxu0 0.0
    %1834 = vmatpush1.msra.mxu0 0.0
    %1835 = vmatprep.subr.mxu0 0.0
    %1836 = vmatpush1.msra.mxu0 0.0
    %1837 = vmatprep.subr.mxu0 0.0
    %1838 = vmatpush1.msra.mxu0 0.0
    %1839 = vmatprep.subr.mxu0 0.0
    %1840 = vmatpush1.msra.mxu0 0.0
    %1841 = vmatprep.subr.mxu0 0.0
    %1842 = vmatpush1.msra.mxu0 0.0
    %1843 = vmatprep.subr.mxu0 0.0
    %1844 = vmatpush1.msra.mxu0 0.0
    %1845 = vmatprep.subr.mxu0 0.0
    %1846 = vmatpush1.msra.mxu0 0.0
    %1847 = vmatprep.subr.mxu0 0.0
    %1848 = vmatpush1.msra.mxu0 0.0
    %1849 = vmatprep.subr.mxu0 0.0
    %1850 = vmatpush1.msra.mxu0 0.0
    %1851 = vmatprep.subr.mxu0 0.0
    %1852 = vmatpush1.msra.mxu0 0.0
    %1853 = vmatprep.subr.mxu0 0.0
    %1854 = vmatpush1.msra.mxu0 0.0
    %1855 = vmatprep.subr.mxu0 0.0
    %1856 = vmatpush1.msra.mxu0 0.0
    %1857 = vmatprep.subr.mxu0 0.0
    %1858 = vmatpush1.msra.mxu0 0.0
    %1859 = vmatprep.subr.mxu0 0.0
    %1860 = vmatpush1.msra.mxu0 0.0
    %1861 = vmatprep.subr.mxu0 0.0
    %1862 = vmatpush1.msra.mxu0 0.0
    %1863 = vmatprep.subr.mxu0 0.0
    %1864 = vmatpush1.msra.mxu0 0.0
    %1865 = vmatprep.subr.mxu0 0.0
    %1866 = vmatpush1.msra.mxu0 0.0
    %1867 = vmatprep.subr.mxu0 0.0
    %1868 = vmatpush1.msra.mxu0 0.0
    %1869 = vmatprep.subr.mxu0 0.0
    %1870 = vmatpush1.msra.mxu0 0.0
    %1871 = vmatprep.subr.mxu0 0.0
    %1872 = vmatpush1.msra.mxu0 0.0
    %1873 = vmatprep.subr.mxu0 0.0
    %1874 = vmatpush1.msra.mxu0 0.0
    %1875 = vmatprep.subr.mxu0 0.0
    %1876 = vmatpush1.msra.mxu0 0.0
    %1877 = vmatprep.subr.mxu0 0.0
    %1878 = vmatpush1.msra.mxu0 0.0
    %1879 = vmatprep.subr.mxu0 0.0
    %1880 = vmatpush1.msra.mxu0 0.0
    %1881 = vmatprep.subr.mxu0 0.0
    %1882 = vmatpush1.msra.mxu0 0.0
    %1883 = vmatprep.mubr.f32.mxu0 0.0
    %1884 = vmatmul.mubr.f32.gmra.mrb[0].mxu0 %v1814
    %v1885 = vpop.f32.mrb[0].mxu0
    %v1886 = vadd.f32 0.0, %v1885
    %v1887 = vpop.f32.mrb[0].mxu0
    %1888 = vmatprep.mubr.f32.mxu0 0.0
    %1889 = vmatmul.mubr.f32.gmra.mrb[0].mxu0 %v1817
    %v1890 = vpop.f32.mrb[0].mxu0
    %v1891 = vadd.f32 0.0, %v1890
    %v1892 = vpop.f32.mrb[0].mxu0
    %1893 = vdwg.mxu0
    %v1894 = vadd.f32 %v1477, %v1886
    %v1895 = vadd.f32 %v1478, %v1891
    %v1896 = vadd.f32 %v1894, %v109
    %v1897 = vadd.f32 %v1895, %v110
    %v1898 = vld [vmem:[%s8] sm:$0x1]
    %v1899 = vld [vmem:[%s9] sm:$0x1]
    %v1900 = vsel %vm67, %v1896, 0.0
    %1901 = vadd.xlane.f32.xlu0 %v1900
    %v1902 = vpop.xlane.xlu0 %1901
    %v1903 = vsel %vm67, %v1897, 0.0
    %1904 = vadd.xlane.f32.xlu0 %v1903
    %v1905 = vpop.xlane.xlu0 %1904
    %v1906 = vmul.f32 %v1902, %v74
    %v1907 = vmul.f32 %v1905, %v74
    %v1908 = vsub.f32 %v1896, %v1906
    %v1909 = vsub.f32 %v1897, %v1907
    %v1910 = vmul.f32 %v1908, %v1908
    %v1911 = vmul.f32 %v1909, %v1909
    %v1912 = vsel %vm67, %v1910, 0.0
    %1913 = vadd.xlane.f32.xlu0 %v1912
    %v1914 = vpop.xlane.xlu0 %1913
    %v1915 = vsel %vm67, %v1911, 0.0
    %1916 = vadd.xlane.f32.xlu0 %v1915
    %v1917 = vpop.xlane.xlu0 %1916
    %v1918 = vmul.f32 %v1914, %v74
    %v1919 = vmul.f32 %v1917, %v74
    %v1920 = vadd.f32 %v1918, 1e-12
    %v1921 = vadd.f32 %v1919, 1e-12
    %v1922 = vrsqrt.pop %v1920
    %v1923 = vrsqrt.pop %v1921
    %v1924 = vmul.f32 %v1908, %v1922
    %v1925 = vmul.f32 %v1909, %v1923
    %v1927 = vlaneseq
    %v1928 = vshrl.u32 %v1927, 7
    %v1929 = vsub.s32 0, %v1928
    %v1930 = vrot.slane %v1898, %v1929
    %v1932 = vmul.f32 %v1924, %v1930
    %v1933 = vmul.f32 %v1925, %v1930
    %v1935 = vlaneseq
    %v1936 = vshrl.u32 %v1935, 7
    %v1937 = vsub.s32 0, %v1936
    %v1938 = vrot.slane %v1899, %v1937
    %v1940 = vadd.f32 %v1932, %v1938
    %v1941 = vadd.f32 %v1933, %v1938
    %v1942 = vld [vmem:[%s10] sm:$0xff]
    %v1943 = vld [vmem:[%s10 + $0x8] sm:$0xff]
    %v1944 = vld [vmem:[%s10 + $0x10] sm:$0xff]
    %v1945 = vld [vmem:[%s10 + $0x18] sm:$0xff]
    %v1946 = vld [vmem:[%s11] sm:$0x1]
    %v1948 = vlaneseq
    %v1949 = vshrl.u32 %v1948, 7
    %v1950 = vsub.s32 0, %v1949
    %v1951 = vrot.slane %v1946, %v1950
    %v1954 = vsel %vm67, %v1940, 0
    %v1957 = vsel %vm67, %v1941, 0
    %1959 = vmatprep.subr.mxu0 0.0
    %1960 = vmatpush1.msra.mxu0 %v1942
    %1961 = vmatprep.subr.mxu0 0.0
    %1962 = vmatpush1.msra.mxu0 %v1943
    %1963 = vmatprep.subr.mxu0 0.0
    %1964 = vmatpush1.msra.mxu0 %v1944
    %1965 = vmatprep.subr.mxu0 0.0
    %1966 = vmatpush1.msra.mxu0 %v1945
    %1967 = vmatprep.subr.mxu0 0.0
    %1968 = vmatpush1.msra.mxu0 0.0
    %1969 = vmatprep.subr.mxu0 0.0
    %1970 = vmatpush1.msra.mxu0 0.0
    %1971 = vmatprep.subr.mxu0 0.0
    %1972 = vmatpush1.msra.mxu0 0.0
    %1973 = vmatprep.subr.mxu0 0.0
    %1974 = vmatpush1.msra.mxu0 0.0
    %1975 = vmatprep.subr.mxu0 0.0
    %1976 = vmatpush1.msra.mxu0 0.0
    %1977 = vmatprep.subr.mxu0 0.0
    %1978 = vmatpush1.msra.mxu0 0.0
    %1979 = vmatprep.subr.mxu0 0.0
    %1980 = vmatpush1.msra.mxu0 0.0
    %1981 = vmatprep.subr.mxu0 0.0
    %1982 = vmatpush1.msra.mxu0 0.0
    %1983 = vmatprep.subr.mxu0 0.0
    %1984 = vmatpush1.msra.mxu0 0.0
    %1985 = vmatprep.subr.mxu0 0.0
    %1986 = vmatpush1.msra.mxu0 0.0
    %1987 = vmatprep.subr.mxu0 0.0
    %1988 = vmatpush1.msra.mxu0 0.0
    %1989 = vmatprep.subr.mxu0 0.0
    %1990 = vmatpush1.msra.mxu0 0.0
    %1991 = vmatprep.subr.mxu0 0.0
    %1992 = vmatpush1.msra.mxu0 0.0
    %1993 = vmatprep.subr.mxu0 0.0
    %1994 = vmatpush1.msra.mxu0 0.0
    %1995 = vmatprep.subr.mxu0 0.0
    %1996 = vmatpush1.msra.mxu0 0.0
    %1997 = vmatprep.subr.mxu0 0.0
    %1998 = vmatpush1.msra.mxu0 0.0
    %1999 = vmatprep.subr.mxu0 0.0
    %2000 = vmatpush1.msra.mxu0 0.0
    %2001 = vmatprep.subr.mxu0 0.0
    %2002 = vmatpush1.msra.mxu0 0.0
    %2003 = vmatprep.subr.mxu0 0.0
    %2004 = vmatpush1.msra.mxu0 0.0
    %2005 = vmatprep.subr.mxu0 0.0
    %2006 = vmatpush1.msra.mxu0 0.0
    %2007 = vmatprep.subr.mxu0 0.0
    %2008 = vmatpush1.msra.mxu0 0.0
    %2009 = vmatprep.subr.mxu0 0.0
    %2010 = vmatpush1.msra.mxu0 0.0
    %2011 = vmatprep.subr.mxu0 0.0
    %2012 = vmatpush1.msra.mxu0 0.0
    %2013 = vmatprep.subr.mxu0 0.0
    %2014 = vmatpush1.msra.mxu0 0.0
    %2015 = vmatprep.subr.mxu0 0.0
    %2016 = vmatpush1.msra.mxu0 0.0
    %2017 = vmatprep.subr.mxu0 0.0
    %2018 = vmatpush1.msra.mxu0 0.0
    %2019 = vmatprep.subr.mxu0 0.0
    %2020 = vmatpush1.msra.mxu0 0.0
    %2021 = vmatprep.subr.mxu0 0.0
    %2022 = vmatpush1.msra.mxu0 0.0
    %2023 = vmatprep.mubr.f32.mxu0 0.0
    %2024 = vmatmul.mubr.f32.gmra.mrb[0].mxu0 %v1954
    %v2025 = vpop.f32.mrb[0].mxu0
    %v2026 = vadd.f32 %v1951, %v2025
    %v2027 = vpop.f32.mrb[0].mxu0
    %2028 = vmatprep.mubr.f32.mxu0 0.0
    %2029 = vmatmul.mubr.f32.gmra.mrb[0].mxu0 %v1957
    %v2030 = vpop.f32.mrb[0].mxu0
    %v2031 = vadd.f32 %v1951, %v2030
    %v2032 = vpop.f32.mrb[0].mxu0
    %2033 = vdwg.mxu0
    %v2034 = vmul.f32 %v2026, 0.5
    %v2035 = vmul.f32 %v2031, 0.5
    %v2036 = vmul.f32 %v2026, 0.044715
    %v2037 = vmul.f32 %v2031, 0.044715
    %v2038 = vmul.f32 %v2036, %v2026
    %v2039 = vmul.f32 %v2037, %v2031
    %v2040 = vmul.f32 %v2038, %v2026
    %v2041 = vmul.f32 %v2039, %v2031
    %v2042 = vadd.f32 %v2026, %v2040
    %v2043 = vadd.f32 %v2031, %v2041
    %v2044 = vmul.f32 %v2042, 0.7978846
    %v2045 = vmul.f32 %v2043, 0.7978846
    %v2046 = vtanh.pop %v2044
    %v2047 = vtanh.pop %v2045
    %v2048 = vadd.f32 %v2046, 1.0
    %v2049 = vadd.f32 %v2047, 1.0
    %v2050 = vmul.f32 %v2034, %v2048
    %v2051 = vmul.f32 %v2035, %v2049
    %v2052 = vld [vmem:[%s12] sm:$0xff]
    %v2053 = vld [vmem:[%s12 + $0x8] sm:$0xff]
    %v2054 = vld [vmem:[%s12 + $0x10] sm:$0xff]
    %v2055 = vld [vmem:[%s12 + $0x18] sm:$0xff]
    %v2056 = vld [vmem:[%s12 + $0x20] sm:$0xff]
    %v2057 = vld [vmem:[%s12 + $0x28] sm:$0xff]
    %v2058 = vld [vmem:[%s12 + $0x30] sm:$0xff]
    %v2059 = vld [vmem:[%s12 + $0x38] sm:$0xff]
    %v2060 = vld [vmem:[%s13] sm:$0x1]
    %v2062 = vlaneseq
    %v2063 = vshrl.u32 %v2062, 7
    %v2064 = vsub.s32 0, %v2063
    %v2065 = vrot.slane %v2060, %v2064
    %vm2067 = vcmask 523264
    %v2069 = vsel %vm2067, %v2050, 0
    %v2072 = vsel %vm2067, %v2051, 0
    %2074 = vmatprep.subr.mxu0 0.0
    %2075 = vmatpush1.msra.mxu0 %v2052
    %2076 = vmatprep.subr.mxu0 0.0
    %2077 = vmatpush1.msra.mxu0 %v2053
    %2078 = vmatprep.subr.mxu0 0.0
    %2079 = vmatpush1.msra.mxu0 %v2054
    %2080 = vmatprep.subr.mxu0 0.0
    %2081 = vmatpush1.msra.mxu0 %v2055
    %2082 = vmatprep.subr.mxu0 0.0
    %2083 = vmatpush1.msra.mxu0 %v2056
    %2084 = vmatprep.subr.mxu0 0.0
    %2085 = vmatpush1.msra.mxu0 %v2057
    %2086 = vmatprep.subr.mxu0 0.0
    %2087 = vmatpush1.msra.mxu0 %v2058
    %2088 = vmatprep.subr.mxu0 0.0
    %2089 = vmatpush1.msra.mxu0 %v2059
    %2090 = vmatprep.subr.mxu0 0.0
    %2091 = vmatpush1.msra.mxu0 0.0
    %2092 = vmatprep.subr.mxu0 0.0
    %2093 = vmatpush1.msra.mxu0 0.0
    %2094 = vmatprep.subr.mxu0 0.0
    %2095 = vmatpush1.msra.mxu0 0.0
    %2096 = vmatprep.subr.mxu0 0.0
    %2097 = vmatpush1.msra.mxu0 0.0
    %2098 = vmatprep.subr.mxu0 0.0
    %2099 = vmatpush1.msra.mxu0 0.0
    %2100 = vmatprep.subr.mxu0 0.0
    %2101 = vmatpush1.msra.mxu0 0.0
    %2102 = vmatprep.subr.mxu0 0.0
    %2103 = vmatpush1.msra.mxu0 0.0
    %2104 = vmatprep.subr.mxu0 0.0
    %2105 = vmatpush1.msra.mxu0 0.0
    %2106 = vmatprep.subr.mxu0 0.0
    %2107 = vmatpush1.msra.mxu0 0.0
    %2108 = vmatprep.subr.mxu0 0.0
    %2109 = vmatpush1.msra.mxu0 0.0
    %2110 = vmatprep.subr.mxu0 0.0
    %2111 = vmatpush1.msra.mxu0 0.0
    %2112 = vmatprep.subr.mxu0 0.0
    %2113 = vmatpush1.msra.mxu0 0.0
    %2114 = vmatprep.subr.mxu0 0.0
    %2115 = vmatpush1.msra.mxu0 0.0
    %2116 = vmatprep.subr.mxu0 0.0
    %2117 = vmatpush1.msra.mxu0 0.0
    %2118 = vmatprep.subr.mxu0 0.0
    %2119 = vmatpush1.msra.mxu0 0.0
    %2120 = vmatprep.subr.mxu0 0.0
    %2121 = vmatpush1.msra.mxu0 0.0
    %2122 = vmatprep.subr.mxu0 0.0
    %2123 = vmatpush1.msra.mxu0 0.0
    %2124 = vmatprep.subr.mxu0 0.0
    %2125 = vmatpush1.msra.mxu0 0.0
    %2126 = vmatprep.subr.mxu0 0.0
    %2127 = vmatpush1.msra.mxu0 0.0
    %2128 = vmatprep.subr.mxu0 0.0
    %2129 = vmatpush1.msra.mxu0 0.0
    %2130 = vmatprep.subr.mxu0 0.0
    %2131 = vmatpush1.msra.mxu0 0.0
    %2132 = vmatprep.subr.mxu0 0.0
    %2133 = vmatpush1.msra.mxu0 0.0
    %2134 = vmatprep.subr.mxu0 0.0
    %2135 = vmatpush1.msra.mxu0 0.0
    %2136 = vmatprep.subr.mxu0 0.0
    %2137 = vmatpush1.msra.mxu0 0.0
    %2138 = vmatprep.mubr.f32.mxu0 0.0
    %2139 = vmatmul.mubr.f32.gmra.mrb[0].mxu0 %v2069
    %v2140 = vpop.f32.mrb[0].mxu0
    %v2141 = vadd.f32 %v2065, %v2140
    %v2142 = vpop.f32.mrb[0].mxu0
    %2143 = vmatprep.mubr.f32.mxu0 0.0
    %2144 = vmatmul.mubr.f32.gmra.mrb[0].mxu0 %v2072
    %v2145 = vpop.f32.mrb[0].mxu0
    %v2146 = vadd.f32 %v2065, %v2145
    %v2147 = vpop.f32.mrb[0].mxu0
    %2148 = vdwg.mxu0
    %v2149 = vadd.f32 %v2141, %v1940
    %v2150 = vadd.f32 %v2146, %v1941
    %v2151 = vld [vmem:[%s14] sm:$0x1]
    %v2152 = vld [vmem:[%s15] sm:$0x1]
    %v2153 = vsel %vm67, %v2149, 0.0
    %2154 = vadd.xlane.f32.xlu0 %v2153
    %v2155 = vpop.xlane.xlu0 %2154
    %v2156 = vsel %vm67, %v2150, 0.0
    %2157 = vadd.xlane.f32.xlu0 %v2156
    %v2158 = vpop.xlane.xlu0 %2157
    %v2159 = vmul.f32 %v2155, %v74
    %v2160 = vmul.f32 %v2158, %v74
    %v2161 = vsub.f32 %v2149, %v2159
    %v2162 = vsub.f32 %v2150, %v2160
    %v2163 = vmul.f32 %v2161, %v2161
    %v2164 = vmul.f32 %v2162, %v2162
    %v2165 = vsel %vm67, %v2163, 0.0
    %2166 = vadd.xlane.f32.xlu0 %v2165
    %v2167 = vpop.xlane.xlu0 %2166
    %v2168 = vsel %vm67, %v2164, 0.0
    %2169 = vadd.xlane.f32.xlu0 %v2168
    %v2170 = vpop.xlane.xlu0 %2169
    %v2171 = vmul.f32 %v2167, %v74
    %v2172 = vmul.f32 %v2170, %v74
    %v2173 = vadd.f32 %v2171, 1e-12
    %v2174 = vadd.f32 %v2172, 1e-12
    %v2175 = vrsqrt.pop %v2173
    %v2176 = vrsqrt.pop %v2174
    %v2177 = vmul.f32 %v2161, %v2175
    %v2178 = vmul.f32 %v2162, %v2176
    %v2180 = vlaneseq
    %v2181 = vshrl.u32 %v2180, 7
    %v2182 = vsub.s32 0, %v2181
    %v2183 = vrot.slane %v2151, %v2182
    %v2185 = vmul.f32 %v2177, %v2183
    %v2186 = vmul.f32 %v2178, %v2183
    %v2188 = vlaneseq
    %v2189 = vshrl.u32 %v2188, 7
    %v2190 = vsub.s32 0, %v2189
    %v2191 = vrot.slane %v2152, %v2190
    %v2193 = vadd.f32 %v2185, %v2191
    %v2194 = vadd.f32 %v2186, %v2191
    %s2195 = scalar_lea.vmem %s4, 32
    %v2196 = vld [vmem:[%s2195] sm:$0xff]
    %v2197 = vld [vmem:[%s2195 + $0x8] sm:$0xff]
    %v2198 = vld [vmem:[%s2195 + $0x10] sm:$0xff]
    %v2199 = vld [vmem:[%s2195 + $0x18] sm:$0xff]
    %s2200 = scalar_lea.vmem %s5, 1
    %v2201 = vld [vmem:[%s2200] sm:$0x1]
    %v2203 = vlaneseq
    %v2204 = vshrl.u32 %v2203, 7
    %v2205 = vsub.s32 0, %v2204
    %v2206 = vrot.slane %v2201, %v2205
    %v2209 = vsel %vm67, %v2193, 0
    %v2212 = vsel %vm67, %v2194, 0
    %2214 = vmatprep.subr.mxu0 0.0
    %2215 = vmatpush1.msra.mxu0 %v2196
    %2216 = vmatprep.subr.mxu0 0.0
    %2217 = vmatpush1.msra.mxu0 %v2197
    %2218 = vmatprep.subr.mxu0 0.0
    %2219 = vmatpush1.msra.mxu0 %v2198
    %2220 = vmatprep.subr.mxu0 0.0
    %2221 = vmatpush1.msra.mxu0 %v2199
    %2222 = vmatprep.subr.mxu0 0.0
    %2223 = vmatpush1.msra.mxu0 0.0
    %2224 = vmatprep.subr.mxu0 0.0
    %2225 = vmatpush1.msra.mxu0 0.0
    %2226 = vmatprep.subr.mxu0 0.0
    %2227 = vmatpush1.msra.mxu0 0.0
    %2228 = vmatprep.subr.mxu0 0.0
    %2229 = vmatpush1.msra.mxu0 0.0
    %2230 = vmatprep.subr.mxu0 0.0
    %2231 = vmatpush1.msra.mxu0 0.0
    %2232 = vmatprep.subr.mxu0 0.0
    %2233 = vmatpush1.msra.mxu0 0.0
    %2234 = vmatprep.subr.mxu0 0.0
    %2235 = vmatpush1.msra.mxu0 0.0
    %2236 = vmatprep.subr.mxu0 0.0
    %2237 = vmatpush1.msra.mxu0 0.0
    %2238 = vmatprep.subr.mxu0 0.0
    %2239 = vmatpush1.msra.mxu0 0.0
    %2240 = vmatprep.subr.mxu0 0.0
    %2241 = vmatpush1.msra.mxu0 0.0
    %2242 = vmatprep.subr.mxu0 0.0
    %2243 = vmatpush1.msra.mxu0 0.0
    %2244 = vmatprep.subr.mxu0 0.0
    %2245 = vmatpush1.msra.mxu0 0.0
    %2246 = vmatprep.subr.mxu0 0.0
    %2247 = vmatpush1.msra.mxu0 0.0
    %2248 = vmatprep.subr.mxu0 0.0
    %2249 = vmatpush1.msra.mxu0 0.0
    %2250 = vmatprep.subr.mxu0 0.0
    %2251 = vmatpush1.msra.mxu0 0.0
    %2252 = vmatprep.subr.mxu0 0.0
    %2253 = vmatpush1.msra.mxu0 0.0
    %2254 = vmatprep.subr.mxu0 0.0
    %2255 = vmatpush1.msra.mxu0 0.0
    %2256 = vmatprep.subr.mxu0 0.0
    %2257 = vmatpush1.msra.mxu0 0.0
    %2258 = vmatprep.subr.mxu0 0.0
    %2259 = vmatpush1.msra.mxu0 0.0
    %2260 = vmatprep.subr.mxu0 0.0
    %2261 = vmatpush1.msra.mxu0 0.0
    %2262 = vmatprep.subr.mxu0 0.0
    %2263 = vmatpush1.msra.mxu0 0.0
    %2264 = vmatprep.subr.mxu0 0.0
    %2265 = vmatpush1.msra.mxu0 0.0
    %2266 = vmatprep.subr.mxu0 0.0
    %2267 = vmatpush1.msra.mxu0 0.0
    %2268 = vmatprep.subr.mxu0 0.0
    %2269 = vmatpush1.msra.mxu0 0.0
    %2270 = vmatprep.subr.mxu0 0.0
    %2271 = vmatpush1.msra.mxu0 0.0
    %2272 = vmatprep.subr.mxu0 0.0
    %2273 = vmatpush1.msra.mxu0 0.0
    %2274 = vmatprep.subr.mxu0 0.0
    %2275 = vmatpush1.msra.mxu0 0.0
    %2276 = vmatprep.subr.mxu0 0.0
    %2277 = vmatpush1.msra.mxu0 0.0
    %2278 = vmatprep.mubr.f32.mxu0 0.0
    %2279 = vmatmul.mubr.f32.gmra.mrb[0].mxu0 %v2209
    %v2280 = vpop.f32.mrb[0].mxu0
    %v2281 = vadd.f32 %v2206, %v2280
    %v2282 = vpop.f32.mrb[0].mxu0
    %2283 = vmatprep.mubr.f32.mxu0 0.0
    %2284 = vmatmul.mubr.f32.gmra.mrb[0].mxu0 %v2212
    %v2285 = vpop.f32.mrb[0].mxu0
    %v2286 = vadd.f32 %v2206, %v2285
    %v2287 = vpop.f32.mrb[0].mxu0
    %2288 = vdwg.mxu0
    %s2289 = scalar_lea.vmem %s6, 32
    %v2290 = vld [vmem:[%s2289] sm:$0xff]
    %v2291 = vld [vmem:[%s2289 + $0x8] sm:$0xff]
    %v2292 = vld [vmem:[%s2289 + $0x10] sm:$0xff]
    %v2293 = vld [vmem:[%s2289 + $0x18] sm:$0xff]
    %s2294 = scalar_lea.vmem %s7, 1
    %v2295 = vld [vmem:[%s2294] sm:$0x1]
    %v2297 = vlaneseq
    %v2298 = vshrl.u32 %v2297, 7
    %v2299 = vsub.s32 0, %v2298
    %v2300 = vrot.slane %v2295, %v2299
    %v2302 = vadd.f32 %v2300, 0.0
    %2304 = vrot.lane.b32.xlu0 %v2281, 96
    %v2305 = vpop.permute.xlu0 %2304
    %v2306 = vsel %vm220, %v2281, 0
    %v2308 = vsel %vm220, %v2305, 0
    %2310 = vmatprep.subr.mxu0 0.0
    %2311 = vmatpush1.xpose.msra.mxu0 %v2308
    %2312 = vmatprep.subr.mxu0 0.0
    %2313 = vmatpush1.xpose.msra.mxu0 0.0
    %2314 = vmatprep.subr.mxu0 0.0
    %2315 = vmatpush1.xpose.msra.mxu0 0.0
    %2316 = vmatprep.subr.mxu0 0.0
    %2317 = vmatpush1.xpose.msra.mxu0 0.0
    %2318 = vmatprep.subr.mxu0 0.0
    %2319 = vmatpush1.xpose.msra.mxu0 0.0
    %2320 = vmatprep.subr.mxu0 0.0
    %2321 = vmatpush1.xpose.msra.mxu0 0.0
    %2322 = vmatprep.subr.mxu0 0.0
    %2323 = vmatpush1.xpose.msra.mxu0 0.0
    %2324 = vmatprep.subr.mxu0 0.0
    %2325 = vmatpush1.xpose.msra.mxu0 0.0
    %2326 = vmatprep.subr.mxu0 0.0
    %2327 = vmatpush1.xpose.msra.mxu0 0.0
    %2328 = vmatprep.subr.mxu0 0.0
    %2329 = vmatpush1.xpose.msra.mxu0 0.0
    %2330 = vmatprep.subr.mxu0 0.0
    %2331 = vmatpush1.xpose.msra.mxu0 0.0
    %2332 = vmatprep.subr.mxu0 0.0
    %2333 = vmatpush1.xpose.msra.mxu0 0.0
    %2334 = vmatprep.subr.mxu0 0.0
    %2335 = vmatpush1.xpose.msra.mxu0 0.0
    %2336 = vmatprep.subr.mxu0 0.0
    %2337 = vmatpush1.xpose.msra.mxu0 0.0
    %2338 = vmatprep.subr.mxu0 0.0
    %2339 = vmatpush1.xpose.msra.mxu0 0.0
    %2340 = vmatprep.subr.mxu0 0.0
    %2341 = vmatpush1.xpose.msra.mxu0 0.0
    %2342 = vmatprep.subr.mxu0 0.0
    %2343 = vmatpush1.xpose.msra.mxu0 0.0
    %2344 = vmatprep.subr.mxu0 0.0
    %2345 = vmatpush1.xpose.msra.mxu0 0.0
    %2346 = vmatprep.subr.mxu0 0.0
    %2347 = vmatpush1.xpose.msra.mxu0 0.0
    %2348 = vmatprep.subr.mxu0 0.0
    %2349 = vmatpush1.xpose.msra.mxu0 0.0
    %2350 = vmatprep.subr.mxu0 0.0
    %2351 = vmatpush1.xpose.msra.mxu0 0.0
    %2352 = vmatprep.subr.mxu0 0.0
    %2353 = vmatpush1.xpose.msra.mxu0 0.0
    %2354 = vmatprep.subr.mxu0 0.0
    %2355 = vmatpush1.xpose.msra.mxu0 0.0
    %2356 = vmatprep.subr.mxu0 0.0
    %2357 = vmatpush1.xpose.msra.mxu0 0.0
    %2358 = vmatprep.subr.mxu0 0.0
    %2359 = vmatpush1.xpose.msra.mxu0 0.0
    %2360 = vmatprep.subr.mxu0 0.0
    %2361 = vmatpush1.xpose.msra.mxu0 0.0
    %2362 = vmatprep.subr.mxu0 0.0
    %2363 = vmatpush1.xpose.msra.mxu0 0.0
    %2364 = vmatprep.subr.mxu0 0.0
    %2365 = vmatpush1.xpose.msra.mxu0 0.0
    %2366 = vmatprep.subr.mxu0 0.0
    %2367 = vmatpush1.xpose.msra.mxu0 0.0
    %2368 = vmatprep.subr.mxu0 0.0
    %2369 = vmatpush1.xpose.msra.mxu0 0.0
    %2370 = vmatprep.subr.mxu0 0.0
    %2371 = vmatpush1.xpose.msra.mxu0 0.0
    %2372 = vmatprep.subr.mxu0 0.0
    %2373 = vmatpush1.xpose.msra.mxu0 0.0
    %2374 = vmatprep.mubr.f32.mxu0 0.0
    %2375 = vmatmul.mubr.f32.gmra.mrb[0].mxu0 %v2306
    %v2376 = vpop.f32.mrb[0].mxu0
    %v2377 = vadd.f32 0.0, %v2376
    %v2378 = vpop.f32.mrb[0].mxu0
    %2379 = vdwg.mxu0
    %2381 = vrot.lane.b32.xlu0 %v2286, 96
    %v2382 = vpop.permute.xlu0 %2381
    %v2383 = vsel %vm220, %v2286, 0
    %v2385 = vsel %vm220, %v2382, 0
    %2387 = vmatprep.subr.mxu0 0.0
    %2388 = vmatpush1.xpose.msra.mxu0 %v2385
    %2389 = vmatprep.subr.mxu0 0.0
    %2390 = vmatpush1.xpose.msra.mxu0 0.0
    %2391 = vmatprep.subr.mxu0 0.0
    %2392 = vmatpush1.xpose.msra.mxu0 0.0
    %2393 = vmatprep.subr.mxu0 0.0
    %2394 = vmatpush1.xpose.msra.mxu0 0.0
    %2395 = vmatprep.subr.mxu0 0.0
    %2396 = vmatpush1.xpose.msra.mxu0 0.0
    %2397 = vmatprep.subr.mxu0 0.0
    %2398 = vmatpush1.xpose.msra.mxu0 0.0
    %2399 = vmatprep.subr.mxu0 0.0
    %2400 = vmatpush1.xpose.msra.mxu0 0.0
    %2401 = vmatprep.subr.mxu0 0.0
    %2402 = vmatpush1.xpose.msra.mxu0 0.0
    %2403 = vmatprep.subr.mxu0 0.0
    %2404 = vmatpush1.xpose.msra.mxu0 0.0
    %2405 = vmatprep.subr.mxu0 0.0
    %2406 = vmatpush1.xpose.msra.mxu0 0.0
    %2407 = vmatprep.subr.mxu0 0.0
    %2408 = vmatpush1.xpose.msra.mxu0 0.0
    %2409 = vmatprep.subr.mxu0 0.0
    %2410 = vmatpush1.xpose.msra.mxu0 0.0
    %2411 = vmatprep.subr.mxu0 0.0
    %2412 = vmatpush1.xpose.msra.mxu0 0.0
    %2413 = vmatprep.subr.mxu0 0.0
    %2414 = vmatpush1.xpose.msra.mxu0 0.0
    %2415 = vmatprep.subr.mxu0 0.0
    %2416 = vmatpush1.xpose.msra.mxu0 0.0
    %2417 = vmatprep.subr.mxu0 0.0
    %2418 = vmatpush1.xpose.msra.mxu0 0.0
    %2419 = vmatprep.subr.mxu0 0.0
    %2420 = vmatpush1.xpose.msra.mxu0 0.0
    %2421 = vmatprep.subr.mxu0 0.0
    %2422 = vmatpush1.xpose.msra.mxu0 0.0
    %2423 = vmatprep.subr.mxu0 0.0
    %2424 = vmatpush1.xpose.msra.mxu0 0.0
    %2425 = vmatprep.subr.mxu0 0.0
    %2426 = vmatpush1.xpose.msra.mxu0 0.0
    %2427 = vmatprep.subr.mxu0 0.0
    %2428 = vmatpush1.xpose.msra.mxu0 0.0
    %2429 = vmatprep.subr.mxu0 0.0
    %2430 = vmatpush1.xpose.msra.mxu0 0.0
    %2431 = vmatprep.subr.mxu0 0.0
    %2432 = vmatpush1.xpose.msra.mxu0 0.0
    %2433 = vmatprep.subr.mxu0 0.0
    %2434 = vmatpush1.xpose.msra.mxu0 0.0
    %2435 = vmatprep.subr.mxu0 0.0
    %2436 = vmatpush1.xpose.msra.mxu0 0.0
    %2437 = vmatprep.subr.mxu0 0.0
    %2438 = vmatpush1.xpose.msra.mxu0 0.0
    %2439 = vmatprep.subr.mxu0 0.0
    %2440 = vmatpush1.xpose.msra.mxu0 0.0
    %2441 = vmatprep.subr.mxu0 0.0
    %2442 = vmatpush1.xpose.msra.mxu0 0.0
    %2443 = vmatprep.subr.mxu0 0.0
    %2444 = vmatpush1.xpose.msra.mxu0 0.0
    %2445 = vmatprep.subr.mxu0 0.0
    %2446 = vmatpush1.xpose.msra.mxu0 0.0
    %2447 = vmatprep.subr.mxu0 0.0
    %2448 = vmatpush1.xpose.msra.mxu0 0.0
    %2449 = vmatprep.subr.mxu0 0.0
    %2450 = vmatpush1.xpose.msra.mxu0 0.0
    %2451 = vmatprep.mubr.f32.mxu0 0.0
    %2452 = vmatmul.mubr.f32.gmra.mrb[0].mxu0 %v2383
    %v2453 = vpop.f32.mrb[0].mxu0
    %v2454 = vadd.f32 0.0, %v2453
    %v2455 = vpop.f32.mrb[0].mxu0
    %2456 = vdwg.mxu0
    %v2457 = vmul.f32 %v2377, 0.35355338
    %v2458 = vmul.f32 %v2454, 0.35355338
    %v2459 = vadd.f32 %v2457, %v379
    %v2460 = vadd.f32 %v2458, %v383
    %v2461 = vsel %vm220, %v2459, -inf
    %2462 = vmax.xlane.f32.xlu0 %v2461
    %v2463 = vpop.xlane.xlu0 %2462
    %v2464 = vsel %vm220, %v2460, -inf
    %2465 = vmax.xlane.f32.xlu0 %v2464
    %v2466 = vpop.xlane.xlu0 %2465
    %v2467 = vsub.f32 %v2459, %v2463
    %v2468 = vsub.f32 %v2460, %v2466
    %v2469 = vmul.f32 %v2467, 1.442695
    %v2470 = vpow.pop %v2469
    %v2471 = vmul.f32 %v2468, 1.442695
    %v2472 = vpow.pop %v2471
    %v2473 = vsel %vm220, %v2470, 0.0
    %2474 = vadd.xlane.f32.xlu0 %v2473
    %v2475 = vpop.xlane.xlu0 %2474
    %v2476 = vsel %vm220, %v2472, 0.0
    %2477 = vadd.xlane.f32.xlu0 %v2476
    %v2478 = vpop.xlane.xlu0 %2477
    %v2479 = vrcp.pop %v2475
    %v2480 = vmul.f32 %v2470, %v2479
    %v2481 = vrcp.pop %v2478
    %v2482 = vmul.f32 %v2472, %v2481
    %2483 = vrot.lane.b32.xlu0 %v2281, 64
    %v2484 = vpop.permute.xlu0 %2483
    %v2487 = vsel %vm220, %v2480, 0
    %2489 = vmatprep.subr.mxu0 0.0
    %2490 = vmatpush1.msra.mxu0 %v2484
    %2491 = vmatprep.subr.mxu0 0.0
    %2492 = vmatpush1.msra.mxu0 0.0
    %2493 = vmatprep.subr.mxu0 0.0
    %2494 = vmatpush1.msra.mxu0 0.0
    %2495 = vmatprep.subr.mxu0 0.0
    %2496 = vmatpush1.msra.mxu0 0.0
    %2497 = vmatprep.subr.mxu0 0.0
    %2498 = vmatpush1.msra.mxu0 0.0
    %2499 = vmatprep.subr.mxu0 0.0
    %2500 = vmatpush1.msra.mxu0 0.0
    %2501 = vmatprep.subr.mxu0 0.0
    %2502 = vmatpush1.msra.mxu0 0.0
    %2503 = vmatprep.subr.mxu0 0.0
    %2504 = vmatpush1.msra.mxu0 0.0
    %2505 = vmatprep.subr.mxu0 0.0
    %2506 = vmatpush1.msra.mxu0 0.0
    %2507 = vmatprep.subr.mxu0 0.0
    %2508 = vmatpush1.msra.mxu0 0.0
    %2509 = vmatprep.subr.mxu0 0.0
    %2510 = vmatpush1.msra.mxu0 0.0
    %2511 = vmatprep.subr.mxu0 0.0
    %2512 = vmatpush1.msra.mxu0 0.0
    %2513 = vmatprep.subr.mxu0 0.0
    %2514 = vmatpush1.msra.mxu0 0.0
    %2515 = vmatprep.subr.mxu0 0.0
    %2516 = vmatpush1.msra.mxu0 0.0
    %2517 = vmatprep.subr.mxu0 0.0
    %2518 = vmatpush1.msra.mxu0 0.0
    %2519 = vmatprep.subr.mxu0 0.0
    %2520 = vmatpush1.msra.mxu0 0.0
    %2521 = vmatprep.subr.mxu0 0.0
    %2522 = vmatpush1.msra.mxu0 0.0
    %2523 = vmatprep.subr.mxu0 0.0
    %2524 = vmatpush1.msra.mxu0 0.0
    %2525 = vmatprep.subr.mxu0 0.0
    %2526 = vmatpush1.msra.mxu0 0.0
    %2527 = vmatprep.subr.mxu0 0.0
    %2528 = vmatpush1.msra.mxu0 0.0
    %2529 = vmatprep.subr.mxu0 0.0
    %2530 = vmatpush1.msra.mxu0 0.0
    %2531 = vmatprep.subr.mxu0 0.0
    %2532 = vmatpush1.msra.mxu0 0.0
    %2533 = vmatprep.subr.mxu0 0.0
    %2534 = vmatpush1.msra.mxu0 0.0
    %2535 = vmatprep.subr.mxu0 0.0
    %2536 = vmatpush1.msra.mxu0 0.0
    %2537 = vmatprep.subr.mxu0 0.0
    %2538 = vmatpush1.msra.mxu0 0.0
    %2539 = vmatprep.subr.mxu0 0.0
    %2540 = vmatpush1.msra.mxu0 0.0
    %2541 = vmatprep.subr.mxu0 0.0
    %2542 = vmatpush1.msra.mxu0 0.0
    %2543 = vmatprep.subr.mxu0 0.0
    %2544 = vmatpush1.msra.mxu0 0.0
    %2545 = vmatprep.subr.mxu0 0.0
    %2546 = vmatpush1.msra.mxu0 0.0
    %2547 = vmatprep.subr.mxu0 0.0
    %2548 = vmatpush1.msra.mxu0 0.0
    %2549 = vmatprep.subr.mxu0 0.0
    %2550 = vmatpush1.msra.mxu0 0.0
    %2551 = vmatprep.subr.mxu0 0.0
    %2552 = vmatpush1.msra.mxu0 0.0
    %2553 = vmatprep.mubr.f32.mxu0 0.0
    %2554 = vmatmul.mubr.f32.gmra.mrb[0].mxu0 %v2487
    %v2555 = vpop.f32.mrb[0].mxu0
    %v2556 = vadd.f32 0.0, %v2555
    %v2557 = vpop.f32.mrb[0].mxu0
    %2558 = vdwg.mxu0
    %2559 = vrot.lane.b32.xlu0 %v2286, 64
    %v2560 = vpop.permute.xlu0 %2559
    %v2563 = vsel %vm220, %v2482, 0
    %2565 = vmatprep.subr.mxu0 0.0
    %2566 = vmatpush1.msra.mxu0 %v2560
    %2567 = vmatprep.subr.mxu0 0.0
    %2568 = vmatpush1.msra.mxu0 0.0
    %2569 = vmatprep.subr.mxu0 0.0
    %2570 = vmatpush1.msra.mxu0 0.0
    %2571 = vmatprep.subr.mxu0 0.0
    %2572 = vmatpush1.msra.mxu0 0.0
    %2573 = vmatprep.subr.mxu0 0.0
    %2574 = vmatpush1.msra.mxu0 0.0
    %2575 = vmatprep.subr.mxu0 0.0
    %2576 = vmatpush1.msra.mxu0 0.0
    %2577 = vmatprep.subr.mxu0 0.0
    %2578 = vmatpush1.msra.mxu0 0.0
    %2579 = vmatprep.subr.mxu0 0.0
    %2580 = vmatpush1.msra.mxu0 0.0
    %2581 = vmatprep.subr.mxu0 0.0
    %2582 = vmatpush1.msra.mxu0 0.0
    %2583 = vmatprep.subr.mxu0 0.0
    %2584 = vmatpush1.msra.mxu0 0.0
    %2585 = vmatprep.subr.mxu0 0.0
    %2586 = vmatpush1.msra.mxu0 0.0
    %2587 = vmatprep.subr.mxu0 0.0
    %2588 = vmatpush1.msra.mxu0 0.0
    %2589 = vmatprep.subr.mxu0 0.0
    %2590 = vmatpush1.msra.mxu0 0.0
    %2591 = vmatprep.subr.mxu0 0.0
    %2592 = vmatpush1.msra.mxu0 0.0
    %2593 = vmatprep.subr.mxu0 0.0
    %2594 = vmatpush1.msra.mxu0 0.0
    %2595 = vmatprep.subr.mxu0 0.0
    %2596 = vmatpush1.msra.mxu0 0.0
    %2597 = vmatprep.subr.mxu0 0.0
    %2598 = vmatpush1.msra.mxu0 0.0
    %2599 = vmatprep.subr.mxu0 0.0
    %2600 = vmatpush1.msra.mxu0 0.0
    %2601 = vmatprep.subr.mxu0 0.0
    %2602 = vmatpush1.msra.mxu0 0.0
    %2603 = vmatprep.subr.mxu0 0.0
    %2604 = vmatpush1.msra.mxu0 0.0
    %2605 = vmatprep.subr.mxu0 0.0
    %2606 = vmatpush1.msra.mxu0 0.0
    %2607 = vmatprep.subr.mxu0 0.0
    %2608 = vmatpush1.msra.mxu0 0.0
    %2609 = vmatprep.subr.mxu0 0.0
    %2610 = vmatpush1.msra.mxu0 0.0
    %2611 = vmatprep.subr.mxu0 0.0
    %2612 = vmatpush1.msra.mxu0 0.0
    %2613 = vmatprep.subr.mxu0 0.0
    %2614 = vmatpush1.msra.mxu0 0.0
    %2615 = vmatprep.subr.mxu0 0.0
    %2616 = vmatpush1.msra.mxu0 0.0
    %2617 = vmatprep.subr.mxu0 0.0
    %2618 = vmatpush1.msra.mxu0 0.0
    %2619 = vmatprep.subr.mxu0 0.0
    %2620 = vmatpush1.msra.mxu0 0.0
    %2621 = vmatprep.subr.mxu0 0.0
    %2622 = vmatpush1.msra.mxu0 0.0
    %2623 = vmatprep.subr.mxu0 0.0
    %2624 = vmatpush1.msra.mxu0 0.0
    %2625 = vmatprep.subr.mxu0 0.0
    %2626 = vmatpush1.msra.mxu0 0.0
    %2627 = vmatprep.subr.mxu0 0.0
    %2628 = vmatpush1.msra.mxu0 0.0
    %2629 = vmatprep.mubr.f32.mxu0 0.0
    %2630 = vmatmul.mubr.f32.gmra.mrb[0].mxu0 %v2563
    %v2631 = vpop.f32.mrb[0].mxu0
    %v2632 = vadd.f32 0.0, %v2631
    %v2633 = vpop.f32.mrb[0].mxu0
    %2634 = vdwg.mxu0
    %v2636 = vsel %vm220, %v2556, 0
    %v2639 = vsel %vm220, %v2632, 0
    %2641 = vmatprep.subr.mxu0 0.0
    %2642 = vmatpush1.msra.mxu0 %v2290
    %2643 = vmatprep.subr.mxu0 0.0
    %2644 = vmatpush1.msra.mxu0 0.0
    %2645 = vmatprep.subr.mxu0 0.0
    %2646 = vmatpush1.msra.mxu0 0.0
    %2647 = vmatprep.subr.mxu0 0.0
    %2648 = vmatpush1.msra.mxu0 0.0
    %2649 = vmatprep.subr.mxu0 0.0
    %2650 = vmatpush1.msra.mxu0 0.0
    %2651 = vmatprep.subr.mxu0 0.0
    %2652 = vmatpush1.msra.mxu0 0.0
    %2653 = vmatprep.subr.mxu0 0.0
    %2654 = vmatpush1.msra.mxu0 0.0
    %2655 = vmatprep.subr.mxu0 0.0
    %2656 = vmatpush1.msra.mxu0 0.0
    %2657 = vmatprep.subr.mxu0 0.0
    %2658 = vmatpush1.msra.mxu0 0.0
    %2659 = vmatprep.subr.mxu0 0.0
    %2660 = vmatpush1.msra.mxu0 0.0
    %2661 = vmatprep.subr.mxu0 0.0
    %2662 = vmatpush1.msra.mxu0 0.0
    %2663 = vmatprep.subr.mxu0 0.0
    %2664 = vmatpush1.msra.mxu0 0.0
    %2665 = vmatprep.subr.mxu0 0.0
    %2666 = vmatpush1.msra.mxu0 0.0
    %2667 = vmatprep.subr.mxu0 0.0
    %2668 = vmatpush1.msra.mxu0 0.0
    %2669 = vmatprep.subr.mxu0 0.0
    %2670 = vmatpush1.msra.mxu0 0.0
    %2671 = vmatprep.subr.mxu0 0.0
    %2672 = vmatpush1.msra.mxu0 0.0
    %2673 = vmatprep.subr.mxu0 0.0
    %2674 = vmatpush1.msra.mxu0 0.0
    %2675 = vmatprep.subr.mxu0 0.0
    %2676 = vmatpush1.msra.mxu0 0.0
    %2677 = vmatprep.subr.mxu0 0.0
    %2678 = vmatpush1.msra.mxu0 0.0
    %2679 = vmatprep.subr.mxu0 0.0
    %2680 = vmatpush1.msra.mxu0 0.0
    %2681 = vmatprep.subr.mxu0 0.0
    %2682 = vmatpush1.msra.mxu0 0.0
    %2683 = vmatprep.subr.mxu0 0.0
    %2684 = vmatpush1.msra.mxu0 0.0
    %2685 = vmatprep.subr.mxu0 0.0
    %2686 = vmatpush1.msra.mxu0 0.0
    %2687 = vmatprep.subr.mxu0 0.0
    %2688 = vmatpush1.msra.mxu0 0.0
    %2689 = vmatprep.subr.mxu0 0.0
    %2690 = vmatpush1.msra.mxu0 0.0
    %2691 = vmatprep.subr.mxu0 0.0
    %2692 = vmatpush1.msra.mxu0 0.0
    %2693 = vmatprep.subr.mxu0 0.0
    %2694 = vmatpush1.msra.mxu0 0.0
    %2695 = vmatprep.subr.mxu0 0.0
    %2696 = vmatpush1.msra.mxu0 0.0
    %2697 = vmatprep.subr.mxu0 0.0
    %2698 = vmatpush1.msra.mxu0 0.0
    %2699 = vmatprep.subr.mxu0 0.0
    %2700 = vmatpush1.msra.mxu0 0.0
    %2701 = vmatprep.subr.mxu0 0.0
    %2702 = vmatpush1.msra.mxu0 0.0
    %2703 = vmatprep.subr.mxu0 0.0
    %2704 = vmatpush1.msra.mxu0 0.0
    %2705 = vmatprep.mubr.f32.mxu0 0.0
    %2706 = vmatmul.mubr.f32.gmra.mrb[0].mxu0 %v2636
    %v2707 = vpop.f32.mrb[0].mxu0
    %v2708 = vadd.f32 0.0, %v2707
    %v2709 = vpop.f32.mrb[0].mxu0
    %2710 = vmatprep.mubr.f32.mxu0 0.0
    %2711 = vmatmul.mubr.f32.gmra.mrb[0].mxu0 %v2639
    %v2712 = vpop.f32.mrb[0].mxu0
    %v2713 = vadd.f32 0.0, %v2712
    %v2714 = vpop.f32.mrb[0].mxu0
    %2715 = vdwg.mxu0
    %v2716 = vadd.f32 %v2302, %v2708
    %v2717 = vadd.f32 %v2302, %v2713
    %2718 = vrot.lane.b32.xlu0 %v2281, 120
    %v2719 = vpop.permute.xlu0 %2718
    %2720 = vrot.lane.b32.xlu0 %v2281, 88
    %v2721 = vpop.permute.xlu0 %2720
    %v2722 = vsel %vm220, %v2719, 0
    %v2724 = vsel %vm220, %v2721, 0
    %2726 = vmatprep.subr.mxu0 0.0
    %2727 = vmatpush1.xpose.msra.mxu0 %v2724
    %2728 = vmatprep.subr.mxu0 0.0
    %2729 = vmatpush1.xpose.msra.mxu0 0.0
    %2730 = vmatprep.subr.mxu0 0.0
    %2731 = vmatpush1.xpose.msra.mxu0 0.0
    %2732 = vmatprep.subr.mxu0 0.0
    %2733 = vmatpush1.xpose.msra.mxu0 0.0
    %2734 = vmatprep.subr.mxu0 0.0
    %2735 = vmatpush1.xpose.msra.mxu0 0.0
    %2736 = vmatprep.subr.mxu0 0.0
    %2737 = vmatpush1.xpose.msra.mxu0 0.0
    %2738 = vmatprep.subr.mxu0 0.0
    %2739 = vmatpush1.xpose.msra.mxu0 0.0
    %2740 = vmatprep.subr.mxu0 0.0
    %2741 = vmatpush1.xpose.msra.mxu0 0.0
    %2742 = vmatprep.subr.mxu0 0.0
    %2743 = vmatpush1.xpose.msra.mxu0 0.0
    %2744 = vmatprep.subr.mxu0 0.0
    %2745 = vmatpush1.xpose.msra.mxu0 0.0
    %2746 = vmatprep.subr.mxu0 0.0
    %2747 = vmatpush1.xpose.msra.mxu0 0.0
    %2748 = vmatprep.subr.mxu0 0.0
    %2749 = vmatpush1.xpose.msra.mxu0 0.0
    %2750 = vmatprep.subr.mxu0 0.0
    %2751 = vmatpush1.xpose.msra.mxu0 0.0
    %2752 = vmatprep.subr.mxu0 0.0
    %2753 = vmatpush1.xpose.msra.mxu0 0.0
    %2754 = vmatprep.subr.mxu0 0.0
    %2755 = vmatpush1.xpose.msra.mxu0 0.0
    %2756 = vmatprep.subr.mxu0 0.0
    %2757 = vmatpush1.xpose.msra.mxu0 0.0
    %2758 = vmatprep.subr.mxu0 0.0
    %2759 = vmatpush1.xpose.msra.mxu0 0.0
    %2760 = vmatprep.subr.mxu0 0.0
    %2761 = vmatpush1.xpose.msra.mxu0 0.0
    %2762 = vmatprep.subr.mxu0 0.0
    %2763 = vmatpush1.xpose.msra.mxu0 0.0
    %2764 = vmatprep.subr.mxu0 0.0
    %2765 = vmatpush1.xpose.msra.mxu0 0.0
    %2766 = vmatprep.subr.mxu0 0.0
    %2767 = vmatpush1.xpose.msra.mxu0 0.0
    %2768 = vmatprep.subr.mxu0 0.0
    %2769 = vmatpush1.xpose.msra.mxu0 0.0
    %2770 = vmatprep.subr.mxu0 0.0
    %2771 = vmatpush1.xpose.msra.mxu0 0.0
    %2772 = vmatprep.subr.mxu0 0.0
    %2773 = vmatpush1.xpose.msra.mxu0 0.0
    %2774 = vmatprep.subr.mxu0 0.0
    %2775 = vmatpush1.xpose.msra.mxu0 0.0
    %2776 = vmatprep.subr.mxu0 0.0
    %2777 = vmatpush1.xpose.msra.mxu0 0.0
    %2778 = vmatprep.subr.mxu0 0.0
    %2779 = vmatpush1.xpose.msra.mxu0 0.0
    %2780 = vmatprep.subr.mxu0 0.0
    %2781 = vmatpush1.xpose.msra.mxu0 0.0
    %2782 = vmatprep.subr.mxu0 0.0
    %2783 = vmatpush1.xpose.msra.mxu0 0.0
    %2784 = vmatprep.subr.mxu0 0.0
    %2785 = vmatpush1.xpose.msra.mxu0 0.0
    %2786 = vmatprep.subr.mxu0 0.0
    %2787 = vmatpush1.xpose.msra.mxu0 0.0
    %2788 = vmatprep.subr.mxu0 0.0
    %2789 = vmatpush1.xpose.msra.mxu0 0.0
    %2790 = vmatprep.mubr.f32.mxu0 0.0
    %2791 = vmatmul.mubr.f32.gmra.mrb[0].mxu0 %v2722
    %v2792 = vpop.f32.mrb[0].mxu0
    %v2793 = vadd.f32 0.0, %v2792
    %v2794 = vpop.f32.mrb[0].mxu0
    %2795 = vdwg.mxu0
    %2796 = vrot.lane.b32.xlu0 %v2286, 120
    %v2797 = vpop.permute.xlu0 %2796
    %2798 = vrot.lane.b32.xlu0 %v2286, 88
    %v2799 = vpop.permute.xlu0 %2798
    %v2800 = vsel %vm220, %v2797, 0
    %v2802 = vsel %vm220, %v2799, 0
    %2804 = vmatprep.subr.mxu0 0.0
    %2805 = vmatpush1.xpose.msra.mxu0 %v2802
    %2806 = vmatprep.subr.mxu0 0.0
    %2807 = vmatpush1.xpose.msra.mxu0 0.0
    %2808 = vmatprep.subr.mxu0 0.0
    %2809 = vmatpush1.xpose.msra.mxu0 0.0
    %2810 = vmatprep.subr.mxu0 0.0
    %2811 = vmatpush1.xpose.msra.mxu0 0.0
    %2812 = vmatprep.subr.mxu0 0.0
    %2813 = vmatpush1.xpose.msra.mxu0 0.0
    %2814 = vmatprep.subr.mxu0 0.0
    %2815 = vmatpush1.xpose.msra.mxu0 0.0
    %2816 = vmatprep.subr.mxu0 0.0
    %2817 = vmatpush1.xpose.msra.mxu0 0.0
    %2818 = vmatprep.subr.mxu0 0.0
    %2819 = vmatpush1.xpose.msra.mxu0 0.0
    %2820 = vmatprep.subr.mxu0 0.0
    %2821 = vmatpush1.xpose.msra.mxu0 0.0
    %2822 = vmatprep.subr.mxu0 0.0
    %2823 = vmatpush1.xpose.msra.mxu0 0.0
    %2824 = vmatprep.subr.mxu0 0.0
    %2825 = vmatpush1.xpose.msra.mxu0 0.0
    %2826 = vmatprep.subr.mxu0 0.0
    %2827 = vmatpush1.xpose.msra.mxu0 0.0
    %2828 = vmatprep.subr.mxu0 0.0
    %2829 = vmatpush1.xpose.msra.mxu0 0.0
    %2830 = vmatprep.subr.mxu0 0.0
    %2831 = vmatpush1.xpose.msra.mxu0 0.0
    %2832 = vmatprep.subr.mxu0 0.0
    %2833 = vmatpush1.xpose.msra.mxu0 0.0
    %2834 = vmatprep.subr.mxu0 0.0
    %2835 = vmatpush1.xpose.msra.mxu0 0.0
    %2836 = vmatprep.subr.mxu0 0.0
    %2837 = vmatpush1.xpose.msra.mxu0 0.0
    %2838 = vmatprep.subr.mxu0 0.0
    %2839 = vmatpush1.xpose.msra.mxu0 0.0
    %2840 = vmatprep.subr.mxu0 0.0
    %2841 = vmatpush1.xpose.msra.mxu0 0.0
    %2842 = vmatprep.subr.mxu0 0.0
    %2843 = vmatpush1.xpose.msra.mxu0 0.0
    %2844 = vmatprep.subr.mxu0 0.0
    %2845 = vmatpush1.xpose.msra.mxu0 0.0
    %2846 = vmatprep.subr.mxu0 0.0
    %2847 = vmatpush1.xpose.msra.mxu0 0.0
    %2848 = vmatprep.subr.mxu0 0.0
    %2849 = vmatpush1.xpose.msra.mxu0 0.0
    %2850 = vmatprep.subr.mxu0 0.0
    %2851 = vmatpush1.xpose.msra.mxu0 0.0
    %2852 = vmatprep.subr.mxu0 0.0
    %2853 = vmatpush1.xpose.msra.mxu0 0.0
    %2854 = vmatprep.subr.mxu0 0.0
    %2855 = vmatpush1.xpose.msra.mxu0 0.0
    %2856 = vmatprep.subr.mxu0 0.0
    %2857 = vmatpush1.xpose.msra.mxu0 0.0
    %2858 = vmatprep.subr.mxu0 0.0
    %2859 = vmatpush1.xpose.msra.mxu0 0.0
    %2860 = vmatprep.subr.mxu0 0.0
    %2861 = vmatpush1.xpose.msra.mxu0 0.0
    %2862 = vmatprep.subr.mxu0 0.0
    %2863 = vmatpush1.xpose.msra.mxu0 0.0
    %2864 = vmatprep.subr.mxu0 0.0
    %2865 = vmatpush1.xpose.msra.mxu0 0.0
    %2866 = vmatprep.subr.mxu0 0.0
    %2867 = vmatpush1.xpose.msra.mxu0 0.0
    %2868 = vmatprep.mubr.f32.mxu0 0.0
    %2869 = vmatmul.mubr.f32.gmra.mrb[0].mxu0 %v2800
    %v2870 = vpop.f32.mrb[0].mxu0
    %v2871 = vadd.f32 0.0, %v2870
    %v2872 = vpop.f32.mrb[0].mxu0
    %2873 = vdwg.mxu0
    %v2874 = vmul.f32 %v2793, 0.35355338
    %v2875 = vmul.f32 %v2871, 0.35355338
    %v2876 = vadd.f32 %v2874, %v379
    %v2877 = vadd.f32 %v2875, %v383
    %v2878 = vsel %vm220, %v2876, -inf
    %2879 = vmax.xlane.f32.xlu0 %v2878
    %v2880 = vpop.xlane.xlu0 %2879
    %v2881 = vsel %vm220, %v2877, -inf
    %2882 = vmax.xlane.f32.xlu0 %v2881
    %v2883 = vpop.xlane.xlu0 %2882
    %v2884 = vsub.f32 %v2876, %v2880
    %v2885 = vsub.f32 %v2877, %v2883
    %v2886 = vmul.f32 %v2884, 1.442695
    %v2887 = vpow.pop %v2886
    %v2888 = vmul.f32 %v2885, 1.442695
    %v2889 = vpow.pop %v2888
    %v2890 = vsel %vm220, %v2887, 0.0
    %2891 = vadd.xlane.f32.xlu0 %v2890
    %v2892 = vpop.xlane.xlu0 %2891
    %v2893 = vsel %vm220, %v2889, 0.0
    %2894 = vadd.xlane.f32.xlu0 %v2893
    %v2895 = vpop.xlane.xlu0 %2894
    %v2896 = vrcp.pop %v2892
    %v2897 = vmul.f32 %v2887, %v2896
    %v2898 = vrcp.pop %v2895
    %v2899 = vmul.f32 %v2889, %v2898
    %2900 = vrot.lane.b32.xlu0 %v2281, 56
    %v2901 = vpop.permute.xlu0 %2900
    %v2904 = vsel %vm220, %v2897, 0
    %2906 = vmatprep.subr.mxu0 0.0
    %2907 = vmatpush1.msra.mxu0 %v2901
    %2908 = vmatprep.subr.mxu0 0.0
    %2909 = vmatpush1.msra.mxu0 0.0
    %2910 = vmatprep.subr.mxu0 0.0
    %2911 = vmatpush1.msra.mxu0 0.0
    %2912 = vmatprep.subr.mxu0 0.0
    %2913 = vmatpush1.msra.mxu0 0.0
    %2914 = vmatprep.subr.mxu0 0.0
    %2915 = vmatpush1.msra.mxu0 0.0
    %2916 = vmatprep.subr.mxu0 0.0
    %2917 = vmatpush1.msra.mxu0 0.0
    %2918 = vmatprep.subr.mxu0 0.0
    %2919 = vmatpush1.msra.mxu0 0.0
    %2920 = vmatprep.subr.mxu0 0.0
    %2921 = vmatpush1.msra.mxu0 0.0
    %2922 = vmatprep.subr.mxu0 0.0
    %2923 = vmatpush1.msra.mxu0 0.0
    %2924 = vmatprep.subr.mxu0 0.0
    %2925 = vmatpush1.msra.mxu0 0.0
    %2926 = vmatprep.subr.mxu0 0.0
    %2927 = vmatpush1.msra.mxu0 0.0
    %2928 = vmatprep.subr.mxu0 0.0
    %2929 = vmatpush1.msra.mxu0 0.0
    %2930 = vmatprep.subr.mxu0 0.0
    %2931 = vmatpush1.msra.mxu0 0.0
    %2932 = vmatprep.subr.mxu0 0.0
    %2933 = vmatpush1.msra.mxu0 0.0
    %2934 = vmatprep.subr.mxu0 0.0
    %2935 = vmatpush1.msra.mxu0 0.0
    %2936 = vmatprep.subr.mxu0 0.0
    %2937 = vmatpush1.msra.mxu0 0.0
    %2938 = vmatprep.subr.mxu0 0.0
    %2939 = vmatpush1.msra.mxu0 0.0
    %2940 = vmatprep.subr.mxu0 0.0
    %2941 = vmatpush1.msra.mxu0 0.0
    %2942 = vmatprep.subr.mxu0 0.0
    %2943 = vmatpush1.msra.mxu0 0.0
    %2944 = vmatprep.subr.mxu0 0.0
    %2945 = vmatpush1.msra.mxu0 0.0
    %2946 = vmatprep.subr.mxu0 0.0
    %2947 = vmatpush1.msra.mxu0 0.0
    %2948 = vmatprep.subr.mxu0 0.0
    %2949 = vmatpush1.msra.mxu0 0.0
    %2950 = vmatprep.subr.mxu0 0.0
    %2951 = vmatpush1.msra.mxu0 0.0
    %2952 = vmatprep.subr.mxu0 0.0
    %2953 = vmatpush1.msra.mxu0 0.0
    %2954 = vmatprep.subr.mxu0 0.0
    %2955 = vmatpush1.msra.mxu0 0.0
    %2956 = vmatprep.subr.mxu0 0.0
    %2957 = vmatpush1.msra.mxu0 0.0
    %2958 = vmatprep.subr.mxu0 0.0
    %2959 = vmatpush1.msra.mxu0 0.0
    %2960 = vmatprep.subr.mxu0 0.0
    %2961 = vmatpush1.msra.mxu0 0.0
    %2962 = vmatprep.subr.mxu0 0.0
    %2963 = vmatpush1.msra.mxu0 0.0
    %2964 = vmatprep.subr.mxu0 0.0
    %2965 = vmatpush1.msra.mxu0 0.0
    %2966 = vmatprep.subr.mxu0 0.0
    %2967 = vmatpush1.msra.mxu0 0.0
    %2968 = vmatprep.subr.mxu0 0.0
    %2969 = vmatpush1.msra.mxu0 0.0
    %2970 = vmatprep.mubr.f32.mxu0 0.0
    %2971 = vmatmul.mubr.f32.gmra.mrb[0].mxu0 %v2904
    %v2972 = vpop.f32.mrb[0].mxu0
    %v2973 = vadd.f32 0.0, %v2972
    %v2974 = vpop.f32.mrb[0].mxu0
    %2975 = vdwg.mxu0
    %2976 = vrot.lane.b32.xlu0 %v2286, 56
    %v2977 = vpop.permute.xlu0 %2976
    %v2980 = vsel %vm220, %v2899, 0
    %2982 = vmatprep.subr.mxu0 0.0
    %2983 = vmatpush1.msra.mxu0 %v2977
    %2984 = vmatprep.subr.mxu0 0.0
    %2985 = vmatpush1.msra.mxu0 0.0
    %2986 = vmatprep.subr.mxu0 0.0
    %2987 = vmatpush1.msra.mxu0 0.0
    %2988 = vmatprep.subr.mxu0 0.0
    %2989 = vmatpush1.msra.mxu0 0.0
    %2990 = vmatprep.subr.mxu0 0.0
    %2991 = vmatpush1.msra.mxu0 0.0
    %2992 = vmatprep.subr.mxu0 0.0
    %2993 = vmatpush1.msra.mxu0 0.0
    %2994 = vmatprep.subr.mxu0 0.0
    %2995 = vmatpush1.msra.mxu0 0.0
    %2996 = vmatprep.subr.mxu0 0.0
    %2997 = vmatpush1.msra.mxu0 0.0
    %2998 = vmatprep.subr.mxu0 0.0
    %2999 = vmatpush1.msra.mxu0 0.0
    %3000 = vmatprep.subr.mxu0 0.0
    %3001 = vmatpush1.msra.mxu0 0.0
    %3002 = vmatprep.subr.mxu0 0.0
    %3003 = vmatpush1.msra.mxu0 0.0
    %3004 = vmatprep.subr.mxu0 0.0
    %3005 = vmatpush1.msra.mxu0 0.0
    %3006 = vmatprep.subr.mxu0 0.0
    %3007 = vmatpush1.msra.mxu0 0.0
    %3008 = vmatprep.subr.mxu0 0.0
    %3009 = vmatpush1.msra.mxu0 0.0
    %3010 = vmatprep.subr.mxu0 0.0
    %3011 = vmatpush1.msra.mxu0 0.0
    %3012 = vmatprep.subr.mxu0 0.0
    %3013 = vmatpush1.msra.mxu0 0.0
    %3014 = vmatprep.subr.mxu0 0.0
    %3015 = vmatpush1.msra.mxu0 0.0
    %3016 = vmatprep.subr.mxu0 0.0
    %3017 = vmatpush1.msra.mxu0 0.0
    %3018 = vmatprep.subr.mxu0 0.0
    %3019 = vmatpush1.msra.mxu0 0.0
    %3020 = vmatprep.subr.mxu0 0.0
    %3021 = vmatpush1.msra.mxu0 0.0
    %3022 = vmatprep.subr.mxu0 0.0
    %3023 = vmatpush1.msra.mxu0 0.0
    %3024 = vmatprep.subr.mxu0 0.0
    %3025 = vmatpush1.msra.mxu0 0.0
    %3026 = vmatprep.subr.mxu0 0.0
    %3027 = vmatpush1.msra.mxu0 0.0
    %3028 = vmatprep.subr.mxu0 0.0
    %3029 = vmatpush1.msra.mxu0 0.0
    %3030 = vmatprep.subr.mxu0 0.0
    %3031 = vmatpush1.msra.mxu0 0.0
    %3032 = vmatprep.subr.mxu0 0.0
    %3033 = vmatpush1.msra.mxu0 0.0
    %3034 = vmatprep.subr.mxu0 0.0
    %3035 = vmatpush1.msra.mxu0 0.0
    %3036 = vmatprep.subr.mxu0 0.0
    %3037 = vmatpush1.msra.mxu0 0.0
    %3038 = vmatprep.subr.mxu0 0.0
    %3039 = vmatpush1.msra.mxu0 0.0
    %3040 = vmatprep.subr.mxu0 0.0
    %3041 = vmatpush1.msra.mxu0 0.0
    %3042 = vmatprep.subr.mxu0 0.0
    %3043 = vmatpush1.msra.mxu0 0.0
    %3044 = vmatprep.subr.mxu0 0.0
    %3045 = vmatpush1.msra.mxu0 0.0
    %3046 = vmatprep.mubr.f32.mxu0 0.0
    %3047 = vmatmul.mubr.f32.gmra.mrb[0].mxu0 %v2980
    %v3048 = vpop.f32.mrb[0].mxu0
    %v3049 = vadd.f32 0.0, %v3048
    %v3050 = vpop.f32.mrb[0].mxu0
    %3051 = vdwg.mxu0
    %v3053 = vsel %vm220, %v2973, 0
    %v3056 = vsel %vm220, %v3049, 0
    %3058 = vmatprep.subr.mxu0 0.0
    %3059 = vmatpush1.msra.mxu0 %v2291
    %3060 = vmatprep.subr.mxu0 0.0
    %3061 = vmatpush1.msra.mxu0 0.0
    %3062 = vmatprep.subr.mxu0 0.0
    %3063 = vmatpush1.msra.mxu0 0.0
    %3064 = vmatprep.subr.mxu0 0.0
    %3065 = vmatpush1.msra.mxu0 0.0
    %3066 = vmatprep.subr.mxu0 0.0
    %3067 = vmatpush1.msra.mxu0 0.0
    %3068 = vmatprep.subr.mxu0 0.0
    %3069 = vmatpush1.msra.mxu0 0.0
    %3070 = vmatprep.subr.mxu0 0.0
    %3071 = vmatpush1.msra.mxu0 0.0
    %3072 = vmatprep.subr.mxu0 0.0
    %3073 = vmatpush1.msra.mxu0 0.0
    %3074 = vmatprep.subr.mxu0 0.0
    %3075 = vmatpush1.msra.mxu0 0.0
    %3076 = vmatprep.subr.mxu0 0.0
    %3077 = vmatpush1.msra.mxu0 0.0
    %3078 = vmatprep.subr.mxu0 0.0
    %3079 = vmatpush1.msra.mxu0 0.0
    %3080 = vmatprep.subr.mxu0 0.0
    %3081 = vmatpush1.msra.mxu0 0.0
    %3082 = vmatprep.subr.mxu0 0.0
    %3083 = vmatpush1.msra.mxu0 0.0
    %3084 = vmatprep.subr.mxu0 0.0
    %3085 = vmatpush1.msra.mxu0 0.0
    %3086 = vmatprep.subr.mxu0 0.0
    %3087 = vmatpush1.msra.mxu0 0.0
    %3088 = vmatprep.subr.mxu0 0.0
    %3089 = vmatpush1.msra.mxu0 0.0
    %3090 = vmatprep.subr.mxu0 0.0
    %3091 = vmatpush1.msra.mxu0 0.0
    %3092 = vmatprep.subr.mxu0 0.0
    %3093 = vmatpush1.msra.mxu0 0.0
    %3094 = vmatprep.subr.mxu0 0.0
    %3095 = vmatpush1.msra.mxu0 0.0
    %3096 = vmatprep.subr.mxu0 0.0
    %3097 = vmatpush1.msra.mxu0 0.0
    %3098 = vmatprep.subr.mxu0 0.0
    %3099 = vmatpush1.msra.mxu0 0.0
    %3100 = vmatprep.subr.mxu0 0.0
    %3101 = vmatpush1.msra.mxu0 0.0
    %3102 = vmatprep.subr.mxu0 0.0
    %3103 = vmatpush1.msra.mxu0 0.0
    %3104 = vmatprep.subr.mxu0 0.0
    %3105 = vmatpush1.msra.mxu0 0.0
    %3106 = vmatprep.subr.mxu0 0.0
    %3107 = vmatpush1.msra.mxu0 0.0
    %3108 = vmatprep.subr.mxu0 0.0
    %3109 = vmatpush1.msra.mxu0 0.0
    %3110 = vmatprep.subr.mxu0 0.0
    %3111 = vmatpush1.msra.mxu0 0.0
    %3112 = vmatprep.subr.mxu0 0.0
    %3113 = vmatpush1.msra.mxu0 0.0
    %3114 = vmatprep.subr.mxu0 0.0
    %3115 = vmatpush1.msra.mxu0 0.0
    %3116 = vmatprep.subr.mxu0 0.0
    %3117 = vmatpush1.msra.mxu0 0.0
    %3118 = vmatprep.subr.mxu0 0.0
    %3119 = vmatpush1.msra.mxu0 0.0
    %3120 = vmatprep.subr.mxu0 0.0
    %3121 = vmatpush1.msra.mxu0 0.0
    %3122 = vmatprep.mubr.f32.mxu0 0.0
    %3123 = vmatmul.mubr.f32.gmra.mrb[0].mxu0 %v3053
    %v3124 = vpop.f32.mrb[0].mxu0
    %v3125 = vadd.f32 0.0, %v3124
    %v3126 = vpop.f32.mrb[0].mxu0
    %3127 = vmatprep.mubr.f32.mxu0 0.0
    %3128 = vmatmul.mubr.f32.gmra.mrb[0].mxu0 %v3056
    %v3129 = vpop.f32.mrb[0].mxu0
    %v3130 = vadd.f32 0.0, %v3129
    %v3131 = vpop.f32.mrb[0].mxu0
    %3132 = vdwg.mxu0
    %v3133 = vadd.f32 %v2716, %v3125
    %v3134 = vadd.f32 %v2717, %v3130
    %3135 = vrot.lane.b32.xlu0 %v2281, 112
    %v3136 = vpop.permute.xlu0 %3135
    %3137 = vrot.lane.b32.xlu0 %v2281, 80
    %v3138 = vpop.permute.xlu0 %3137
    %v3139 = vsel %vm220, %v3136, 0
    %v3141 = vsel %vm220, %v3138, 0
    %3143 = vmatprep.subr.mxu0 0.0
    %3144 = vmatpush1.xpose.msra.mxu0 %v3141
    %3145 = vmatprep.subr.mxu0 0.0
    %3146 = vmatpush1.xpose.msra.mxu0 0.0
    %3147 = vmatprep.subr.mxu0 0.0
    %3148 = vmatpush1.xpose.msra.mxu0 0.0
    %3149 = vmatprep.subr.mxu0 0.0
    %3150 = vmatpush1.xpose.msra.mxu0 0.0
    %3151 = vmatprep.subr.mxu0 0.0
    %3152 = vmatpush1.xpose.msra.mxu0 0.0
    %3153 = vmatprep.subr.mxu0 0.0
    %3154 = vmatpush1.xpose.msra.mxu0 0.0
    %3155 = vmatprep.subr.mxu0 0.0
    %3156 = vmatpush1.xpose.msra.mxu0 0.0
    %3157 = vmatprep.subr.mxu0 0.0
    %3158 = vmatpush1.xpose.msra.mxu0 0.0
    %3159 = vmatprep.subr.mxu0 0.0
    %3160 = vmatpush1.xpose.msra.mxu0 0.0
    %3161 = vmatprep.subr.mxu0 0.0
    %3162 = vmatpush1.xpose.msra.mxu0 0.0
    %3163 = vmatprep.subr.mxu0 0.0
    %3164 = vmatpush1.xpose.msra.mxu0 0.0
    %3165 = vmatprep.subr.mxu0 0.0
    %3166 = vmatpush1.xpose.msra.mxu0 0.0
    %3167 = vmatprep.subr.mxu0 0.0
    %3168 = vmatpush1.xpose.msra.mxu0 0.0
    %3169 = vmatprep.subr.mxu0 0.0
    %3170 = vmatpush1.xpose.msra.mxu0 0.0
    %3171 = vmatprep.subr.mxu0 0.0
    %3172 = vmatpush1.xpose.msra.mxu0 0.0
    %3173 = vmatprep.subr.mxu0 0.0
    %3174 = vmatpush1.xpose.msra.mxu0 0.0
    %3175 = vmatprep.subr.mxu0 0.0
    %3176 = vmatpush1.xpose.msra.mxu0 0.0
    %3177 = vmatprep.subr.mxu0 0.0
    %3178 = vmatpush1.xpose.msra.mxu0 0.0
    %3179 = vmatprep.subr.mxu0 0.0
    %3180 = vmatpush1.xpose.msra.mxu0 0.0
    %3181 = vmatprep.subr.mxu0 0.0
    %3182 = vmatpush1.xpose.msra.mxu0 0.0
    %3183 = vmatprep.subr.mxu0 0.0
    %3184 = vmatpush1.xpose.msra.mxu0 0.0
    %3185 = vmatprep.subr.mxu0 0.0
    %3186 = vmatpush1.xpose.msra.mxu0 0.0
    %3187 = vmatprep.subr.mxu0 0.0
    %3188 = vmatpush1.xpose.msra.mxu0 0.0
    %3189 = vmatprep.subr.mxu0 0.0
    %3190 = vmatpush1.xpose.msra.mxu0 0.0
    %3191 = vmatprep.subr.mxu0 0.0
    %3192 = vmatpush1.xpose.msra.mxu0 0.0
    %3193 = vmatprep.subr.mxu0 0.0
    %3194 = vmatpush1.xpose.msra.mxu0 0.0
    %3195 = vmatprep.subr.mxu0 0.0
    %3196 = vmatpush1.xpose.msra.mxu0 0.0
    %3197 = vmatprep.subr.mxu0 0.0
    %3198 = vmatpush1.xpose.msra.mxu0 0.0
    %3199 = vmatprep.subr.mxu0 0.0
    %3200 = vmatpush1.xpose.msra.mxu0 0.0
    %3201 = vmatprep.subr.mxu0 0.0
    %3202 = vmatpush1.xpose.msra.mxu0 0.0
    %3203 = vmatprep.subr.mxu0 0.0
    %3204 = vmatpush1.xpose.msra.mxu0 0.0
    %3205 = vmatprep.subr.mxu0 0.0
    %3206 = vmatpush1.xpose.msra.mxu0 0.0
    %3207 = vmatprep.mubr.f32.mxu0 0.0
    %3208 = vmatmul.mubr.f32.gmra.mrb[0].mxu0 %v3139
    %v3209 = vpop.f32.mrb[0].mxu0
    %v3210 = vadd.f32 0.0, %v3209
    %v3211 = vpop.f32.mrb[0].mxu0
    %3212 = vdwg.mxu0
    %3213 = vrot.lane.b32.xlu0 %v2286, 112
    %v3214 = vpop.permute.xlu0 %3213
    %3215 = vrot.lane.b32.xlu0 %v2286, 80
    %v3216 = vpop.permute.xlu0 %3215
    %v3217 = vsel %vm220, %v3214, 0
    %v3219 = vsel %vm220, %v3216, 0
    %3221 = vmatprep.subr.mxu0 0.0
    %3222 = vmatpush1.xpose.msra.mxu0 %v3219
    %3223 = vmatprep.subr.mxu0 0.0
    %3224 = vmatpush1.xpose.msra.mxu0 0.0
    %3225 = vmatprep.subr.mxu0 0.0
    %3226 = vmatpush1.xpose.msra.mxu0 0.0
    %3227 = vmatprep.subr.mxu0 0.0
    %3228 = vmatpush1.xpose.msra.mxu0 0.0
    %3229 = vmatprep.subr.mxu0 0.0
    %3230 = vmatpush1.xpose.msra.mxu0 0.0
    %3231 = vmatprep.subr.mxu0 0.0
    %3232 = vmatpush1.xpose.msra.mxu0 0.0
    %3233 = vmatprep.subr.mxu0 0.0
    %3234 = vmatpush1.xpose.msra.mxu0 0.0
    %3235 = vmatprep.subr.mxu0 0.0
    %3236 = vmatpush1.xpose.msra.mxu0 0.0
    %3237 = vmatprep.subr.mxu0 0.0
    %3238 = vmatpush1.xpose.msra.mxu0 0.0
    %3239 = vmatprep.subr.mxu0 0.0
    %3240 = vmatpush1.xpose.msra.mxu0 0.0
    %3241 = vmatprep.subr.mxu0 0.0
    %3242 = vmatpush1.xpose.msra.mxu0 0.0
    %3243 = vmatprep.subr.mxu0 0.0
    %3244 = vmatpush1.xpose.msra.mxu0 0.0
    %3245 = vmatprep.subr.mxu0 0.0
    %3246 = vmatpush1.xpose.msra.mxu0 0.0
    %3247 = vmatprep.subr.mxu0 0.0
    %3248 = vmatpush1.xpose.msra.mxu0 0.0
    %3249 = vmatprep.subr.mxu0 0.0
    %3250 = vmatpush1.xpose.msra.mxu0 0.0
    %3251 = vmatprep.subr.mxu0 0.0
    %3252 = vmatpush1.xpose.msra.mxu0 0.0
    %3253 = vmatprep.subr.mxu0 0.0
    %3254 = vmatpush1.xpose.msra.mxu0 0.0
    %3255 = vmatprep.subr.mxu0 0.0
    %3256 = vmatpush1.xpose.msra.mxu0 0.0
    %3257 = vmatprep.subr.mxu0 0.0
    %3258 = vmatpush1.xpose.msra.mxu0 0.0
    %3259 = vmatprep.subr.mxu0 0.0
    %3260 = vmatpush1.xpose.msra.mxu0 0.0
    %3261 = vmatprep.subr.mxu0 0.0
    %3262 = vmatpush1.xpose.msra.mxu0 0.0
    %3263 = vmatprep.subr.mxu0 0.0
    %3264 = vmatpush1.xpose.msra.mxu0 0.0
    %3265 = vmatprep.subr.mxu0 0.0
    %3266 = vmatpush1.xpose.msra.mxu0 0.0
    %3267 = vmatprep.subr.mxu0 0.0
    %3268 = vmatpush1.xpose.msra.mxu0 0.0
    %3269 = vmatprep.subr.mxu0 0.0
    %3270 = vmatpush1.xpose.msra.mxu0 0.0
    %3271 = vmatprep.subr.mxu0 0.0
    %3272 = vmatpush1.xpose.msra.mxu0 0.0
    %3273 = vmatprep.subr.mxu0 0.0
    %3274 = vmatpush1.xpose.msra.mxu0 0.0
    %3275 = vmatprep.subr.mxu0 0.0
    %3276 = vmatpush1.xpose.msra.mxu0 0.0
    %3277 = vmatprep.subr.mxu0 0.0
    %3278 = vmatpush1.xpose.msra.mxu0 0.0
    %3279 = vmatprep.subr.mxu0 0.0
    %3280 = vmatpush1.xpose.msra.mxu0 0.0
    %3281 = vmatprep.subr.mxu0 0.0
    %3282 = vmatpush1.xpose.msra.mxu0 0.0
    %3283 = vmatprep.subr.mxu0 0.0
    %3284 = vmatpush1.xpose.msra.mxu0 0.0
    %3285 = vmatprep.mubr.f32.mxu0 0.0
    %3286 = vmatmul.mubr.f32.gmra.mrb[0].mxu0 %v3217
    %v3287 = vpop.f32.mrb[0].mxu0
    %v3288 = vadd.f32 0.0, %v3287
    %v3289 = vpop.f32.mrb[0].mxu0
    %3290 = vdwg.mxu0
    %v3291 = vmul.f32 %v3210, 0.35355338
    %v3292 = vmul.f32 %v3288, 0.35355338
    %v3293 = vadd.f32 %v3291, %v379
    %v3294 = vadd.f32 %v3292, %v383
    %v3295 = vsel %vm220, %v3293, -inf
    %3296 = vmax.xlane.f32.xlu0 %v3295
    %v3297 = vpop.xlane.xlu0 %3296
    %v3298 = vsel %vm220, %v3294, -inf
    %3299 = vmax.xlane.f32.xlu0 %v3298
    %v3300 = vpop.xlane.xlu0 %3299
    %v3301 = vsub.f32 %v3293, %v3297
    %v3302 = vsub.f32 %v3294, %v3300
    %v3303 = vmul.f32 %v3301, 1.442695
    %v3304 = vpow.pop %v3303
    %v3305 = vmul.f32 %v3302, 1.442695
    %v3306 = vpow.pop %v3305
    %v3307 = vsel %vm220, %v3304, 0.0
    %3308 = vadd.xlane.f32.xlu0 %v3307
    %v3309 = vpop.xlane.xlu0 %3308
    %v3310 = vsel %vm220, %v3306, 0.0
    %3311 = vadd.xlane.f32.xlu0 %v3310
    %v3312 = vpop.xlane.xlu0 %3311
    %v3313 = vrcp.pop %v3309
    %v3314 = vmul.f32 %v3304, %v3313
    %v3315 = vrcp.pop %v3312
    %v3316 = vmul.f32 %v3306, %v3315
    %3317 = vrot.lane.b32.xlu0 %v2281, 48
    %v3318 = vpop.permute.xlu0 %3317
    %v3321 = vsel %vm220, %v3314, 0
    %3323 = vmatprep.subr.mxu0 0.0
    %3324 = vmatpush1.msra.mxu0 %v3318
    %3325 = vmatprep.subr.mxu0 0.0
    %3326 = vmatpush1.msra.mxu0 0.0
    %3327 = vmatprep.subr.mxu0 0.0
    %3328 = vmatpush1.msra.mxu0 0.0
    %3329 = vmatprep.subr.mxu0 0.0
    %3330 = vmatpush1.msra.mxu0 0.0
    %3331 = vmatprep.subr.mxu0 0.0
    %3332 = vmatpush1.msra.mxu0 0.0
    %3333 = vmatprep.subr.mxu0 0.0
    %3334 = vmatpush1.msra.mxu0 0.0
    %3335 = vmatprep.subr.mxu0 0.0
    %3336 = vmatpush1.msra.mxu0 0.0
    %3337 = vmatprep.subr.mxu0 0.0
    %3338 = vmatpush1.msra.mxu0 0.0
    %3339 = vmatprep.subr.mxu0 0.0
    %3340 = vmatpush1.msra.mxu0 0.0
    %3341 = vmatprep.subr.mxu0 0.0
    %3342 = vmatpush1.msra.mxu0 0.0
    %3343 = vmatprep.subr.mxu0 0.0
    %3344 = vmatpush1.msra.mxu0 0.0
    %3345 = vmatprep.subr.mxu0 0.0
    %3346 = vmatpush1.msra.mxu0 0.0
    %3347 = vmatprep.subr.mxu0 0.0
    %3348 = vmatpush1.msra.mxu0 0.0
    %3349 = vmatprep.subr.mxu0 0.0
    %3350 = vmatpush1.msra.mxu0 0.0
    %3351 = vmatprep.subr.mxu0 0.0
    %3352 = vmatpush1.msra.mxu0 0.0
    %3353 = vmatprep.subr.mxu0 0.0
    %3354 = vmatpush1.msra.mxu0 0.0
    %3355 = vmatprep.subr.mxu0 0.0
    %3356 = vmatpush1.msra.mxu0 0.0
    %3357 = vmatprep.subr.mxu0 0.0
    %3358 = vmatpush1.msra.mxu0 0.0
    %3359 = vmatprep.subr.mxu0 0.0
    %3360 = vmatpush1.msra.mxu0 0.0
    %3361 = vmatprep.subr.mxu0 0.0
    %3362 = vmatpush1.msra.mxu0 0.0
    %3363 = vmatprep.subr.mxu0 0.0
    %3364 = vmatpush1.msra.mxu0 0.0
    %3365 = vmatprep.subr.mxu0 0.0
    %3366 = vmatpush1.msra.mxu0 0.0
    %3367 = vmatprep.subr.mxu0 0.0
    %3368 = vmatpush1.msra.mxu0 0.0
    %3369 = vmatprep.subr.mxu0 0.0
    %3370 = vmatpush1.msra.mxu0 0.0
    %3371 = vmatprep.subr.mxu0 0.0
    %3372 = vmatpush1.msra.mxu0 0.0
    %3373 = vmatprep.subr.mxu0 0.0
    %3374 = vmatpush1.msra.mxu0 0.0
    %3375 = vmatprep.subr.mxu0 0.0
    %3376 = vmatpush1.msra.mxu0 0.0
    %3377 = vmatprep.subr.mxu0 0.0
    %3378 = vmatpush1.msra.mxu0 0.0
    %3379 = vmatprep.subr.mxu0 0.0
    %3380 = vmatpush1.msra.mxu0 0.0
    %3381 = vmatprep.subr.mxu0 0.0
    %3382 = vmatpush1.msra.mxu0 0.0
    %3383 = vmatprep.subr.mxu0 0.0
    %3384 = vmatpush1.msra.mxu0 0.0
    %3385 = vmatprep.subr.mxu0 0.0
    %3386 = vmatpush1.msra.mxu0 0.0
    %3387 = vmatprep.mubr.f32.mxu0 0.0
    %3388 = vmatmul.mubr.f32.gmra.mrb[0].mxu0 %v3321
    %v3389 = vpop.f32.mrb[0].mxu0
    %v3390 = vadd.f32 0.0, %v3389
    %v3391 = vpop.f32.mrb[0].mxu0
    %3392 = vdwg.mxu0
    %3393 = vrot.lane.b32.xlu0 %v2286, 48
    %v3394 = vpop.permute.xlu0 %3393
    %v3397 = vsel %vm220, %v3316, 0
    %3399 = vmatprep.subr.mxu0 0.0
    %3400 = vmatpush1.msra.mxu0 %v3394
    %3401 = vmatprep.subr.mxu0 0.0
    %3402 = vmatpush1.msra.mxu0 0.0
    %3403 = vmatprep.subr.mxu0 0.0
    %3404 = vmatpush1.msra.mxu0 0.0
    %3405 = vmatprep.subr.mxu0 0.0
    %3406 = vmatpush1.msra.mxu0 0.0
    %3407 = vmatprep.subr.mxu0 0.0
    %3408 = vmatpush1.msra.mxu0 0.0
    %3409 = vmatprep.subr.mxu0 0.0
    %3410 = vmatpush1.msra.mxu0 0.0
    %3411 = vmatprep.subr.mxu0 0.0
    %3412 = vmatpush1.msra.mxu0 0.0
    %3413 = vmatprep.subr.mxu0 0.0
    %3414 = vmatpush1.msra.mxu0 0.0
    %3415 = vmatprep.subr.mxu0 0.0
    %3416 = vmatpush1.msra.mxu0 0.0
    %3417 = vmatprep.subr.mxu0 0.0
    %3418 = vmatpush1.msra.mxu0 0.0
    %3419 = vmatprep.subr.mxu0 0.0
    %3420 = vmatpush1.msra.mxu0 0.0
    %3421 = vmatprep.subr.mxu0 0.0
    %3422 = vmatpush1.msra.mxu0 0.0
    %3423 = vmatprep.subr.mxu0 0.0
    %3424 = vmatpush1.msra.mxu0 0.0
    %3425 = vmatprep.subr.mxu0 0.0
    %3426 = vmatpush1.msra.mxu0 0.0
    %3427 = vmatprep.subr.mxu0 0.0
    %3428 = vmatpush1.msra.mxu0 0.0
    %3429 = vmatprep.subr.mxu0 0.0
    %3430 = vmatpush1.msra.mxu0 0.0
    %3431 = vmatprep.subr.mxu0 0.0
    %3432 = vmatpush1.msra.mxu0 0.0
    %3433 = vmatprep.subr.mxu0 0.0
    %3434 = vmatpush1.msra.mxu0 0.0
    %3435 = vmatprep.subr.mxu0 0.0
    %3436 = vmatpush1.msra.mxu0 0.0
    %3437 = vmatprep.subr.mxu0 0.0
    %3438 = vmatpush1.msra.mxu0 0.0
    %3439 = vmatprep.subr.mxu0 0.0
    %3440 = vmatpush1.msra.mxu0 0.0
    %3441 = vmatprep.subr.mxu0 0.0
    %3442 = vmatpush1.msra.mxu0 0.0
    %3443 = vmatprep.subr.mxu0 0.0
    %3444 = vmatpush1.msra.mxu0 0.0
    %3445 = vmatprep.subr.mxu0 0.0
    %3446 = vmatpush1.msra.mxu0 0.0
    %3447 = vmatprep.subr.mxu0 0.0
    %3448 = vmatpush1.msra.mxu0 0.0
    %3449 = vmatprep.subr.mxu0 0.0
    %3450 = vmatpush1.msra.mxu0 0.0
    %3451 = vmatprep.subr.mxu0 0.0
    %3452 = vmatpush1.msra.mxu0 0.0
    %3453 = vmatprep.subr.mxu0 0.0
    %3454 = vmatpush1.msra.mxu0 0.0
    %3455 = vmatprep.subr.mxu0 0.0
    %3456 = vmatpush1.msra.mxu0 0.0
    %3457 = vmatprep.subr.mxu0 0.0
    %3458 = vmatpush1.msra.mxu0 0.0
    %3459 = vmatprep.subr.mxu0 0.0
    %3460 = vmatpush1.msra.mxu0 0.0
    %3461 = vmatprep.subr.mxu0 0.0
    %3462 = vmatpush1.msra.mxu0 0.0
    %3463 = vmatprep.mubr.f32.mxu0 0.0
    %3464 = vmatmul.mubr.f32.gmra.mrb[0].mxu0 %v3397
    %v3465 = vpop.f32.mrb[0].mxu0
    %v3466 = vadd.f32 0.0, %v3465
    %v3467 = vpop.f32.mrb[0].mxu0
    %3468 = vdwg.mxu0
    %v3470 = vsel %vm220, %v3390, 0
    %v3473 = vsel %vm220, %v3466, 0
    %3475 = vmatprep.subr.mxu0 0.0
    %3476 = vmatpush1.msra.mxu0 %v2292
    %3477 = vmatprep.subr.mxu0 0.0
    %3478 = vmatpush1.msra.mxu0 0.0
    %3479 = vmatprep.subr.mxu0 0.0
    %3480 = vmatpush1.msra.mxu0 0.0
    %3481 = vmatprep.subr.mxu0 0.0
    %3482 = vmatpush1.msra.mxu0 0.0
    %3483 = vmatprep.subr.mxu0 0.0
    %3484 = vmatpush1.msra.mxu0 0.0
    %3485 = vmatprep.subr.mxu0 0.0
    %3486 = vmatpush1.msra.mxu0 0.0
    %3487 = vmatprep.subr.mxu0 0.0
    %3488 = vmatpush1.msra.mxu0 0.0
    %3489 = vmatprep.subr.mxu0 0.0
    %3490 = vmatpush1.msra.mxu0 0.0
    %3491 = vmatprep.subr.mxu0 0.0
    %3492 = vmatpush1.msra.mxu0 0.0
    %3493 = vmatprep.subr.mxu0 0.0
    %3494 = vmatpush1.msra.mxu0 0.0
    %3495 = vmatprep.subr.mxu0 0.0
    %3496 = vmatpush1.msra.mxu0 0.0
    %3497 = vmatprep.subr.mxu0 0.0
    %3498 = vmatpush1.msra.mxu0 0.0
    %3499 = vmatprep.subr.mxu0 0.0
    %3500 = vmatpush1.msra.mxu0 0.0
    %3501 = vmatprep.subr.mxu0 0.0
    %3502 = vmatpush1.msra.mxu0 0.0
    %3503 = vmatprep.subr.mxu0 0.0
    %3504 = vmatpush1.msra.mxu0 0.0
    %3505 = vmatprep.subr.mxu0 0.0
    %3506 = vmatpush1.msra.mxu0 0.0
    %3507 = vmatprep.subr.mxu0 0.0
    %3508 = vmatpush1.msra.mxu0 0.0
    %3509 = vmatprep.subr.mxu0 0.0
    %3510 = vmatpush1.msra.mxu0 0.0
    %3511 = vmatprep.subr.mxu0 0.0
    %3512 = vmatpush1.msra.mxu0 0.0
    %3513 = vmatprep.subr.mxu0 0.0
    %3514 = vmatpush1.msra.mxu0 0.0
    %3515 = vmatprep.subr.mxu0 0.0
    %3516 = vmatpush1.msra.mxu0 0.0
    %3517 = vmatprep.subr.mxu0 0.0
    %3518 = vmatpush1.msra.mxu0 0.0
    %3519 = vmatprep.subr.mxu0 0.0
    %3520 = vmatpush1.msra.mxu0 0.0
    %3521 = vmatprep.subr.mxu0 0.0
    %3522 = vmatpush1.msra.mxu0 0.0
    %3523 = vmatprep.subr.mxu0 0.0
    %3524 = vmatpush1.msra.mxu0 0.0
    %3525 = vmatprep.subr.mxu0 0.0
    %3526 = vmatpush1.msra.mxu0 0.0
    %3527 = vmatprep.subr.mxu0 0.0
    %3528 = vmatpush1.msra.mxu0 0.0
    %3529 = vmatprep.subr.mxu0 0.0
    %3530 = vmatpush1.msra.mxu0 0.0
    %3531 = vmatprep.subr.mxu0 0.0
    %3532 = vmatpush1.msra.mxu0 0.0
    %3533 = vmatprep.subr.mxu0 0.0
    %3534 = vmatpush1.msra.mxu0 0.0
    %3535 = vmatprep.subr.mxu0 0.0
    %3536 = vmatpush1.msra.mxu0 0.0
    %3537 = vmatprep.subr.mxu0 0.0
    %3538 = vmatpush1.msra.mxu0 0.0
    %3539 = vmatprep.mubr.f32.mxu0 0.0
    %3540 = vmatmul.mubr.f32.gmra.mrb[0].mxu0 %v3470
    %v3541 = vpop.f32.mrb[0].mxu0
    %v3542 = vadd.f32 0.0, %v3541
    %v3543 = vpop.f32.mrb[0].mxu0
    %3544 = vmatprep.mubr.f32.mxu0 0.0
    %3545 = vmatmul.mubr.f32.gmra.mrb[0].mxu0 %v3473
    %v3546 = vpop.f32.mrb[0].mxu0
    %v3547 = vadd.f32 0.0, %v3546
    %v3548 = vpop.f32.mrb[0].mxu0
    %3549 = vdwg.mxu0
    %v3550 = vadd.f32 %v3133, %v3542
    %v3551 = vadd.f32 %v3134, %v3547
    %3552 = vrot.lane.b32.xlu0 %v2281, 104
    %v3553 = vpop.permute.xlu0 %3552
    %3554 = vrot.lane.b32.xlu0 %v2281, 72
    %v3555 = vpop.permute.xlu0 %3554
    %v3556 = vsel %vm220, %v3553, 0
    %v3558 = vsel %vm220, %v3555, 0
    %3560 = vmatprep.subr.mxu0 0.0
    %3561 = vmatpush1.xpose.msra.mxu0 %v3558
    %3562 = vmatprep.subr.mxu0 0.0
    %3563 = vmatpush1.xpose.msra.mxu0 0.0
    %3564 = vmatprep.subr.mxu0 0.0
    %3565 = vmatpush1.xpose.msra.mxu0 0.0
    %3566 = vmatprep.subr.mxu0 0.0
    %3567 = vmatpush1.xpose.msra.mxu0 0.0
    %3568 = vmatprep.subr.mxu0 0.0
    %3569 = vmatpush1.xpose.msra.mxu0 0.0
    %3570 = vmatprep.subr.mxu0 0.0
    %3571 = vmatpush1.xpose.msra.mxu0 0.0
    %3572 = vmatprep.subr.mxu0 0.0
    %3573 = vmatpush1.xpose.msra.mxu0 0.0
    %3574 = vmatprep.subr.mxu0 0.0
    %3575 = vmatpush1.xpose.msra.mxu0 0.0
    %3576 = vmatprep.subr.mxu0 0.0
    %3577 = vmatpush1.xpose.msra.mxu0 0.0
    %3578 = vmatprep.subr.mxu0 0.0
    %3579 = vmatpush1.xpose.msra.mxu0 0.0
    %3580 = vmatprep.subr.mxu0 0.0
    %3581 = vmatpush1.xpose.msra.mxu0 0.0
    %3582 = vmatprep.subr.mxu0 0.0
    %3583 = vmatpush1.xpose.msra.mxu0 0.0
    %3584 = vmatprep.subr.mxu0 0.0
    %3585 = vmatpush1.xpose.msra.mxu0 0.0
    %3586 = vmatprep.subr.mxu0 0.0
    %3587 = vmatpush1.xpose.msra.mxu0 0.0
    %3588 = vmatprep.subr.mxu0 0.0
    %3589 = vmatpush1.xpose.msra.mxu0 0.0
    %3590 = vmatprep.subr.mxu0 0.0
    %3591 = vmatpush1.xpose.msra.mxu0 0.0
    %3592 = vmatprep.subr.mxu0 0.0
    %3593 = vmatpush1.xpose.msra.mxu0 0.0
    %3594 = vmatprep.subr.mxu0 0.0
    %3595 = vmatpush1.xpose.msra.mxu0 0.0
    %3596 = vmatprep.subr.mxu0 0.0
    %3597 = vmatpush1.xpose.msra.mxu0 0.0
    %3598 = vmatprep.subr.mxu0 0.0
    %3599 = vmatpush1.xpose.msra.mxu0 0.0
    %3600 = vmatprep.subr.mxu0 0.0
    %3601 = vmatpush1.xpose.msra.mxu0 0.0
    %3602 = vmatprep.subr.mxu0 0.0
    %3603 = vmatpush1.xpose.msra.mxu0 0.0
    %3604 = vmatprep.subr.mxu0 0.0
    %3605 = vmatpush1.xpose.msra.mxu0 0.0
    %3606 = vmatprep.subr.mxu0 0.0
    %3607 = vmatpush1.xpose.msra.mxu0 0.0
    %3608 = vmatprep.subr.mxu0 0.0
    %3609 = vmatpush1.xpose.msra.mxu0 0.0
    %3610 = vmatprep.subr.mxu0 0.0
    %3611 = vmatpush1.xpose.msra.mxu0 0.0
    %3612 = vmatprep.subr.mxu0 0.0
    %3613 = vmatpush1.xpose.msra.mxu0 0.0
    %3614 = vmatprep.subr.mxu0 0.0
    %3615 = vmatpush1.xpose.msra.mxu0 0.0
    %3616 = vmatprep.subr.mxu0 0.0
    %3617 = vmatpush1.xpose.msra.mxu0 0.0
    %3618 = vmatprep.subr.mxu0 0.0
    %3619 = vmatpush1.xpose.msra.mxu0 0.0
    %3620 = vmatprep.subr.mxu0 0.0
    %3621 = vmatpush1.xpose.msra.mxu0 0.0
    %3622 = vmatprep.subr.mxu0 0.0
    %3623 = vmatpush1.xpose.msra.mxu0 0.0
    %3624 = vmatprep.mubr.f32.mxu0 0.0
    %3625 = vmatmul.mubr.f32.gmra.mrb[0].mxu0 %v3556
    %v3626 = vpop.f32.mrb[0].mxu0
    %v3627 = vadd.f32 0.0, %v3626
    %v3628 = vpop.f32.mrb[0].mxu0
    %3629 = vdwg.mxu0
    %3630 = vrot.lane.b32.xlu0 %v2286, 104
    %v3631 = vpop.permute.xlu0 %3630
    %3632 = vrot.lane.b32.xlu0 %v2286, 72
    %v3633 = vpop.permute.xlu0 %3632
    %v3634 = vsel %vm220, %v3631, 0
    %v3636 = vsel %vm220, %v3633, 0
    %3638 = vmatprep.subr.mxu0 0.0
    %3639 = vmatpush1.xpose.msra.mxu0 %v3636
    %3640 = vmatprep.subr.mxu0 0.0
    %3641 = vmatpush1.xpose.msra.mxu0 0.0
    %3642 = vmatprep.subr.mxu0 0.0
    %3643 = vmatpush1.xpose.msra.mxu0 0.0
    %3644 = vmatprep.subr.mxu0 0.0
    %3645 = vmatpush1.xpose.msra.mxu0 0.0
    %3646 = vmatprep.subr.mxu0 0.0
    %3647 = vmatpush1.xpose.msra.mxu0 0.0
    %3648 = vmatprep.subr.mxu0 0.0
    %3649 = vmatpush1.xpose.msra.mxu0 0.0
    %3650 = vmatprep.subr.mxu0 0.0
    %3651 = vmatpush1.xpose.msra.mxu0 0.0
    %3652 = vmatprep.subr.mxu0 0.0
    %3653 = vmatpush1.xpose.msra.mxu0 0.0
    %3654 = vmatprep.subr.mxu0 0.0
    %3655 = vmatpush1.xpose.msra.mxu0 0.0
    %3656 = vmatprep.subr.mxu0 0.0
    %3657 = vmatpush1.xpose.msra.mxu0 0.0
    %3658 = vmatprep.subr.mxu0 0.0
    %3659 = vmatpush1.xpose.msra.mxu0 0.0
    %3660 = vmatprep.subr.mxu0 0.0
    %3661 = vmatpush1.xpose.msra.mxu0 0.0
    %3662 = vmatprep.subr.mxu0 0.0
    %3663 = vmatpush1.xpose.msra.mxu0 0.0
    %3664 = vmatprep.subr.mxu0 0.0
    %3665 = vmatpush1.xpose.msra.mxu0 0.0
    %3666 = vmatprep.subr.mxu0 0.0
    %3667 = vmatpush1.xpose.msra.mxu0 0.0
    %3668 = vmatprep.subr.mxu0 0.0
    %3669 = vmatpush1.xpose.msra.mxu0 0.0
    %3670 = vmatprep.subr.mxu0 0.0
    %3671 = vmatpush1.xpose.msra.mxu0 0.0
    %3672 = vmatprep.subr.mxu0 0.0
    %3673 = vmatpush1.xpose.msra.mxu0 0.0
    %3674 = vmatprep.subr.mxu0 0.0
    %3675 = vmatpush1.xpose.msra.mxu0 0.0
    %3676 = vmatprep.subr.mxu0 0.0
    %3677 = vmatpush1.xpose.msra.mxu0 0.0
    %3678 = vmatprep.subr.mxu0 0.0
    %3679 = vmatpush1.xpose.msra.mxu0 0.0
    %3680 = vmatprep.subr.mxu0 0.0
    %3681 = vmatpush1.xpose.msra.mxu0 0.0
    %3682 = vmatprep.subr.mxu0 0.0
    %3683 = vmatpush1.xpose.msra.mxu0 0.0
    %3684 = vmatprep.subr.mxu0 0.0
    %3685 = vmatpush1.xpose.msra.mxu0 0.0
    %3686 = vmatprep.subr.mxu0 0.0
    %3687 = vmatpush1.xpose.msra.mxu0 0.0
    %3688 = vmatprep.subr.mxu0 0.0
    %3689 = vmatpush1.xpose.msra.mxu0 0.0
    %3690 = vmatprep.subr.mxu0 0.0
    %3691 = vmatpush1.xpose.msra.mxu0 0.0
    %3692 = vmatprep.subr.mxu0 0.0
    %3693 = vmatpush1.xpose.msra.mxu0 0.0
    %3694 = vmatprep.subr.mxu0 0.0
    %3695 = vmatpush1.xpose.msra.mxu0 0.0
    %3696 = vmatprep.subr.mxu0 0.0
    %3697 = vmatpush1.xpose.msra.mxu0 0.0
    %3698 = vmatprep.subr.mxu0 0.0
    %3699 = vmatpush1.xpose.msra.mxu0 0.0
    %3700 = vmatprep.subr.mxu0 0.0
    %3701 = vmatpush1.xpose.msra.mxu0 0.0
    %3702 = vmatprep.mubr.f32.mxu0 0.0
    %3703 = vmatmul.mubr.f32.gmra.mrb[0].mxu0 %v3634
    %v3704 = vpop.f32.mrb[0].mxu0
    %v3705 = vadd.f32 0.0, %v3704
    %v3706 = vpop.f32.mrb[0].mxu0
    %3707 = vdwg.mxu0
    %v3708 = vmul.f32 %v3627, 0.35355338
    %v3709 = vmul.f32 %v3705, 0.35355338
    %v3710 = vadd.f32 %v3708, %v379
    %v3711 = vadd.f32 %v3709, %v383
    %v3712 = vsel %vm220, %v3710, -inf
    %3713 = vmax.xlane.f32.xlu0 %v3712
    %v3714 = vpop.xlane.xlu0 %3713
    %v3715 = vsel %vm220, %v3711, -inf
    %3716 = vmax.xlane.f32.xlu0 %v3715
    %v3717 = vpop.xlane.xlu0 %3716
    %v3718 = vsub.f32 %v3710, %v3714
    %v3719 = vsub.f32 %v3711, %v3717
    %v3720 = vmul.f32 %v3718, 1.442695
    %v3721 = vpow.pop %v3720
    %v3722 = vmul.f32 %v3719, 1.442695
    %v3723 = vpow.pop %v3722
    %v3724 = vsel %vm220, %v3721, 0.0
    %3725 = vadd.xlane.f32.xlu0 %v3724
    %v3726 = vpop.xlane.xlu0 %3725
    %v3727 = vsel %vm220, %v3723, 0.0
    %3728 = vadd.xlane.f32.xlu0 %v3727
    %v3729 = vpop.xlane.xlu0 %3728
    %v3730 = vrcp.pop %v3726
    %v3731 = vmul.f32 %v3721, %v3730
    %v3732 = vrcp.pop %v3729
    %v3733 = vmul.f32 %v3723, %v3732
    %3734 = vrot.lane.b32.xlu0 %v2281, 40
    %v3735 = vpop.permute.xlu0 %3734
    %v3738 = vsel %vm220, %v3731, 0
    %3740 = vmatprep.subr.mxu0 0.0
    %3741 = vmatpush1.msra.mxu0 %v3735
    %3742 = vmatprep.subr.mxu0 0.0
    %3743 = vmatpush1.msra.mxu0 0.0
    %3744 = vmatprep.subr.mxu0 0.0
    %3745 = vmatpush1.msra.mxu0 0.0
    %3746 = vmatprep.subr.mxu0 0.0
    %3747 = vmatpush1.msra.mxu0 0.0
    %3748 = vmatprep.subr.mxu0 0.0
    %3749 = vmatpush1.msra.mxu0 0.0
    %3750 = vmatprep.subr.mxu0 0.0
    %3751 = vmatpush1.msra.mxu0 0.0
    %3752 = vmatprep.subr.mxu0 0.0
    %3753 = vmatpush1.msra.mxu0 0.0
    %3754 = vmatprep.subr.mxu0 0.0
    %3755 = vmatpush1.msra.mxu0 0.0
    %3756 = vmatprep.subr.mxu0 0.0
    %3757 = vmatpush1.msra.mxu0 0.0
    %3758 = vmatprep.subr.mxu0 0.0
    %3759 = vmatpush1.msra.mxu0 0.0
    %3760 = vmatprep.subr.mxu0 0.0
    %3761 = vmatpush1.msra.mxu0 0.0
    %3762 = vmatprep.subr.mxu0 0.0
    %3763 = vmatpush1.msra.mxu0 0.0
    %3764 = vmatprep.subr.mxu0 0.0
    %3765 = vmatpush1.msra.mxu0 0.0
    %3766 = vmatprep.subr.mxu0 0.0
    %3767 = vmatpush1.msra.mxu0 0.0
    %3768 = vmatprep.subr.mxu0 0.0
    %3769 = vmatpush1.msra.mxu0 0.0
    %3770 = vmatprep.subr.mxu0 0.0
    %3771 = vmatpush1.msra.mxu0 0.0
    %3772 = vmatprep.subr.mxu0 0.0
    %3773 = vmatpush1.msra.mxu0 0.0
    %3774 = vmatprep.subr.mxu0 0.0
    %3775 = vmatpush1.msra.mxu0 0.0
    %3776 = vmatprep.subr.mxu0 0.0
    %3777 = vmatpush1.msra.mxu0 0.0
    %3778 = vmatprep.subr.mxu0 0.0
    %3779 = vmatpush1.msra.mxu0 0.0
    %3780 = vmatprep.subr.mxu0 0.0
    %3781 = vmatpush1.msra.mxu0 0.0
    %3782 = vmatprep.subr.mxu0 0.0
    %3783 = vmatpush1.msra.mxu0 0.0
    %3784 = vmatprep.subr.mxu0 0.0
    %3785 = vmatpush1.msra.mxu0 0.0
    %3786 = vmatprep.subr.mxu0 0.0
    %3787 = vmatpush1.msra.mxu0 0.0
    %3788 = vmatprep.subr.mxu0 0.0
    %3789 = vmatpush1.msra.mxu0 0.0
    %3790 = vmatprep.subr.mxu0 0.0
    %3791 = vmatpush1.msra.mxu0 0.0
    %3792 = vmatprep.subr.mxu0 0.0
    %3793 = vmatpush1.msra.mxu0 0.0
    %3794 = vmatprep.subr.mxu0 0.0
    %3795 = vmatpush1.msra.mxu0 0.0
    %3796 = vmatprep.subr.mxu0 0.0
    %3797 = vmatpush1.msra.mxu0 0.0
    %3798 = vmatprep.subr.mxu0 0.0
    %3799 = vmatpush1.msra.mxu0 0.0
    %3800 = vmatprep.subr.mxu0 0.0
    %3801 = vmatpush1.msra.mxu0 0.0
    %3802 = vmatprep.subr.mxu0 0.0
    %3803 = vmatpush1.msra.mxu0 0.0
    %3804 = vmatprep.mubr.f32.mxu0 0.0
    %3805 = vmatmul.mubr.f32.gmra.mrb[0].mxu0 %v3738
    %v3806 = vpop.f32.mrb[0].mxu0
    %v3807 = vadd.f32 0.0, %v3806
    %v3808 = vpop.f32.mrb[0].mxu0
    %3809 = vdwg.mxu0
    %3810 = vrot.lane.b32.xlu0 %v2286, 40
    %v3811 = vpop.permute.xlu0 %3810
    %v3814 = vsel %vm220, %v3733, 0
    %3816 = vmatprep.subr.mxu0 0.0
    %3817 = vmatpush1.msra.mxu0 %v3811
    %3818 = vmatprep.subr.mxu0 0.0
    %3819 = vmatpush1.msra.mxu0 0.0
    %3820 = vmatprep.subr.mxu0 0.0
    %3821 = vmatpush1.msra.mxu0 0.0
    %3822 = vmatprep.subr.mxu0 0.0
    %3823 = vmatpush1.msra.mxu0 0.0
    %3824 = vmatprep.subr.mxu0 0.0
    %3825 = vmatpush1.msra.mxu0 0.0
    %3826 = vmatprep.subr.mxu0 0.0
    %3827 = vmatpush1.msra.mxu0 0.0
    %3828 = vmatprep.subr.mxu0 0.0
    %3829 = vmatpush1.msra.mxu0 0.0
    %3830 = vmatprep.subr.mxu0 0.0
    %3831 = vmatpush1.msra.mxu0 0.0
    %3832 = vmatprep.subr.mxu0 0.0
    %3833 = vmatpush1.msra.mxu0 0.0
    %3834 = vmatprep.subr.mxu0 0.0
    %3835 = vmatpush1.msra.mxu0 0.0
    %3836 = vmatprep.subr.mxu0 0.0
    %3837 = vmatpush1.msra.mxu0 0.0
    %3838 = vmatprep.subr.mxu0 0.0
    %3839 = vmatpush1.msra.mxu0 0.0
    %3840 = vmatprep.subr.mxu0 0.0
    %3841 = vmatpush1.msra.mxu0 0.0
    %3842 = vmatprep.subr.mxu0 0.0
    %3843 = vmatpush1.msra.mxu0 0.0
    %3844 = vmatprep.subr.mxu0 0.0
    %3845 = vmatpush1.msra.mxu0 0.0
    %3846 = vmatprep.subr.mxu0 0.0
    %3847 = vmatpush1.msra.mxu0 0.0
    %3848 = vmatprep.subr.mxu0 0.0
    %3849 = vmatpush1.msra.mxu0 0.0
    %3850 = vmatprep.subr.mxu0 0.0
    %3851 = vmatpush1.msra.mxu0 0.0
    %3852 = vmatprep.subr.mxu0 0.0
    %3853 = vmatpush1.msra.mxu0 0.0
    %3854 = vmatprep.subr.mxu0 0.0
    %3855 = vmatpush1.msra.mxu0 0.0
    %3856 = vmatprep.subr.mxu0 0.0
    %3857 = vmatpush1.msra.mxu0 0.0
    %3858 = vmatprep.subr.mxu0 0.0
    %3859 = vmatpush1.msra.mxu0 0.0
    %3860 = vmatprep.subr.mxu0 0.0
    %3861 = vmatpush1.msra.mxu0 0.0
    %3862 = vmatprep.subr.mxu0 0.0
    %3863 = vmatpush1.msra.mxu0 0.0
    %3864 = vmatprep.subr.mxu0 0.0
    %3865 = vmatpush1.msra.mxu0 0.0
    %3866 = vmatprep.subr.mxu0 0.0
    %3867 = vmatpush1.msra.mxu0 0.0
    %3868 = vmatprep.subr.mxu0 0.0
    %3869 = vmatpush1.msra.mxu0 0.0
    %3870 = vmatprep.subr.mxu0 0.0
    %3871 = vmatpush1.msra.mxu0 0.0
    %3872 = vmatprep.subr.mxu0 0.0
    %3873 = vmatpush1.msra.mxu0 0.0
    %3874 = vmatprep.subr.mxu0 0.0
    %3875 = vmatpush1.msra.mxu0 0.0
    %3876 = vmatprep.subr.mxu0 0.0
    %3877 = vmatpush1.msra.mxu0 0.0
    %3878 = vmatprep.subr.mxu0 0.0
    %3879 = vmatpush1.msra.mxu0 0.0
    %3880 = vmatprep.mubr.f32.mxu0 0.0
    %3881 = vmatmul.mubr.f32.gmra.mrb[0].mxu0 %v3814
    %v3882 = vpop.f32.mrb[0].mxu0
    %v3883 = vadd.f32 0.0, %v3882
    %v3884 = vpop.f32.mrb[0].mxu0
    %3885 = vdwg.mxu0
    %v3887 = vsel %vm220, %v3807, 0
    %v3890 = vsel %vm220, %v3883, 0
    %3892 = vmatprep.subr.mxu0 0.0
    %3893 = vmatpush1.msra.mxu0 %v2293
    %3894 = vmatprep.subr.mxu0 0.0
    %3895 = vmatpush1.msra.mxu0 0.0
    %3896 = vmatprep.subr.mxu0 0.0
    %3897 = vmatpush1.msra.mxu0 0.0
    %3898 = vmatprep.subr.mxu0 0.0
    %3899 = vmatpush1.msra.mxu0 0.0
    %3900 = vmatprep.subr.mxu0 0.0
    %3901 = vmatpush1.msra.mxu0 0.0
    %3902 = vmatprep.subr.mxu0 0.0
    %3903 = vmatpush1.msra.mxu0 0.0
    %3904 = vmatprep.subr.mxu0 0.0
    %3905 = vmatpush1.msra.mxu0 0.0
    %3906 = vmatprep.subr.mxu0 0.0
    %3907 = vmatpush1.msra.mxu0 0.0
    %3908 = vmatprep.subr.mxu0 0.0
    %3909 = vmatpush1.msra.mxu0 0.0
    %3910 = vmatprep.subr.mxu0 0.0
    %3911 = vmatpush1.msra.mxu0 0.0
    %3912 = vmatprep.subr.mxu0 0.0
    %3913 = vmatpush1.msra.mxu0 0.0
    %3914 = vmatprep.subr.mxu0 0.0
    %3915 = vmatpush1.msra.mxu0 0.0
    %3916 = vmatprep.subr.mxu0 0.0
    %3917 = vmatpush1.msra.mxu0 0.0
    %3918 = vmatprep.subr.mxu0 0.0
    %3919 = vmatpush1.msra.mxu0 0.0
    %3920 = vmatprep.subr.mxu0 0.0
    %3921 = vmatpush1.msra.mxu0 0.0
    %3922 = vmatprep.subr.mxu0 0.0
    %3923 = vmatpush1.msra.mxu0 0.0
    %3924 = vmatprep.subr.mxu0 0.0
    %3925 = vmatpush1.msra.mxu0 0.0
    %3926 = vmatprep.subr.mxu0 0.0
    %3927 = vmatpush1.msra.mxu0 0.0
    %3928 = vmatprep.subr.mxu0 0.0
    %3929 = vmatpush1.msra.mxu0 0.0
    %3930 = vmatprep.subr.mxu0 0.0
    %3931 = vmatpush1.msra.mxu0 0.0
    %3932 = vmatprep.subr.mxu0 0.0
    %3933 = vmatpush1.msra.mxu0 0.0
    %3934 = vmatprep.subr.mxu0 0.0
    %3935 = vmatpush1.msra.mxu0 0.0
    %3936 = vmatprep.subr.mxu0 0.0
    %3937 = vmatpush1.msra.mxu0 0.0
    %3938 = vmatprep.subr.mxu0 0.0
    %3939 = vmatpush1.msra.mxu0 0.0
    %3940 = vmatprep.subr.mxu0 0.0
    %3941 = vmatpush1.msra.mxu0 0.0
    %3942 = vmatprep.subr.mxu0 0.0
    %3943 = vmatpush1.msra.mxu0 0.0
    %3944 = vmatprep.subr.mxu0 0.0
    %3945 = vmatpush1.msra.mxu0 0.0
    %3946 = vmatprep.subr.mxu0 0.0
    %3947 = vmatpush1.msra.mxu0 0.0
    %3948 = vmatprep.subr.mxu0 0.0
    %3949 = vmatpush1.msra.mxu0 0.0
    %3950 = vmatprep.subr.mxu0 0.0
    %3951 = vmatpush1.msra.mxu0 0.0
    %3952 = vmatprep.subr.mxu0 0.0
    %3953 = vmatpush1.msra.mxu0 0.0
    %3954 = vmatprep.subr.mxu0 0.0
    %3955 = vmatpush1.msra.mxu0 0.0
    %3956 = vmatprep.mubr.f32.mxu0 0.0
    %3957 = vmatmul.mubr.f32.gmra.mrb[0].mxu0 %v3887
    %v3958 = vpop.f32.mrb[0].mxu0
    %v3959 = vadd.f32 0.0, %v3958
    %v3960 = vpop.f32.mrb[0].mxu0
    %3961 = vmatprep.mubr.f32.mxu0 0.0
    %3962 = vmatmul.mubr.f32.gmra.mrb[0].mxu0 %v3890
    %v3963 = vpop.f32.mrb[0].mxu0
    %v3964 = vadd.f32 0.0, %v3963
    %v3965 = vpop.f32.mrb[0].mxu0
    %3966 = vdwg.mxu0
    %v3967 = vadd.f32 %v3550, %v3959
    %v3968 = vadd.f32 %v3551, %v3964
    %v3969 = vadd.f32 %v3967, %v2193
    %v3970 = vadd.f32 %v3968, %v2194
    %s3971 = scalar_lea.vmem %s8, 1
    %v3972 = vld [vmem:[%s3971] sm:$0x1]
    %s3973 = scalar_lea.vmem %s9, 1
    %v3974 = vld [vmem:[%s3973] sm:$0x1]
    %v3975 = vsel %vm67, %v3969, 0.0
    %3976 = vadd.xlane.f32.xlu0 %v3975
    %v3977 = vpop.xlane.xlu0 %3976
    %v3978 = vsel %vm67, %v3970, 0.0
    %3979 = vadd.xlane.f32.xlu0 %v3978
    %v3980 = vpop.xlane.xlu0 %3979
    %v3981 = vmul.f32 %v3977, %v74
    %v3982 = vmul.f32 %v3980, %v74
    %v3983 = vsub.f32 %v3969, %v3981
    %v3984 = vsub.f32 %v3970, %v3982
    %v3985 = vmul.f32 %v3983, %v3983
    %v3986 = vmul.f32 %v3984, %v3984
    %v3987 = vsel %vm67, %v3985, 0.0
    %3988 = vadd.xlane.f32.xlu0 %v3987
    %v3989 = vpop.xlane.xlu0 %3988
    %v3990 = vsel %vm67, %v3986, 0.0
    %3991 = vadd.xlane.f32.xlu0 %v3990
    %v3992 = vpop.xlane.xlu0 %3991
    %v3993 = vmul.f32 %v3989, %v74
    %v3994 = vmul.f32 %v3992, %v74
    %v3995 = vadd.f32 %v3993, 1e-12
    %v3996 = vadd.f32 %v3994, 1e-12
    %v3997 = vrsqrt.pop %v3995
    %v3998 = vrsqrt.pop %v3996
    %v3999 = vmul.f32 %v3983, %v3997
    %v4000 = vmul.f32 %v3984, %v3998
    %v4002 = vlaneseq
    %v4003 = vshrl.u32 %v4002, 7
    %v4004 = vsub.s32 0, %v4003
    %v4005 = vrot.slane %v3972, %v4004
    %v4007 = vmul.f32 %v3999, %v4005
    %v4008 = vmul.f32 %v4000, %v4005
    %v4010 = vlaneseq
    %v4011 = vshrl.u32 %v4010, 7
    %v4012 = vsub.s32 0, %v4011
    %v4013 = vrot.slane %v3974, %v4012
    %v4015 = vadd.f32 %v4007, %v4013
    %v4016 = vadd.f32 %v4008, %v4013
    %s4017 = scalar_lea.vmem %s10, 32
    %v4018 = vld [vmem:[%s4017] sm:$0xff]
    %v4019 = vld [vmem:[%s4017 + $0x8] sm:$0xff]
    %v4020 = vld [vmem:[%s4017 + $0x10] sm:$0xff]
    %v4021 = vld [vmem:[%s4017 + $0x18] sm:$0xff]
    %s4022 = scalar_lea.vmem %s11, 1
    %v4023 = vld [vmem:[%s4022] sm:$0x1]
    %v4025 = vlaneseq
    %v4026 = vshrl.u32 %v4025, 7
    %v4027 = vsub.s32 0, %v4026
    %v4028 = vrot.slane %v4023, %v4027
    %v4031 = vsel %vm67, %v4015, 0
    %v4034 = vsel %vm67, %v4016, 0
    %4036 = vmatprep.subr.mxu0 0.0
    %4037 = vmatpush1.msra.mxu0 %v4018
    %4038 = vmatprep.subr.mxu0 0.0
    %4039 = vmatpush1.msra.mxu0 %v4019
    %4040 = vmatprep.subr.mxu0 0.0
    %4041 = vmatpush1.msra.mxu0 %v4020
    %4042 = vmatprep.subr.mxu0 0.0
    %4043 = vmatpush1.msra.mxu0 %v4021
    %4044 = vmatprep.subr.mxu0 0.0
    %4045 = vmatpush1.msra.mxu0 0.0
    %4046 = vmatprep.subr.mxu0 0.0
    %4047 = vmatpush1.msra.mxu0 0.0
    %4048 = vmatprep.subr.mxu0 0.0
    %4049 = vmatpush1.msra.mxu0 0.0
    %4050 = vmatprep.subr.mxu0 0.0
    %4051 = vmatpush1.msra.mxu0 0.0
    %4052 = vmatprep.subr.mxu0 0.0
    %4053 = vmatpush1.msra.mxu0 0.0
    %4054 = vmatprep.subr.mxu0 0.0
    %4055 = vmatpush1.msra.mxu0 0.0
    %4056 = vmatprep.subr.mxu0 0.0
    %4057 = vmatpush1.msra.mxu0 0.0
    %4058 = vmatprep.subr.mxu0 0.0
    %4059 = vmatpush1.msra.mxu0 0.0
    %4060 = vmatprep.subr.mxu0 0.0
    %4061 = vmatpush1.msra.mxu0 0.0
    %4062 = vmatprep.subr.mxu0 0.0
    %4063 = vmatpush1.msra.mxu0 0.0
    %4064 = vmatprep.subr.mxu0 0.0
    %4065 = vmatpush1.msra.mxu0 0.0
    %4066 = vmatprep.subr.mxu0 0.0
    %4067 = vmatpush1.msra.mxu0 0.0
    %4068 = vmatprep.subr.mxu0 0.0
    %4069 = vmatpush1.msra.mxu0 0.0
    %4070 = vmatprep.subr.mxu0 0.0
    %4071 = vmatpush1.msra.mxu0 0.0
    %4072 = vmatprep.subr.mxu0 0.0
    %4073 = vmatpush1.msra.mxu0 0.0
    %4074 = vmatprep.subr.mxu0 0.0
    %4075 = vmatpush1.msra.mxu0 0.0
    %4076 = vmatprep.subr.mxu0 0.0
    %4077 = vmatpush1.msra.mxu0 0.0
    %4078 = vmatprep.subr.mxu0 0.0
    %4079 = vmatpush1.msra.mxu0 0.0
    %4080 = vmatprep.subr.mxu0 0.0
    %4081 = vmatpush1.msra.mxu0 0.0
    %4082 = vmatprep.subr.mxu0 0.0
    %4083 = vmatpush1.msra.mxu0 0.0
    %4084 = vmatprep.subr.mxu0 0.0
    %4085 = vmatpush1.msra.mxu0 0.0
    %4086 = vmatprep.subr.mxu0 0.0
    %4087 = vmatpush1.msra.mxu0 0.0
    %4088 = vmatprep.subr.mxu0 0.0
    %4089 = vmatpush1.msra.mxu0 0.0
    %4090 = vmatprep.subr.mxu0 0.0
    %4091 = vmatpush1.msra.mxu0 0.0
    %4092 = vmatprep.subr.mxu0 0.0
    %4093 = vmatpush1.msra.mxu0 0.0
    %4094 = vmatprep.subr.mxu0 0.0
    %4095 = vmatpush1.msra.mxu0 0.0
    %4096 = vmatprep.subr.mxu0 0.0
    %4097 = vmatpush1.msra.mxu0 0.0
    %4098 = vmatprep.subr.mxu0 0.0
    %4099 = vmatpush1.msra.mxu0 0.0
    %4100 = vmatprep.mubr.f32.mxu0 0.0
    %4101 = vmatmul.mubr.f32.gmra.mrb[0].mxu0 %v4031
    %v4102 = vpop.f32.mrb[0].mxu0
    %v4103 = vadd.f32 %v4028, %v4102
    %v4104 = vpop.f32.mrb[0].mxu0
    %4105 = vmatprep.mubr.f32.mxu0 0.0
    %4106 = vmatmul.mubr.f32.gmra.mrb[0].mxu0 %v4034
    %v4107 = vpop.f32.mrb[0].mxu0
    %v4108 = vadd.f32 %v4028, %v4107
    %v4109 = vpop.f32.mrb[0].mxu0
    %4110 = vdwg.mxu0
    %v4111 = vmul.f32 %v4103, 0.5
    %v4112 = vmul.f32 %v4108, 0.5
    %v4113 = vmul.f32 %v4103, 0.044715
    %v4114 = vmul.f32 %v4108, 0.044715
    %v4115 = vmul.f32 %v4113, %v4103
    %v4116 = vmul.f32 %v4114, %v4108
    %v4117 = vmul.f32 %v4115, %v4103
    %v4118 = vmul.f32 %v4116, %v4108
    %v4119 = vadd.f32 %v4103, %v4117
    %v4120 = vadd.f32 %v4108, %v4118
    %v4121 = vmul.f32 %v4119, 0.7978846
    %v4122 = vmul.f32 %v4120, 0.7978846
    %v4123 = vtanh.pop %v4121
    %v4124 = vtanh.pop %v4122
    %v4125 = vadd.f32 %v4123, 1.0
    %v4126 = vadd.f32 %v4124, 1.0
    %v4127 = vmul.f32 %v4111, %v4125
    %v4128 = vmul.f32 %v4112, %v4126
    %s4129 = scalar_lea.vmem %s12, 64
    %v4130 = vld [vmem:[%s4129] sm:$0xff]
    %v4131 = vld [vmem:[%s4129 + $0x8] sm:$0xff]
    %v4132 = vld [vmem:[%s4129 + $0x10] sm:$0xff]
    %v4133 = vld [vmem:[%s4129 + $0x18] sm:$0xff]
    %v4134 = vld [vmem:[%s4129 + $0x20] sm:$0xff]
    %v4135 = vld [vmem:[%s4129 + $0x28] sm:$0xff]
    %v4136 = vld [vmem:[%s4129 + $0x30] sm:$0xff]
    %v4137 = vld [vmem:[%s4129 + $0x38] sm:$0xff]
    %s4138 = scalar_lea.vmem %s13, 1
    %v4139 = vld [vmem:[%s4138] sm:$0x1]
    %v4141 = vlaneseq
    %v4142 = vshrl.u32 %v4141, 7
    %v4143 = vsub.s32 0, %v4142
    %v4144 = vrot.slane %v4139, %v4143
    %v4147 = vsel %vm2067, %v4127, 0
    %v4150 = vsel %vm2067, %v4128, 0
    %4152 = vmatprep.subr.mxu0 0.0
    %4153 = vmatpush1.msra.mxu0 %v4130
    %4154 = vmatprep.subr.mxu0 0.0
    %4155 = vmatpush1.msra.mxu0 %v4131
    %4156 = vmatprep.subr.mxu0 0.0
    %4157 = vmatpush1.msra.mxu0 %v4132
    %4158 = vmatprep.subr.mxu0 0.0
    %4159 = vmatpush1.msra.mxu0 %v4133
    %4160 = vmatprep.subr.mxu0 0.0
    %4161 = vmatpush1.msra.mxu0 %v4134
    %4162 = vmatprep.subr.mxu0 0.0
    %4163 = vmatpush1.msra.mxu0 %v4135
    %4164 = vmatprep.subr.mxu0 0.0
    %4165 = vmatpush1.msra.mxu0 %v4136
    %4166 = vmatprep.subr.mxu0 0.0
    %4167 = vmatpush1.msra.mxu0 %v4137
    %4168 = vmatprep.subr.mxu0 0.0
    %4169 = vmatpush1.msra.mxu0 0.0
    %4170 = vmatprep.subr.mxu0 0.0
    %4171 = vmatpush1.msra.mxu0 0.0
    %4172 = vmatprep.subr.mxu0 0.0
    %4173 = vmatpush1.msra.mxu0 0.0
    %4174 = vmatprep.subr.mxu0 0.0
    %4175 = vmatpush1.msra.mxu0 0.0
    %4176 = vmatprep.subr.mxu0 0.0
    %4177 = vmatpush1.msra.mxu0 0.0
    %4178 = vmatprep.subr.mxu0 0.0
    %4179 = vmatpush1.msra.mxu0 0.0
    %4180 = vmatprep.subr.mxu0 0.0
    %4181 = vmatpush1.msra.mxu0 0.0
    %4182 = vmatprep.subr.mxu0 0.0
    %4183 = vmatpush1.msra.mxu0 0.0
    %4184 = vmatprep.subr.mxu0 0.0
    %4185 = vmatpush1.msra.mxu0 0.0
    %4186 = vmatprep.subr.mxu0 0.0
    %4187 = vmatpush1.msra.mxu0 0.0
    %4188 = vmatprep.subr.mxu0 0.0
    %4189 = vmatpush1.msra.mxu0 0.0
    %4190 = vmatprep.subr.mxu0 0.0
    %4191 = vmatpush1.msra.mxu0 0.0
    %4192 = vmatprep.subr.mxu0 0.0
    %4193 = vmatpush1.msra.mxu0 0.0
    %4194 = vmatprep.subr.mxu0 0.0
    %4195 = vmatpush1.msra.mxu0 0.0
    %4196 = vmatprep.subr.mxu0 0.0
    %4197 = vmatpush1.msra.mxu0 0.0
    %4198 = vmatprep.subr.mxu0 0.0
    %4199 = vmatpush1.msra.mxu0 0.0
    %4200 = vmatprep.subr.mxu0 0.0
    %4201 = vmatpush1.msra.mxu0 0.0
    %4202 = vmatprep.subr.mxu0 0.0
    %4203 = vmatpush1.msra.mxu0 0.0
    %4204 = vmatprep.subr.mxu0 0.0
    %4205 = vmatpush1.msra.mxu0 0.0
    %4206 = vmatprep.subr.mxu0 0.0
    %4207 = vmatpush1.msra.mxu0 0.0
    %4208 = vmatprep.subr.mxu0 0.0
    %4209 = vmatpush1.msra.mxu0 0.0
    %4210 = vmatprep.subr.mxu0 0.0
    %4211 = vmatpush1.msra.mxu0 0.0
    %4212 = vmatprep.subr.mxu0 0.0
    %4213 = vmatpush1.msra.mxu0 0.0
    %4214 = vmatprep.subr.mxu0 0.0
    %4215 = vmatpush1.msra.mxu0 0.0
    %4216 = vmatprep.mubr.f32.mxu0 0.0
    %4217 = vmatmul.mubr.f32.gmra.mrb[0].mxu0 %v4147
    %v4218 = vpop.f32.mrb[0].mxu0
    %v4219 = vadd.f32 %v4144, %v4218
    %v4220 = vpop.f32.mrb[0].mxu0
    %4221 = vmatprep.mubr.f32.mxu0 0.0
    %4222 = vmatmul.mubr.f32.gmra.mrb[0].mxu0 %v4150
    %v4223 = vpop.f32.mrb[0].mxu0
    %v4224 = vadd.f32 %v4144, %v4223
    %v4225 = vpop.f32.mrb[0].mxu0
    %4226 = vdwg.mxu0
    %v4227 = vadd.f32 %v4219, %v4015
    %v4228 = vadd.f32 %v4224, %v4016
    %s4229 = scalar_lea.vmem %s14, 1
    %v4230 = vld [vmem:[%s4229] sm:$0x1]
    %s4231 = scalar_lea.vmem %s15, 1
    %v4232 = vld [vmem:[%s4231] sm:$0x1]
    %v4233 = vsel %vm67, %v4227, 0.0
    %4234 = vadd.xlane.f32.xlu0 %v4233
    %v4235 = vpop.xlane.xlu0 %4234
    %v4236 = vsel %vm67, %v4228, 0.0
    %4237 = vadd.xlane.f32.xlu0 %v4236
    %v4238 = vpop.xlane.xlu0 %4237
    %v4239 = vmul.f32 %v4235, %v74
    %v4240 = vmul.f32 %v4238, %v74
    %v4241 = vsub.f32 %v4227, %v4239
    %v4242 = vsub.f32 %v4228, %v4240
    %v4243 = vmul.f32 %v4241, %v4241
    %v4244 = vmul.f32 %v4242, %v4242
    %v4245 = vsel %vm67, %v4243, 0.0
    %4246 = vadd.xlane.f32.xlu0 %v4245
    %v4247 = vpop.xlane.xlu0 %4246
    %v4248 = vsel %vm67, %v4244, 0.0
    %4249 = vadd.xlane.f32.xlu0 %v4248
    %v4250 = vpop.xlane.xlu0 %4249
    %v4251 = vmul.f32 %v4247, %v74
    %v4252 = vmul.f32 %v4250, %v74
    %v4253 = vadd.f32 %v4251, 1e-12
    %v4254 = vadd.f32 %v4252, 1e-12
    %v4255 = vrsqrt.pop %v4253
    %v4256 = vrsqrt.pop %v4254
    %v4257 = vmul.f32 %v4241, %v4255
    %v4258 = vmul.f32 %v4242, %v4256
    %v4260 = vlaneseq
    %v4261 = vshrl.u32 %v4260, 7
    %v4262 = vsub.s32 0, %v4261
    %v4263 = vrot.slane %v4230, %v4262
    %v4265 = vmul.f32 %v4257, %v4263
    %v4266 = vmul.f32 %v4258, %v4263
    %v4268 = vlaneseq
    %v4269 = vshrl.u32 %v4268, 7
    %v4270 = vsub.s32 0, %v4269
    %v4271 = vrot.slane %v4232, %v4270
    %v4273 = vadd.f32 %v4265, %v4271
    %v4274 = vadd.f32 %v4266, %v4271
    %4275 = vst.msk [vmem:[#allocation2] sm:$0xff] %vm67, %v4273
    %4276 = vst.msk [vmem:[#allocation2 + $0x8] sm:$0xff] %vm67, %v4274
    %v4277 = vld [vmem:[%s16] sm:$0xff]
    %v4278 = vld [vmem:[%s16 + $0x8] sm:$0xff]
    %v4279 = vld [vmem:[%s16 + $0x10] sm:$0xff]
    %v4280 = vld [vmem:[%s16 + $0x18] sm:$0xff]
    %v4281 = vld [vmem:[%s17] sm:$0x1]
    %v4283 = vlaneseq
    %v4284 = vshrl.u32 %v4283, 7
    %v4285 = vsub.s32 0, %v4284
    %v4286 = vrot.slane %v4281, %v4285
    %v4290 = vrot.slane %v4274, 7
    %vm4291 = vcmask 1041409
    %v4292 = vsel %vm4291, %v4290, %v4273
    %v4293 = vsel %vm67, %v4292, 0
    %4295 = vmatprep.subr.mxu0 0.0
    %4296 = vmatpush1.msra.mxu0 %v4277
    %4297 = vmatprep.subr.mxu0 0.0
    %4298 = vmatpush1.msra.mxu0 %v4278
    %4299 = vmatprep.subr.mxu0 0.0
    %4300 = vmatpush1.msra.mxu0 %v4279
    %4301 = vmatprep.subr.mxu0 0.0
    %4302 = vmatpush1.msra.mxu0 %v4280
    %4303 = vmatprep.subr.mxu0 0.0
    %4304 = vmatpush1.msra.mxu0 0.0
    %4305 = vmatprep.subr.mxu0 0.0
    %4306 = vmatpush1.msra.mxu0 0.0
    %4307 = vmatprep.subr.mxu0 0.0
    %4308 = vmatpush1.msra.mxu0 0.0
    %4309 = vmatprep.subr.mxu0 0.0
    %4310 = vmatpush1.msra.mxu0 0.0
    %4311 = vmatprep.subr.mxu0 0.0
    %4312 = vmatpush1.msra.mxu0 0.0
    %4313 = vmatprep.subr.mxu0 0.0
    %4314 = vmatpush1.msra.mxu0 0.0
    %4315 = vmatprep.subr.mxu0 0.0
    %4316 = vmatpush1.msra.mxu0 0.0
    %4317 = vmatprep.subr.mxu0 0.0
    %4318 = vmatpush1.msra.mxu0 0.0
    %4319 = vmatprep.subr.mxu0 0.0
    %4320 = vmatpush1.msra.mxu0 0.0
    %4321 = vmatprep.subr.mxu0 0.0
    %4322 = vmatpush1.msra.mxu0 0.0
    %4323 = vmatprep.subr.mxu0 0.0
    %4324 = vmatpush1.msra.mxu0 0.0
    %4325 = vmatprep.subr.mxu0 0.0
    %4326 = vmatpush1.msra.mxu0 0.0
    %4327 = vmatprep.subr.mxu0 0.0
    %4328 = vmatpush1.msra.mxu0 0.0
    %4329 = vmatprep.subr.mxu0 0.0
    %4330 = vmatpush1.msra.mxu0 0.0
    %4331 = vmatprep.subr.mxu0 0.0
    %4332 = vmatpush1.msra.mxu0 0.0
    %4333 = vmatprep.subr.mxu0 0.0
    %4334 = vmatpush1.msra.mxu0 0.0
    %4335 = vmatprep.subr.mxu0 0.0
    %4336 = vmatpush1.msra.mxu0 0.0
    %4337 = vmatprep.subr.mxu0 0.0
    %4338 = vmatpush1.msra.mxu0 0.0
    %4339 = vmatprep.subr.mxu0 0.0
    %4340 = vmatpush1.msra.mxu0 0.0
    %4341 = vmatprep.subr.mxu0 0.0
    %4342 = vmatpush1.msra.mxu0 0.0
    %4343 = vmatprep.subr.mxu0 0.0
    %4344 = vmatpush1.msra.mxu0 0.0
    %4345 = vmatprep.subr.mxu0 0.0
    %4346 = vmatpush1.msra.mxu0 0.0
    %4347 = vmatprep.subr.mxu0 0.0
    %4348 = vmatpush1.msra.mxu0 0.0
    %4349 = vmatprep.subr.mxu0 0.0
    %4350 = vmatpush1.msra.mxu0 0.0
    %4351 = vmatprep.subr.mxu0 0.0
    %4352 = vmatpush1.msra.mxu0 0.0
    %4353 = vmatprep.subr.mxu0 0.0
    %4354 = vmatpush1.msra.mxu0 0.0
    %4355 = vmatprep.subr.mxu0 0.0
    %4356 = vmatpush1.msra.mxu0 0.0
    %4357 = vmatprep.subr.mxu0 0.0
    %4358 = vmatpush1.msra.mxu0 0.0
    %4359 = vmatprep.mubr.f32.mxu0 0.0
    %4360 = vmatmul.mubr.f32.gmra.mrb[0].mxu0 %v4293
    %v4361 = vpop.f32.mrb[0].mxu0
    %v4362 = vadd.f32 %v4286, %v4361
    %v4363 = vpop.f32.mrb[0].mxu0
    %4364 = vdwg.mxu0
    %v4365 = vtanh.pop %v4362
    %vm4366 = vcmask 254976
    %4367 = vst.msk [vmem:[#allocation4] sm:$0x3] %vm4366, %v4365
    // Predicated region
    $region74: #{encoder_forward.1} parent=1 // pred_check
      _
    $region75: #{encoder_forward.1} parent=1 // pred_check_branch
      %4369 = sbr.rel (0) target = $region77
    $region76: #{encoder_forward.1} parent=1 // pred_region
      %s4371 = ssub.s32 256, 256
      %4372 = vsyncadd [#allocation3], %s4371
      %s4373 = sshll.u32 [#allocation2], 4
      %s4374 = int_to_ptr.vmem [resolvable:$true] %s4373
      %4379 = dma.vmem_to_hbm [thread:$0]  %s4374, 256, %s18, [#allocation3], 128, 128, 8
    $region77: #{encoder_forward.1} parent=1 // pred_fallthru
      _
    // Predicated region
    $region78: #{encoder_forward.1} parent=1 // pred_check
      _
    $region79: #{encoder_forward.1} parent=1 // pred_check_branch
      %4381 = sbr.rel (0) target = $region81
    $region80: #{encoder_forward.1} parent=1 // pred_region
      %s4383 = ssub.s32 32, 32
      %4384 = vsyncadd [#allocation5], %s4383
      %s4386 = sshll.u32 [#allocation4], 4
      %s4387 = int_to_ptr.vmem [resolvable:$true] %s4386
      %4389 = dma.vmem_to_hbm [thread:$0]  %s4387, 32, %s19, [#allocation5]
    $region81: #{encoder_forward.1} parent=1 // pred_fallthru
      _
    // Predicated region
    $region82: #{encoder_forward.1} parent=1 // pred_check
      _
    $region83: #{encoder_forward.1} parent=1 // pred_check_branch
      %4391 = sbr.rel (0) target = $region85
    $region84: #{encoder_forward.1} parent=1 // pred_region
      %4392 = dma.done [#allocation3], 256
    $region85: #{encoder_forward.1} parent=1 // pred_fallthru
      _
    // Predicated region
    $region86: #{encoder_forward.1} parent=1 // pred_check
      _
    $region87: #{encoder_forward.1} parent=1 // pred_check_branch
      %4394 = sbr.rel (0) target = $region89
    $region88: #{encoder_forward.1} parent=1 // pred_region
      %4395 = dma.done [#allocation5], 32
    $region89: #{encoder_forward.1} parent=1 // pred_fallthru
      _
    %4396 = vsyncpa [#allocation3], 1
    %4397 = vsyncpa [#allocation5], 1

</llo_original>
